<compile_context>
chip_gen: v6e
topology: v6e:2x2x1
jax: 0.10.0
libtpu: 0.0.40
codegen_flags: <defaults>
</compile_context>

<pallas_src>
import functools

import jax
import jax.numpy as jnp
from jax import lax
from jax.experimental import pallas as pl
from jax.experimental.pallas import tpu as pltpu

# ----- hyper-parameters mirroring the PyTorch script -----
PROBLEM_DIM = 2                           # input_size = d_model
HIDDEN_SIZE = 64                          # d_inner = expand_factor * d_model
NUM_LAYERS = 2                            # args.layers
NUM_CLASSES = 5                           # args.num_classes
D_STATE = 32
D_CONV = 16
DT_RANK = max(1, -(-PROBLEM_DIM // 16))   # ceil(d_model / 16) = 1
RMS_EPS = 1e-5
CHUNK = 8                                 # scan unroll / sublane tile


def _sigmoid(x):
    # exp + approx reciprocal both live on the EUP slot (keeps the VPU free).
    e = jnp.exp(-jnp.maximum(x, -30.0))
    return pl.reciprocal(1.0 + e, approx=True)


def _silu(x):
    return x * _sigmoid(x)


def _softplus(x):
    e = jnp.exp(jnp.minimum(x, 20.0))
    return jnp.where(x > 20.0, x, jnp.log(1.0 + e))


def _proj_tiny_k(x, w):
    """x: (M, Kc) with tiny Kc, w: (Kc, Nout).  VPU broadcast-FMA: a depth-2
    contraction would leave the MXU pipe >98% idle."""
    out = x[:, 0:1] * w[0:1, :]
    for d in range(1, w.shape[0]):
        out = out + x[:, d:d + 1] * w[d:d + 1, :]
    return out


def mamba_classifier_kernel(
    # inputs
    x_ref,           # (1, Lp, D)
    norm_w_ref,      # (nl, D)
    w_in_x_ref,      # (nl, D, ED)
    w_in_z_ref,      # (nl, D, ED)
    conv_w_ref,      # (nl, K, ED)
    conv_b_ref,      # (nl, ED)
    w_dt_ref,        # (nl, ED, ED)   x_proj(dt-part) @ dt_proj, pre-fused
    dt_b_ref,        # (nl, ED)
    w_b_ref,         # (nl, ED, N)
    w_c_ref,         # (nl, ED, N)
    a_logT_ref,      # (nl, N, ED)    A_log, transposed
    d_ref,           # (nl, ED)
    w_out_ref,       # (nl, ED, D)
    fc_w_ref,        # (ED, NC)
    fc_b_ref,        # (1, NC)
    # outputs
    out_ref,         # (1, 1, NC)
    # scratch
    conv_s,          # (Lp + K - 1, ED)
    delta_s,         # (Lp, ED)
    u_s,             # (Lp, ED)   delta * conv_out
    b_s,             # (Lp, N)
    c_s,             # (Lp, N)
    y_s,             # (Lp, ED)
    *,
    n_layers, seq_len, seq_pad, d_inner, d_state, d_conv, chunk,
):
    Lp, ED, N, K = seq_pad, d_inner, d_state, d_conv
    n_chunks = Lp // chunk

    x = x_ref[0].astype(jnp.float32)                      # (Lp, D)
    h_last = None

    for layer in range(n_layers):
        # ---------- RMSNorm (pre-norm) ----------
        ms = jnp.mean(x * x, axis=-1, keepdims=True)
        xn = x * lax.rsqrt(ms + RMS_EPS) * norm_w_ref[layer][None, :]

        # ---------- in_proj, split into lane-0-aligned x / z halves ----------
        x_in = _proj_tiny_k(xn, w_in_x_ref[layer])        # (Lp, ED)
        z = _proj_tiny_k(xn, w_in_z_ref[layer])           # (Lp, ED)

        # ---------- causal depthwise Conv1d over time ----------
        # PyTorch Conv1d is cross-correlation; causal == left zero-pad of K-1.
        cw = conv_w_ref[layer]                            # (K, ED)
        conv_s[0:K - 1, :] = jnp.zeros((K - 1, ED), jnp.float32)  # pad rows only
        conv_s[K - 1:, :] = x_in
        xc = jnp.broadcast_to(conv_b_ref[layer][None, :], (Lp, ED))
        for k in range(K):                                # static tap loop
            xc = xc + conv_s[k:k + Lp, :] * cw[k][None, :]
        xc = _silu(xc)

        # ---------- projections feeding the SSM (all lane-0 aligned) ----------
        delta = _softplus(
            jnp.dot(xc, w_dt_ref[layer], preferred_element_type=jnp.float32)
            + dt_b_ref[layer][None, :])                   # (Lp, ED)
        bmat = jnp.dot(xc, w_b_ref[layer],
                       preferred_element_type=jnp.float32)    # (Lp, N)
        cmat = jnp.dot(xc, w_c_ref[layer],
                       preferred_element_type=jnp.float32)    # (Lp, N)

        delta_s[...] = delta
        u_s[...] = delta * xc
        b_s[...] = bmat
        c_s[...] = cmat

        a_neg = -jnp.exp(a_logT_ref[layer])               # (N, ED) == A^T

        # ---------- selective scan ----------
        # h lives in registers as the fori_loop carry; the 8 steps of each
        # chunk are unrolled and y is written back as one dense (chunk, ED)
        # store.  dA / dB*x are built per step (never materialised over L).
        def scan_chunk(c, h):
            base = pl.multiple_of(c * chunk, chunk)
            d_ch = delta_s[pl.ds(base, chunk), :]         # (chunk, ED)
            u_ch = u_s[pl.ds(base, chunk), :]             # (chunk, ED)
            bT = b_s[pl.ds(base, chunk), :].T             # (N, chunk)
            cT = c_s[pl.ds(base, chunk), :].T             # (N, chunk)
            ys = []
            for j in range(chunk):                        # unrolled
                da = jnp.exp(d_ch[j][None, :] * a_neg)            # (N, ED)
                h = da * h + bT[:, j:j + 1] * u_ch[j][None, :]    # (N, ED)
                ys.append(jnp.sum(h * cT[:, j:j + 1], axis=0))    # (ED,)
            y_s[pl.ds(base, chunk), :] = jnp.stack(ys, axis=0)
            return h

        _ = lax.fori_loop(0, n_chunks, scan_chunk,
                          jnp.zeros((N, ED), jnp.float32))

        y = y_s[...]                                      # (Lp, ED)
        y = y + d_ref[layer][None, :] * xc                # D skip connection
        y = y * _silu(z)                                  # gate

        if layer == n_layers - 1:
            # classifer=True: expose the gated pre-out_proj inner hidden
            # (size d_inner = hidden_size); same semantics as the reviewed v1.
            h_last = y
        else:
            x = x + jnp.dot(y, w_out_ref[layer],
                            preferred_element_type=jnp.float32)  # residual

    # ---------- classification head on the last *real* time step ----------
    last = h_last[seq_len - 1][None, :]                   # (1, ED)
    logits = jnp.dot(last, fc_w_ref[...],
                     preferred_element_type=jnp.float32) + fc_b_ref[...]
    out_ref[0] = logits.astype(out_ref.dtype)


def _rep_spec(shape):
    nd = len(shape)
    return pl.BlockSpec(shape, lambda b, _nd=nd: (0,) * _nd)


def mamba_classifier_forward(x, kparams):
    """x: [batch, seq, d_model] float32 -> logits [batch, num_classes]."""
    B, L, D = x.shape
    assert D == PROBLEM_DIM and L >= 1
    ED, N, K = HIDDEN_SIZE, D_STATE, D_CONV

    Lp = -(-L // CHUNK) * CHUNK                 # pad seq to a chunk multiple
    x_p = jnp.pad(x.astype(jnp.float32), ((0, 0), (0, Lp - L), (0, 0)))

    args = (
        x_p,
        kparams["norm_w"], kparams["w_in_x"], kparams["w_in_z"],
        kparams["conv_w"], kparams["conv_b"], kparams["w_dt"], kparams["dt_b"],
        kparams["w_B"], kparams["w_C"], kparams["a_logT"], kparams["d_skip"],
        kparams["w_out"], kparams["fc_w"], kparams["fc_b"],
    )

    in_specs = [pl.BlockSpec((1, Lp, D), lambda b: (b, 0, 0))]
    in_specs += [_rep_spec(a.shape) for a in args[1:]]

    scratch = [
        pltpu.VMEM((Lp + K - 1, ED), jnp.float32),   # conv pad + input
        pltpu.VMEM((Lp, ED), jnp.float32),           # delta
        pltpu.VMEM((Lp, ED), jnp.float32),           # delta * conv_out
        pltpu.VMEM((Lp, N), jnp.float32),            # B
        pltpu.VMEM((Lp, N), jnp.float32),            # C
        pltpu.VMEM((Lp, ED), jnp.float32),           # y
    ]
    scratch_bytes = 4 * ((Lp + K - 1) * ED + 3 * Lp * ED + 2 * Lp * N)
    vmem_limit = int(min(64 * 2**20, max(32 * 2**20, 4 * scratch_bytes)))

    kernel = functools.partial(
        mamba_classifier_kernel,
        n_layers=NUM_LAYERS, seq_len=L, seq_pad=Lp,
        d_inner=ED, d_state=N, d_conv=K, chunk=CHUNK,
    )

    out = pl.pallas_call(
        kernel,
        out_shape=jax.ShapeDtypeStruct((B, 1, NUM_CLASSES), jnp.float32),
        grid=(B,),
        in_specs=in_specs,
        out_specs=pl.BlockSpec((1, 1, NUM_CLASSES), lambda b: (b, 0, 0)),
        scratch_shapes=scratch,
        compiler_params=pltpu.CompilerParams(
            dimension_semantics=("parallel",),       # batch across TCs on v7x
            vmem_limit_bytes=vmem_limit,
        ),
    )(*args)
    return out[:, 0, :]


def init_params(key):
    """Deterministic synthetic parameters (PyTorch-equivalent shapes, stored
    pre-transposed to (in, out) so no transposes are needed downstream)."""
    D, ED, N, K, R = PROBLEM_DIM, HIDDEN_SIZE, D_STATE, D_CONV, DT_RANK
    nl, NC = NUM_LAYERS, NUM_CLASSES
    ks = jax.random.split(key, 8)

    def nrm(k, shape, scale):
        return (scale * jax.random.normal(k, shape)).astype(jnp.float32)

    a_init = jnp.tile(jnp.arange(1, N + 1, dtype=jnp.float32)[None, None, :],
                      (nl, ED, 1))
    return {
        "norm_w":      jnp.ones((nl, D), jnp.float32),            # RMSNorm w
        "in_proj_wt":  nrm(ks[0], (nl, D, 2 * ED), D ** -0.5),
        "conv_wt":     nrm(ks[1], (nl, K, ED), K ** -0.5),        # depthwise taps
        "conv_b":      jnp.zeros((nl, ED), jnp.float32),
        "x_proj_wt":   nrm(ks[2], (nl, ED, R + 2 * N), ED ** -0.5),
        "dt_proj_wt":  nrm(ks[3], (nl, R, ED), R ** -0.5),
        "dt_proj_b":   nrm(ks[4], (nl, ED), 0.1),
        "A_log":       jnp.log(a_init),                           # A = -exp(A_log)
        "D":           jnp.ones((nl, ED), jnp.float32),
        "out_proj_wt": nrm(ks[5], (nl, ED, D), ED ** -0.5),
        "fc_wt":       nrm(ks[6], (ED, NC), ED ** -0.5),
        "fc_b":        nrm(ks[7], (1, NC), 0.1),
    }


def pack_params(p):
    """Kernel parameter layout: split in_proj / x_proj, fold the rank-1 dt path
    into one (ED, ED) matmul, transpose A_log.  Pure re-indexing + one einsum;
    mathematically identical to the PyTorch parameterisation."""
    R, N, ED = DT_RANK, D_STATE, HIDDEN_SIZE
    return {
        "norm_w": p["norm_w"],
        "w_in_x": p["in_proj_wt"][:, :, :ED],
        "w_in_z": p["in_proj_wt"][:, :, ED:],
        "conv_w": p["conv_wt"],
        "conv_b": p["conv_b"],
        "w_dt":   jnp.einsum("ler,lrd->led",
                             p["x_proj_wt"][:, :, :R], p["dt_proj_wt"]),
        "dt_b":   p["dt_proj_b"],
        "w_B":    p["x_proj_wt"][:, :, R:R + N],
        "w_C":    p["x_proj_wt"][:, :, R + N:R + 2 * N],
        "a_logT": jnp.transpose(p["A_log"], (0, 2, 1)),
        "d_skip": p["D"],
        "w_out":  p["out_proj_wt"],
        "fc_w":   p["fc_wt"],
        "fc_b":   p["fc_b"],
    }


def mamba_classifier_reference(x, kp):
    """Pure-JAX mirror of the kernel math (exact sigmoid), for validation."""
    B, L, _ = x.shape
    ED, N, K = HIDDEN_SIZE, D_STATE, D_CONV

    def softplus(v):
        return jnp.where(v > 20.0, v, jnp.log1p(jnp.exp(jnp.minimum(v, 20.0))))

    def silu(v):
        return v * jax.nn.sigmoid(v)

    xb = x.astype(jnp.float32)                              # (B, L, D)
    h_n = None
    for layer in range(NUM_LAYERS):
        ms = jnp.mean(xb * xb, axis=-1, keepdims=True)
        xn = xb * jax.lax.rsqrt(ms + RMS_EPS) * kp["norm_w"][layer]
        x_in = xn @ kp["w_in_x"][layer]
        z = xn @ kp["w_in_z"][layer]
        xp = jnp.pad(x_in, ((0, 0), (K - 1, 0), (0, 0)))
        xc = sum(xp[:, k:k + L, :] * kp["conv_w"][layer][k] for k in range(K))
        xc = silu(xc + kp["conv_b"][layer])
        delta = softplus(xc @ kp["w_dt"][layer] + kp["dt_b"][layer])
        Bm = xc @ kp["w_B"][layer]
        Cm = xc @ kp["w_C"][layer]
        A = -jnp.exp(jnp.transpose(kp["a_logT"][layer]))    # (ED, N)
        dA = jnp.exp(delta[..., None] * A)
        dBx = delta[..., None] * Bm[:, :, None, :] * xc[..., None]

        def step(h, inp):
            da_t, dbx_t, c_t = inp
            h = da_t * h + dbx_t
            return h, jnp.sum(h * c_t[:, None, :], axis=-1)

        _, ys = jax.lax.scan(step, jnp.zeros((B, ED, N), jnp.float32),
                             (jnp.moveaxis(dA, 1, 0), jnp.moveaxis(dBx, 1, 0),
                              jnp.moveaxis(Cm, 1, 0)))
        y = jnp.moveaxis(ys, 0, 1)                          # (B, L, ED)
        y = y + kp["d_skip"][layer] * xc
        y = y * silu(z)
        if layer == NUM_LAYERS - 1:
            h_n = y
        else:
            xb = xb + y @ kp["w_out"][layer]
    last = h_n[:, L - 1, :]
    return last @ kp["fc_w"] + kp["fc_b"][0]


if __name__ == "__main__":
    key = jax.random.PRNGKey(0)
    k_x, k_p = jax.random.split(key)

    batch, seq_len = 2, 12          # pads to 16 steps -> exercises 2 scan chunks
    x = jax.random.normal(k_x, (batch, seq_len, PROBLEM_DIM), dtype=jnp.float32)
    kparams = pack_params(init_params(k_p))

    logits = mamba_classifier_forward(x, kparams)
    jax.block_until_ready(logits)

    assert logits.shape == (batch, NUM_CLASSES)
    assert bool(jnp.all(jnp.isfinite(logits)))

    ref = mamba_classifier_reference(x, kparams)
    assert bool(jnp.allclose(logits, ref, rtol=5e-2, atol=5e-2)), \
        "kernel/reference mismatch"

    print("KERNEL_OK")
</pallas_src>

<mosaic_0001>
module attributes {stable_mosaic.version = 11 : i64} {
  func.func @mamba_classifier_kernel(%arg0: i32, %arg1: memref<1x16x2xf32, #tpu.memory_space<vmem>>, %arg2: memref<2x2xf32, #tpu.memory_space<vmem>>, %arg3: memref<2x2x64xf32, #tpu.memory_space<vmem>>, %arg4: memref<2x2x64xf32, #tpu.memory_space<vmem>>, %arg5: memref<2x16x64xf32, #tpu.memory_space<vmem>>, %arg6: memref<2x64xf32, #tpu.memory_space<vmem>>, %arg7: memref<2x64x64xf32, #tpu.memory_space<vmem>>, %arg8: memref<2x64xf32, #tpu.memory_space<vmem>>, %arg9: memref<2x64x32xf32, #tpu.memory_space<vmem>>, %arg10: memref<2x64x32xf32, #tpu.memory_space<vmem>>, %arg11: memref<2x32x64xf32, #tpu.memory_space<vmem>>, %arg12: memref<2x64xf32, #tpu.memory_space<vmem>>, %arg13: memref<2x64x2xf32, #tpu.memory_space<vmem>>, %arg14: memref<64x5xf32, #tpu.memory_space<vmem>>, %arg15: memref<1x5xf32, #tpu.memory_space<vmem>>, %arg16: memref<1x1x5xf32, #tpu.memory_space<vmem>>, %arg17: memref<31x64xf32, #tpu.memory_space<vmem>>, %arg18: memref<16x64xf32, #tpu.memory_space<vmem>>, %arg19: memref<16x64xf32, #tpu.memory_space<vmem>>, %arg20: memref<16x32xf32, #tpu.memory_space<vmem>>, %arg21: memref<16x32xf32, #tpu.memory_space<vmem>>, %arg22: memref<16x64xf32, #tpu.memory_space<vmem>>) attributes {dimension_semantics = [#tpu.dimension_semantics<parallel>], iteration_bounds = array<i64: 2>, scalar_prefetch = 0 : i64, scratch_operands = 6 : i64, tpu.core_type = #tpu.core_type<tc>, window_params = [{transform_indices = @transform_0, window_bounds = array<i64: 1, 16, 2>}, {pipeline_mode = #tpu.pipeline_mode<synchronous>, transform_indices = @transform_1, window_bounds = array<i64: 2, 2>}, {pipeline_mode = #tpu.pipeline_mode<synchronous>, transform_indices = @transform_2, window_bounds = array<i64: 2, 2, 64>}, {pipeline_mode = #tpu.pipeline_mode<synchronous>, transform_indices = @transform_3, window_bounds = array<i64: 2, 2, 64>}, {pipeline_mode = #tpu.pipeline_mode<synchronous>, transform_indices = @transform_4, window_bounds = array<i64: 2, 16, 64>}, {pipeline_mode = #tpu.pipeline_mode<synchronous>, transform_indices = @transform_5, window_bounds = array<i64: 2, 64>}, {pipeline_mode = #tpu.pipeline_mode<synchronous>, transform_indices = @transform_6, window_bounds = array<i64: 2, 64, 64>}, {pipeline_mode = #tpu.pipeline_mode<synchronous>, transform_indices = @transform_7, window_bounds = array<i64: 2, 64>}, {pipeline_mode = #tpu.pipeline_mode<synchronous>, transform_indices = @transform_8, window_bounds = array<i64: 2, 64, 32>}, {pipeline_mode = #tpu.pipeline_mode<synchronous>, transform_indices = @transform_9, window_bounds = array<i64: 2, 64, 32>}, {pipeline_mode = #tpu.pipeline_mode<synchronous>, transform_indices = @transform_10, window_bounds = array<i64: 2, 32, 64>}, {pipeline_mode = #tpu.pipeline_mode<synchronous>, transform_indices = @transform_11, window_bounds = array<i64: 2, 64>}, {pipeline_mode = #tpu.pipeline_mode<synchronous>, transform_indices = @transform_12, window_bounds = array<i64: 2, 64, 2>}, {pipeline_mode = #tpu.pipeline_mode<synchronous>, transform_indices = @transform_13, window_bounds = array<i64: 64, 5>}, {pipeline_mode = #tpu.pipeline_mode<synchronous>, transform_indices = @transform_14, window_bounds = array<i64: 1, 5>}, {transform_indices = @transform_15, window_bounds = array<i64: 1, 1, 5>}]} {
    %c0 = arith.constant 0 : index
    %c0_0 = arith.constant 0 : index
    %c0_1 = arith.constant 0 : index
    %0 = vector.load %arg1[%c0, %c0_0, %c0_1] : memref<1x16x2xf32, #tpu.memory_space<vmem>>, vector<1x16x2xf32>
    %1 = vector.shape_cast %0 : vector<1x16x2xf32> to vector<16x2xf32>
    %2 = arith.mulf %1, %1 : vector<16x2xf32>
    %cst = arith.constant dense<0.000000e+00> : vector<16xf32>
    %3 = vector.multi_reduction <add>, %2, %cst [1] : vector<16x2xf32> to vector<16xf32>
    %4 = vector.shape_cast %3 : vector<16xf32> to vector<16x1xf32>
    %cst_2 = arith.constant 2.000000e+00 : f32
    %5 = vector.broadcast %cst_2 : f32 to vector<16x1xf32>
    %6 = arith.divf %4, %5 : vector<16x1xf32>
    %cst_3 = arith.constant 9.99999974E-6 : f32
    %7 = vector.broadcast %cst_3 : f32 to vector<16x1xf32>
    %8 = arith.addf %6, %7 : vector<16x1xf32>
    %9 = math.rsqrt %8 : vector<16x1xf32>
    %10 = vector.broadcast %9 : vector<16x1xf32> to vector<16x2xf32>
    %11 = arith.mulf %1, %10 : vector<16x2xf32>
    %c0_4 = arith.constant 0 : index
    %c0_5 = arith.constant 0 : index
    %12 = vector.load %arg2[%c0_4, %c0_5] : memref<2x2xf32, #tpu.memory_space<vmem>>, vector<1x2xf32>
    %13 = vector.shape_cast %12 : vector<1x2xf32> to vector<2xf32>
    %14 = vector.shape_cast %13 : vector<2xf32> to vector<1x2xf32>
    %15 = vector.broadcast %14 : vector<1x2xf32> to vector<16x2xf32>
    %16 = arith.mulf %11, %15 : vector<16x2xf32>
    %c0_6 = arith.constant 0 : index
    %c0_7 = arith.constant 0 : index
    %c0_8 = arith.constant 0 : index
    %17 = vector.load %arg3[%c0_6, %c0_7, %c0_8] : memref<2x2x64xf32, #tpu.memory_space<vmem>>, vector<1x2x64xf32>
    %18 = vector.shape_cast %17 : vector<1x2x64xf32> to vector<2x64xf32>
    %19 = vector.extract_strided_slice %16 {offsets = [0, 0], sizes = [16, 1], strides = [1, 1]} : vector<16x2xf32> to vector<16x1xf32>
    %20 = vector.extract_strided_slice %18 {offsets = [0, 0], sizes = [1, 64], strides = [1, 1]} : vector<2x64xf32> to vector<1x64xf32>
    %21 = vector.broadcast %19 : vector<16x1xf32> to vector<16x64xf32>
    %22 = vector.broadcast %20 : vector<1x64xf32> to vector<16x64xf32>
    %23 = arith.mulf %21, %22 : vector<16x64xf32>
    %24 = vector.extract_strided_slice %16 {offsets = [0, 1], sizes = [16, 1], strides = [1, 1]} : vector<16x2xf32> to vector<16x1xf32>
    %25 = vector.extract_strided_slice %18 {offsets = [1, 0], sizes = [1, 64], strides = [1, 1]} : vector<2x64xf32> to vector<1x64xf32>
    %26 = vector.broadcast %24 : vector<16x1xf32> to vector<16x64xf32>
    %27 = vector.broadcast %25 : vector<1x64xf32> to vector<16x64xf32>
    %28 = arith.mulf %26, %27 : vector<16x64xf32>
    %29 = arith.addf %23, %28 : vector<16x64xf32>
    %c0_9 = arith.constant 0 : index
    %c0_10 = arith.constant 0 : index
    %c0_11 = arith.constant 0 : index
    %30 = vector.load %arg4[%c0_9, %c0_10, %c0_11] : memref<2x2x64xf32, #tpu.memory_space<vmem>>, vector<1x2x64xf32>
    %31 = vector.shape_cast %30 : vector<1x2x64xf32> to vector<2x64xf32>
    %32 = vector.extract_strided_slice %16 {offsets = [0, 0], sizes = [16, 1], strides = [1, 1]} : vector<16x2xf32> to vector<16x1xf32>
    %33 = vector.extract_strided_slice %31 {offsets = [0, 0], sizes = [1, 64], strides = [1, 1]} : vector<2x64xf32> to vector<1x64xf32>
    %34 = vector.broadcast %32 : vector<16x1xf32> to vector<16x64xf32>
    %35 = vector.broadcast %33 : vector<1x64xf32> to vector<16x64xf32>
    %36 = arith.mulf %34, %35 : vector<16x64xf32>
    %37 = vector.extract_strided_slice %16 {offsets = [0, 1], sizes = [16, 1], strides = [1, 1]} : vector<16x2xf32> to vector<16x1xf32>
    %38 = vector.extract_strided_slice %31 {offsets = [1, 0], sizes = [1, 64], strides = [1, 1]} : vector<2x64xf32> to vector<1x64xf32>
    %39 = vector.broadcast %37 : vector<16x1xf32> to vector<16x64xf32>
    %40 = vector.broadcast %38 : vector<1x64xf32> to vector<16x64xf32>
    %41 = arith.mulf %39, %40 : vector<16x64xf32>
    %42 = arith.addf %36, %41 : vector<16x64xf32>
    %c0_12 = arith.constant 0 : index
    %c0_13 = arith.constant 0 : index
    %c0_14 = arith.constant 0 : index
    %43 = vector.load %arg5[%c0_12, %c0_13, %c0_14] : memref<2x16x64xf32, #tpu.memory_space<vmem>>, vector<1x16x64xf32>
    %44 = vector.shape_cast %43 : vector<1x16x64xf32> to vector<16x64xf32>
    %cst_15 = arith.constant 0.000000e+00 : f32
    %45 = vector.broadcast %cst_15 : f32 to vector<15x64xf32>
    %c0_16 = arith.constant 0 : index
    %c0_17 = arith.constant 0 : index
    %46 = vector.load %arg17[%c0_16, %c0_17] : memref<31x64xf32, #tpu.memory_space<vmem>>, vector<15x64xf32>
    tpu.vector_store %arg17[%c0_16, %c0_17], %45 {strides = array<i32>} : memref<31x64xf32, #tpu.memory_space<vmem>>, vector<15x64xf32>,
    %c15 = arith.constant 15 : index
    %c0_18 = arith.constant 0 : index
    %47 = vector.load %arg17[%c15, %c0_18] : memref<31x64xf32, #tpu.memory_space<vmem>>, vector<16x64xf32>
    tpu.vector_store %arg17[%c15, %c0_18], %29 {strides = array<i32>} : memref<31x64xf32, #tpu.memory_space<vmem>>, vector<16x64xf32>,
    %c0_19 = arith.constant 0 : index
    %c0_20 = arith.constant 0 : index
    %48 = vector.load %arg6[%c0_19, %c0_20] : memref<2x64xf32, #tpu.memory_space<vmem>>, vector<1x64xf32>
    %49 = vector.shape_cast %48 : vector<1x64xf32> to vector<64xf32>
    %50 = vector.shape_cast %49 : vector<64xf32> to vector<1x64xf32>
    %51 = vector.shape_cast %50 : vector<1x64xf32> to vector<1x64xf32>
    %52 = vector.broadcast %51 : vector<1x64xf32> to vector<16x64xf32>
    %c0_21 = arith.constant 0 : index
    %c0_22 = arith.constant 0 : index
    %53 = vector.load %arg17[%c0_21, %c0_22] : memref<31x64xf32, #tpu.memory_space<vmem>>, vector<16x64xf32>
    %54 = vector.extract_strided_slice %44 {offsets = [0, 0], sizes = [1, 64], strides = [1, 1]} : vector<16x64xf32> to vector<1x64xf32>
    %55 = vector.shape_cast %54 : vector<1x64xf32> to vector<64xf32>
    %56 = vector.shape_cast %55 : vector<64xf32> to vector<1x64xf32>
    %57 = vector.broadcast %56 : vector<1x64xf32> to vector<16x64xf32>
    %58 = arith.mulf %53, %57 : vector<16x64xf32>
    %59 = arith.addf %52, %58 : vector<16x64xf32>
    %c1 = arith.constant 1 : index
    %c0_23 = arith.constant 0 : index
    %60 = vector.load %arg17[%c1, %c0_23] : memref<31x64xf32, #tpu.memory_space<vmem>>, vector<16x64xf32>
    %61 = vector.extract_strided_slice %44 {offsets = [1, 0], sizes = [1, 64], strides = [1, 1]} : vector<16x64xf32> to vector<1x64xf32>
    %62 = vector.shape_cast %61 : vector<1x64xf32> to vector<64xf32>
    %63 = vector.shape_cast %62 : vector<64xf32> to vector<1x64xf32>
    %64 = vector.broadcast %63 : vector<1x64xf32> to vector<16x64xf32>
    %65 = arith.mulf %60, %64 : vector<16x64xf32>
    %66 = arith.addf %59, %65 : vector<16x64xf32>
    %c2 = arith.constant 2 : index
    %c0_24 = arith.constant 0 : index
    %67 = vector.load %arg17[%c2, %c0_24] : memref<31x64xf32, #tpu.memory_space<vmem>>, vector<16x64xf32>
    %68 = vector.extract_strided_slice %44 {offsets = [2, 0], sizes = [1, 64], strides = [1, 1]} : vector<16x64xf32> to vector<1x64xf32>
    %69 = vector.shape_cast %68 : vector<1x64xf32> to vector<64xf32>
    %70 = vector.shape_cast %69 : vector<64xf32> to vector<1x64xf32>
    %71 = vector.broadcast %70 : vector<1x64xf32> to vector<16x64xf32>
    %72 = arith.mulf %67, %71 : vector<16x64xf32>
    %73 = arith.addf %66, %72 : vector<16x64xf32>
    %c3 = arith.constant 3 : index
    %c0_25 = arith.constant 0 : index
    %74 = vector.load %arg17[%c3, %c0_25] : memref<31x64xf32, #tpu.memory_space<vmem>>, vector<16x64xf32>
    %75 = vector.extract_strided_slice %44 {offsets = [3, 0], sizes = [1, 64], strides = [1, 1]} : vector<16x64xf32> to vector<1x64xf32>
    %76 = vector.shape_cast %75 : vector<1x64xf32> to vector<64xf32>
    %77 = vector.shape_cast %76 : vector<64xf32> to vector<1x64xf32>
    %78 = vector.broadcast %77 : vector<1x64xf32> to vector<16x64xf32>
    %79 = arith.mulf %74, %78 : vector<16x64xf32>
    %80 = arith.addf %73, %79 : vector<16x64xf32>
    %c4 = arith.constant 4 : index
    %c0_26 = arith.constant 0 : index
    %81 = vector.load %arg17[%c4, %c0_26] : memref<31x64xf32, #tpu.memory_space<vmem>>, vector<16x64xf32>
    %82 = vector.extract_strided_slice %44 {offsets = [4, 0], sizes = [1, 64], strides = [1, 1]} : vector<16x64xf32> to vector<1x64xf32>
    %83 = vector.shape_cast %82 : vector<1x64xf32> to vector<64xf32>
    %84 = vector.shape_cast %83 : vector<64xf32> to vector<1x64xf32>
    %85 = vector.broadcast %84 : vector<1x64xf32> to vector<16x64xf32>
    %86 = arith.mulf %81, %85 : vector<16x64xf32>
    %87 = arith.addf %80, %86 : vector<16x64xf32>
    %c5 = arith.constant 5 : index
    %c0_27 = arith.constant 0 : index
    %88 = vector.load %arg17[%c5, %c0_27] : memref<31x64xf32, #tpu.memory_space<vmem>>, vector<16x64xf32>
    %89 = vector.extract_strided_slice %44 {offsets = [5, 0], sizes = [1, 64], strides = [1, 1]} : vector<16x64xf32> to vector<1x64xf32>
    %90 = vector.shape_cast %89 : vector<1x64xf32> to vector<64xf32>
    %91 = vector.shape_cast %90 : vector<64xf32> to vector<1x64xf32>
    %92 = vector.broadcast %91 : vector<1x64xf32> to vector<16x64xf32>
    %93 = arith.mulf %88, %92 : vector<16x64xf32>
    %94 = arith.addf %87, %93 : vector<16x64xf32>
    %c6 = arith.constant 6 : index
    %c0_28 = arith.constant 0 : index
    %95 = vector.load %arg17[%c6, %c0_28] : memref<31x64xf32, #tpu.memory_space<vmem>>, vector<16x64xf32>
    %96 = vector.extract_strided_slice %44 {offsets = [6, 0], sizes = [1, 64], strides = [1, 1]} : vector<16x64xf32> to vector<1x64xf32>
    %97 = vector.shape_cast %96 : vector<1x64xf32> to vector<64xf32>
    %98 = vector.shape_cast %97 : vector<64xf32> to vector<1x64xf32>
    %99 = vector.broadcast %98 : vector<1x64xf32> to vector<16x64xf32>
    %100 = arith.mulf %95, %99 : vector<16x64xf32>
    %101 = arith.addf %94, %100 : vector<16x64xf32>
    %c7 = arith.constant 7 : index
    %c0_29 = arith.constant 0 : index
    %102 = vector.load %arg17[%c7, %c0_29] : memref<31x64xf32, #tpu.memory_space<vmem>>, vector<16x64xf32>
    %103 = vector.extract_strided_slice %44 {offsets = [7, 0], sizes = [1, 64], strides = [1, 1]} : vector<16x64xf32> to vector<1x64xf32>
    %104 = vector.shape_cast %103 : vector<1x64xf32> to vector<64xf32>
    %105 = vector.shape_cast %104 : vector<64xf32> to vector<1x64xf32>
    %106 = vector.broadcast %105 : vector<1x64xf32> to vector<16x64xf32>
    %107 = arith.mulf %102, %106 : vector<16x64xf32>
    %108 = arith.addf %101, %107 : vector<16x64xf32>
    %c8 = arith.constant 8 : index
    %c0_30 = arith.constant 0 : index
    %109 = vector.load %arg17[%c8, %c0_30] : memref<31x64xf32, #tpu.memory_space<vmem>>, vector<16x64xf32>
    %110 = vector.extract_strided_slice %44 {offsets = [8, 0], sizes = [1, 64], strides = [1, 1]} : vector<16x64xf32> to vector<1x64xf32>
    %111 = vector.shape_cast %110 : vector<1x64xf32> to vector<64xf32>
    %112 = vector.shape_cast %111 : vector<64xf32> to vector<1x64xf32>
    %113 = vector.broadcast %112 : vector<1x64xf32> to vector<16x64xf32>
    %114 = arith.mulf %109, %113 : vector<16x64xf32>
    %115 = arith.addf %108, %114 : vector<16x64xf32>
    %c9 = arith.constant 9 : index
    %c0_31 = arith.constant 0 : index
    %116 = vector.load %arg17[%c9, %c0_31] : memref<31x64xf32, #tpu.memory_space<vmem>>, vector<16x64xf32>
    %117 = vector.extract_strided_slice %44 {offsets = [9, 0], sizes = [1, 64], strides = [1, 1]} : vector<16x64xf32> to vector<1x64xf32>
    %118 = vector.shape_cast %117 : vector<1x64xf32> to vector<64xf32>
    %119 = vector.shape_cast %118 : vector<64xf32> to vector<1x64xf32>
    %120 = vector.broadcast %119 : vector<1x64xf32> to vector<16x64xf32>
    %121 = arith.mulf %116, %120 : vector<16x64xf32>
    %122 = arith.addf %115, %121 : vector<16x64xf32>
    %c10 = arith.constant 10 : index
    %c0_32 = arith.constant 0 : index
    %123 = vector.load %arg17[%c10, %c0_32] : memref<31x64xf32, #tpu.memory_space<vmem>>, vector<16x64xf32>
    %124 = vector.extract_strided_slice %44 {offsets = [10, 0], sizes = [1, 64], strides = [1, 1]} : vector<16x64xf32> to vector<1x64xf32>
    %125 = vector.shape_cast %124 : vector<1x64xf32> to vector<64xf32>
    %126 = vector.shape_cast %125 : vector<64xf32> to vector<1x64xf32>
    %127 = vector.broadcast %126 : vector<1x64xf32> to vector<16x64xf32>
    %128 = arith.mulf %123, %127 : vector<16x64xf32>
    %129 = arith.addf %122, %128 : vector<16x64xf32>
    %c11 = arith.constant 11 : index
    %c0_33 = arith.constant 0 : index
    %130 = vector.load %arg17[%c11, %c0_33] : memref<31x64xf32, #tpu.memory_space<vmem>>, vector<16x64xf32>
    %131 = vector.extract_strided_slice %44 {offsets = [11, 0], sizes = [1, 64], strides = [1, 1]} : vector<16x64xf32> to vector<1x64xf32>
    %132 = vector.shape_cast %131 : vector<1x64xf32> to vector<64xf32>
    %133 = vector.shape_cast %132 : vector<64xf32> to vector<1x64xf32>
    %134 = vector.broadcast %133 : vector<1x64xf32> to vector<16x64xf32>
    %135 = arith.mulf %130, %134 : vector<16x64xf32>
    %136 = arith.addf %129, %135 : vector<16x64xf32>
    %c12 = arith.constant 12 : index
    %c0_34 = arith.constant 0 : index
    %137 = vector.load %arg17[%c12, %c0_34] : memref<31x64xf32, #tpu.memory_space<vmem>>, vector<16x64xf32>
    %138 = vector.extract_strided_slice %44 {offsets = [12, 0], sizes = [1, 64], strides = [1, 1]} : vector<16x64xf32> to vector<1x64xf32>
    %139 = vector.shape_cast %138 : vector<1x64xf32> to vector<64xf32>
    %140 = vector.shape_cast %139 : vector<64xf32> to vector<1x64xf32>
    %141 = vector.broadcast %140 : vector<1x64xf32> to vector<16x64xf32>
    %142 = arith.mulf %137, %141 : vector<16x64xf32>
    %143 = arith.addf %136, %142 : vector<16x64xf32>
    %c13 = arith.constant 13 : index
    %c0_35 = arith.constant 0 : index
    %144 = vector.load %arg17[%c13, %c0_35] : memref<31x64xf32, #tpu.memory_space<vmem>>, vector<16x64xf32>
    %145 = vector.extract_strided_slice %44 {offsets = [13, 0], sizes = [1, 64], strides = [1, 1]} : vector<16x64xf32> to vector<1x64xf32>
    %146 = vector.shape_cast %145 : vector<1x64xf32> to vector<64xf32>
    %147 = vector.shape_cast %146 : vector<64xf32> to vector<1x64xf32>
    %148 = vector.broadcast %147 : vector<1x64xf32> to vector<16x64xf32>
    %149 = arith.mulf %144, %148 : vector<16x64xf32>
    %150 = arith.addf %143, %149 : vector<16x64xf32>
    %c14 = arith.constant 14 : index
    %c0_36 = arith.constant 0 : index
    %151 = vector.load %arg17[%c14, %c0_36] : memref<31x64xf32, #tpu.memory_space<vmem>>, vector<16x64xf32>
    %152 = vector.extract_strided_slice %44 {offsets = [14, 0], sizes = [1, 64], strides = [1, 1]} : vector<16x64xf32> to vector<1x64xf32>
    %153 = vector.shape_cast %152 : vector<1x64xf32> to vector<64xf32>
    %154 = vector.shape_cast %153 : vector<64xf32> to vector<1x64xf32>
    %155 = vector.broadcast %154 : vector<1x64xf32> to vector<16x64xf32>
    %156 = arith.mulf %151, %155 : vector<16x64xf32>
    %157 = arith.addf %150, %156 : vector<16x64xf32>
    %c15_37 = arith.constant 15 : index
    %c0_38 = arith.constant 0 : index
    %158 = vector.load %arg17[%c15_37, %c0_38] : memref<31x64xf32, #tpu.memory_space<vmem>>, vector<16x64xf32>
    %159 = vector.extract_strided_slice %44 {offsets = [15, 0], sizes = [1, 64], strides = [1, 1]} : vector<16x64xf32> to vector<1x64xf32>
    %160 = vector.shape_cast %159 : vector<1x64xf32> to vector<64xf32>
    %161 = vector.shape_cast %160 : vector<64xf32> to vector<1x64xf32>
    %162 = vector.broadcast %161 : vector<1x64xf32> to vector<16x64xf32>
    %163 = arith.mulf %158, %162 : vector<16x64xf32>
    %164 = arith.addf %157, %163 : vector<16x64xf32>
    %cst_39 = arith.constant -3.000000e+01 : f32
    %165 = vector.broadcast %cst_39 : f32 to vector<16x64xf32>
    %166 = arith.maximumf %164, %165 : vector<16x64xf32>
    %cst_40 = arith.constant 0.000000e+00 : f32
    %167 = vector.broadcast %cst_40 : f32 to vector<16x64xf32>
    %168 = arith.subf %167, %166 : vector<16x64xf32>
    %169 = math.exp %168 : vector<16x64xf32>
    %cst_41 = arith.constant 1.000000e+00 : f32
    %170 = vector.broadcast %cst_41 : f32 to vector<16x64xf32>
    %171 = arith.addf %170, %169 : vector<16x64xf32>
    %172 = tpu.reciprocal %171 {approx = true} : vector<16x64xf32> -> vector<16x64xf32>
    %173 = arith.mulf %164, %172 : vector<16x64xf32>
    %c0_42 = arith.constant 0 : index
    %c0_43 = arith.constant 0 : index
    %c0_44 = arith.constant 0 : index
    %174 = vector.load %arg7[%c0_42, %c0_43, %c0_44] : memref<2x64x64xf32, #tpu.memory_space<vmem>>, vector<1x64x64xf32>
    %175 = vector.shape_cast %174 : vector<1x64x64xf32> to vector<64x64xf32>
    %cst_45 = arith.constant dense<0.000000e+00> : vector<16x64xf32>
    %176 = tpu.matmul %173, %175, %cst_45 {dimension_numbers = #tpu.dot_dimension_numbers<[1], [0], [0], [1], [0, 0, 1, 1], [], []>} : vector<16x64xf32>, vector<64x64xf32>, vector<16x64xf32> -> vector<16x64xf32>
    %c0_46 = arith.constant 0 : index
    %c0_47 = arith.constant 0 : index
    %177 = vector.load %arg8[%c0_46, %c0_47] : memref<2x64xf32, #tpu.memory_space<vmem>>, vector<1x64xf32>
    %178 = vector.shape_cast %177 : vector<1x64xf32> to vector<64xf32>
    %179 = vector.shape_cast %178 : vector<64xf32> to vector<1x64xf32>
    %180 = vector.broadcast %179 : vector<1x64xf32> to vector<16x64xf32>
    %181 = arith.addf %176, %180 : vector<16x64xf32>
    %cst_48 = arith.constant 2.000000e+01 : f32
    %182 = vector.broadcast %cst_48 : f32 to vector<16x64xf32>
    %183 = arith.minimumf %181, %182 : vector<16x64xf32>
    %184 = math.exp %183 : vector<16x64xf32>
    %cst_49 = arith.constant 2.000000e+01 : f32
    %185 = vector.broadcast %cst_49 : f32 to vector<16x64xf32>
    %186 = arith.cmpf ogt, %181, %185 : vector<16x64xf32>
    %cst_50 = arith.constant 1.000000e+00 : f32
    %187 = vector.broadcast %cst_50 : f32 to vector<16x64xf32>
    %188 = arith.addf %187, %184 : vector<16x64xf32>
    %189 = math.log %188 : vector<16x64xf32>
    %190 = arith.select %186, %181, %189 : vector<16x64xi1>, vector<16x64xf32>
    %c0_51 = arith.constant 0 : index
    %c0_52 = arith.constant 0 : index
    %c0_53 = arith.constant 0 : index
    %191 = vector.load %arg9[%c0_51, %c0_52, %c0_53] : memref<2x64x32xf32, #tpu.memory_space<vmem>>, vector<1x64x32xf32>
    %192 = vector.shape_cast %191 : vector<1x64x32xf32> to vector<64x32xf32>
    %cst_54 = arith.constant dense<0.000000e+00> : vector<16x32xf32>
    %193 = tpu.matmul %173, %192, %cst_54 {dimension_numbers = #tpu.dot_dimension_numbers<[1], [0], [0], [1], [0, 0, 1, 1], [], []>} : vector<16x64xf32>, vector<64x32xf32>, vector<16x32xf32> -> vector<16x32xf32>
    %c0_55 = arith.constant 0 : index
    %c0_56 = arith.constant 0 : index
    %c0_57 = arith.constant 0 : index
    %194 = vector.load %arg10[%c0_55, %c0_56, %c0_57] : memref<2x64x32xf32, #tpu.memory_space<vmem>>, vector<1x64x32xf32>
    %195 = vector.shape_cast %194 : vector<1x64x32xf32> to vector<64x32xf32>
    %cst_58 = arith.constant dense<0.000000e+00> : vector<16x32xf32>
    %196 = tpu.matmul %173, %195, %cst_58 {dimension_numbers = #tpu.dot_dimension_numbers<[1], [0], [0], [1], [0, 0, 1, 1], [], []>} : vector<16x64xf32>, vector<64x32xf32>, vector<16x32xf32> -> vector<16x32xf32>
    %c0_59 = arith.constant 0 : index
    %c0_60 = arith.constant 0 : index
    %197 = vector.load %arg18[%c0_59, %c0_60] : memref<16x64xf32, #tpu.memory_space<vmem>>, vector<16x64xf32>
    tpu.vector_store %arg18[%c0_59, %c0_60], %190 {strides = array<i32>} : memref<16x64xf32, #tpu.memory_space<vmem>>, vector<16x64xf32>,
    %198 = arith.mulf %190, %173 : vector<16x64xf32>
    %c0_61 = arith.constant 0 : index
    %c0_62 = arith.constant 0 : index
    %199 = vector.load %arg19[%c0_61, %c0_62] : memref<16x64xf32, #tpu.memory_space<vmem>>, vector<16x64xf32>
    tpu.vector_store %arg19[%c0_61, %c0_62], %198 {strides = array<i32>} : memref<16x64xf32, #tpu.memory_space<vmem>>, vector<16x64xf32>,
    %c0_63 = arith.constant 0 : index
    %c0_64 = arith.constant 0 : index
    %200 = vector.load %arg20[%c0_63, %c0_64] : memref<16x32xf32, #tpu.memory_space<vmem>>, vector<16x32xf32>
    tpu.vector_store %arg20[%c0_63, %c0_64], %193 {strides = array<i32>} : memref<16x32xf32, #tpu.memory_space<vmem>>, vector<16x32xf32>,
    %c0_65 = arith.constant 0 : index
    %c0_66 = arith.constant 0 : index
    %201 = vector.load %arg21[%c0_65, %c0_66] : memref<16x32xf32, #tpu.memory_space<vmem>>, vector<16x32xf32>
    tpu.vector_store %arg21[%c0_65, %c0_66], %196 {strides = array<i32>} : memref<16x32xf32, #tpu.memory_space<vmem>>, vector<16x32xf32>,
    %c0_67 = arith.constant 0 : index
    %c0_68 = arith.constant 0 : index
    %c0_69 = arith.constant 0 : index
    %202 = vector.load %arg11[%c0_67, %c0_68, %c0_69] : memref<2x32x64xf32, #tpu.memory_space<vmem>>, vector<1x32x64xf32>
    %203 = vector.shape_cast %202 : vector<1x32x64xf32> to vector<32x64xf32>
    %204 = math.exp %203 : vector<32x64xf32>
    %cst_70 = arith.constant 0.000000e+00 : f32
    %205 = vector.broadcast %cst_70 : f32 to vector<32x64xf32>
    %206 = arith.subf %205, %204 : vector<32x64xf32>
    %cst_71 = arith.constant 0.000000e+00 : f32
    %207 = vector.broadcast %cst_71 : f32 to vector<32x64xf32>
    %c0_i32 = arith.constant 0 : i32
    %c2_i32 = arith.constant 2 : i32
    %208 = arith.addi %c0_i32, %c2_i32 : i32
    %c1_i32 = arith.constant 1 : i32
    %209 = scf.for %arg23 = %c0_i32 to %208 step %c1_i32 iter_args(%arg24 = %207) -> (vector<32x64xf32>)  : i32 {
      %c8_i32 = arith.constant 8 : i32
      %466 = arith.muli %arg23, %c8_i32 : i32
      %467 = tpu.assume_multiple %466, 8 : i32
      %468 = arith.index_cast %467 : i32 to index
      %c0_189 = arith.constant 0 : index
      %469 = vector.load %arg18[%468, %c0_189] : memref<16x64xf32, #tpu.memory_space<vmem>>, vector<8x64xf32>
      %470 = arith.index_cast %467 : i32 to index
      %c0_190 = arith.constant 0 : index
      %471 = vector.load %arg19[%470, %c0_190] : memref<16x64xf32, #tpu.memory_space<vmem>>, vector<8x64xf32>
      %472 = arith.index_cast %467 : i32 to index
      %c0_191 = arith.constant 0 : index
      %473 = vector.load %arg20[%472, %c0_191] : memref<16x32xf32, #tpu.memory_space<vmem>>, vector<8x32xf32>
      %474 = tpu.transpose %473, [1, 0] : vector<8x32xf32> -> vector<32x8xf32>
      %475 = arith.index_cast %467 : i32 to index
      %c0_192 = arith.constant 0 : index
      %476 = vector.load %arg21[%475, %c0_192] : memref<16x32xf32, #tpu.memory_space<vmem>>, vector<8x32xf32>
      %477 = tpu.transpose %476, [1, 0] : vector<8x32xf32> -> vector<32x8xf32>
      %478 = vector.extract_strided_slice %469 {offsets = [0, 0], sizes = [1, 64], strides = [1, 1]} : vector<8x64xf32> to vector<1x64xf32>
      %479 = vector.shape_cast %478 : vector<1x64xf32> to vector<64xf32>
      %480 = vector.shape_cast %479 : vector<64xf32> to vector<1x64xf32>
      %481 = vector.broadcast %480 : vector<1x64xf32> to vector<32x64xf32>
      %482 = arith.mulf %481, %206 : vector<32x64xf32>
      %483 = math.exp %482 : vector<32x64xf32>
      %484 = arith.mulf %483, %arg24 : vector<32x64xf32>
      %485 = vector.extract_strided_slice %474 {offsets = [0, 0], sizes = [32, 1], strides = [1, 1]} : vector<32x8xf32> to vector<32x1xf32>
      %486 = vector.extract_strided_slice %471 {offsets = [0, 0], sizes = [1, 64], strides = [1, 1]} : vector<8x64xf32> to vector<1x64xf32>
      %487 = vector.shape_cast %486 : vector<1x64xf32> to vector<64xf32>
      %488 = vector.shape_cast %487 : vector<64xf32> to vector<1x64xf32>
      %489 = vector.broadcast %485 : vector<32x1xf32> to vector<32x64xf32>
      %490 = vector.broadcast %488 : vector<1x64xf32> to vector<32x64xf32>
      %491 = arith.mulf %489, %490 : vector<32x64xf32>
      %492 = arith.addf %484, %491 : vector<32x64xf32>
      %493 = vector.extract_strided_slice %477 {offsets = [0, 0], sizes = [32, 1], strides = [1, 1]} : vector<32x8xf32> to vector<32x1xf32>
      %494 = vector.broadcast %493 : vector<32x1xf32> to vector<32x64xf32>
      %495 = arith.mulf %492, %494 : vector<32x64xf32>
      %cst_193 = arith.constant dense<0.000000e+00> : vector<64xf32>
      %496 = vector.multi_reduction <add>, %495, %cst_193 [0] : vector<32x64xf32> to vector<64xf32>
      %497 = vector.extract_strided_slice %469 {offsets = [1, 0], sizes = [1, 64], strides = [1, 1]} : vector<8x64xf32> to vector<1x64xf32>
      %498 = vector.shape_cast %497 : vector<1x64xf32> to vector<64xf32>
      %499 = vector.shape_cast %498 : vector<64xf32> to vector<1x64xf32>
      %500 = vector.broadcast %499 : vector<1x64xf32> to vector<32x64xf32>
      %501 = arith.mulf %500, %206 : vector<32x64xf32>
      %502 = math.exp %501 : vector<32x64xf32>
      %503 = arith.mulf %502, %492 : vector<32x64xf32>
      %504 = vector.extract_strided_slice %474 {offsets = [0, 1], sizes = [32, 1], strides = [1, 1]} : vector<32x8xf32> to vector<32x1xf32>
      %505 = vector.extract_strided_slice %471 {offsets = [1, 0], sizes = [1, 64], strides = [1, 1]} : vector<8x64xf32> to vector<1x64xf32>
      %506 = vector.shape_cast %505 : vector<1x64xf32> to vector<64xf32>
      %507 = vector.shape_cast %506 : vector<64xf32> to vector<1x64xf32>
      %508 = vector.broadcast %504 : vector<32x1xf32> to vector<32x64xf32>
      %509 = vector.broadcast %507 : vector<1x64xf32> to vector<32x64xf32>
      %510 = arith.mulf %508, %509 : vector<32x64xf32>
      %511 = arith.addf %503, %510 : vector<32x64xf32>
      %512 = vector.extract_strided_slice %477 {offsets = [0, 1], sizes = [32, 1], strides = [1, 1]} : vector<32x8xf32> to vector<32x1xf32>
      %513 = vector.broadcast %512 : vector<32x1xf32> to vector<32x64xf32>
      %514 = arith.mulf %511, %513 : vector<32x64xf32>
      %cst_194 = arith.constant dense<0.000000e+00> : vector<64xf32>
      %515 = vector.multi_reduction <add>, %514, %cst_194 [0] : vector<32x64xf32> to vector<64xf32>
      %516 = vector.extract_strided_slice %469 {offsets = [2, 0], sizes = [1, 64], strides = [1, 1]} : vector<8x64xf32> to vector<1x64xf32>
      %517 = vector.shape_cast %516 : vector<1x64xf32> to vector<64xf32>
      %518 = vector.shape_cast %517 : vector<64xf32> to vector<1x64xf32>
      %519 = vector.broadcast %518 : vector<1x64xf32> to vector<32x64xf32>
      %520 = arith.mulf %519, %206 : vector<32x64xf32>
      %521 = math.exp %520 : vector<32x64xf32>
      %522 = arith.mulf %521, %511 : vector<32x64xf32>
      %523 = vector.extract_strided_slice %474 {offsets = [0, 2], sizes = [32, 1], strides = [1, 1]} : vector<32x8xf32> to vector<32x1xf32>
      %524 = vector.extract_strided_slice %471 {offsets = [2, 0], sizes = [1, 64], strides = [1, 1]} : vector<8x64xf32> to vector<1x64xf32>
      %525 = vector.shape_cast %524 : vector<1x64xf32> to vector<64xf32>
      %526 = vector.shape_cast %525 : vector<64xf32> to vector<1x64xf32>
      %527 = vector.broadcast %523 : vector<32x1xf32> to vector<32x64xf32>
      %528 = vector.broadcast %526 : vector<1x64xf32> to vector<32x64xf32>
      %529 = arith.mulf %527, %528 : vector<32x64xf32>
      %530 = arith.addf %522, %529 : vector<32x64xf32>
      %531 = vector.extract_strided_slice %477 {offsets = [0, 2], sizes = [32, 1], strides = [1, 1]} : vector<32x8xf32> to vector<32x1xf32>
      %532 = vector.broadcast %531 : vector<32x1xf32> to vector<32x64xf32>
      %533 = arith.mulf %530, %532 : vector<32x64xf32>
      %cst_195 = arith.constant dense<0.000000e+00> : vector<64xf32>
      %534 = vector.multi_reduction <add>, %533, %cst_195 [0] : vector<32x64xf32> to vector<64xf32>
      %535 = vector.extract_strided_slice %469 {offsets = [3, 0], sizes = [1, 64], strides = [1, 1]} : vector<8x64xf32> to vector<1x64xf32>
      %536 = vector.shape_cast %535 : vector<1x64xf32> to vector<64xf32>
      %537 = vector.shape_cast %536 : vector<64xf32> to vector<1x64xf32>
      %538 = vector.broadcast %537 : vector<1x64xf32> to vector<32x64xf32>
      %539 = arith.mulf %538, %206 : vector<32x64xf32>
      %540 = math.exp %539 : vector<32x64xf32>
      %541 = arith.mulf %540, %530 : vector<32x64xf32>
      %542 = vector.extract_strided_slice %474 {offsets = [0, 3], sizes = [32, 1], strides = [1, 1]} : vector<32x8xf32> to vector<32x1xf32>
      %543 = vector.extract_strided_slice %471 {offsets = [3, 0], sizes = [1, 64], strides = [1, 1]} : vector<8x64xf32> to vector<1x64xf32>
      %544 = vector.shape_cast %543 : vector<1x64xf32> to vector<64xf32>
      %545 = vector.shape_cast %544 : vector<64xf32> to vector<1x64xf32>
      %546 = vector.broadcast %542 : vector<32x1xf32> to vector<32x64xf32>
      %547 = vector.broadcast %545 : vector<1x64xf32> to vector<32x64xf32>
      %548 = arith.mulf %546, %547 : vector<32x64xf32>
      %549 = arith.addf %541, %548 : vector<32x64xf32>
      %550 = vector.extract_strided_slice %477 {offsets = [0, 3], sizes = [32, 1], strides = [1, 1]} : vector<32x8xf32> to vector<32x1xf32>
      %551 = vector.broadcast %550 : vector<32x1xf32> to vector<32x64xf32>
      %552 = arith.mulf %549, %551 : vector<32x64xf32>
      %cst_196 = arith.constant dense<0.000000e+00> : vector<64xf32>
      %553 = vector.multi_reduction <add>, %552, %cst_196 [0] : vector<32x64xf32> to vector<64xf32>
      %554 = vector.extract_strided_slice %469 {offsets = [4, 0], sizes = [1, 64], strides = [1, 1]} : vector<8x64xf32> to vector<1x64xf32>
      %555 = vector.shape_cast %554 : vector<1x64xf32> to vector<64xf32>
      %556 = vector.shape_cast %555 : vector<64xf32> to vector<1x64xf32>
      %557 = vector.broadcast %556 : vector<1x64xf32> to vector<32x64xf32>
      %558 = arith.mulf %557, %206 : vector<32x64xf32>
      %559 = math.exp %558 : vector<32x64xf32>
      %560 = arith.mulf %559, %549 : vector<32x64xf32>
      %561 = vector.extract_strided_slice %474 {offsets = [0, 4], sizes = [32, 1], strides = [1, 1]} : vector<32x8xf32> to vector<32x1xf32>
      %562 = vector.extract_strided_slice %471 {offsets = [4, 0], sizes = [1, 64], strides = [1, 1]} : vector<8x64xf32> to vector<1x64xf32>
      %563 = vector.shape_cast %562 : vector<1x64xf32> to vector<64xf32>
      %564 = vector.shape_cast %563 : vector<64xf32> to vector<1x64xf32>
      %565 = vector.broadcast %561 : vector<32x1xf32> to vector<32x64xf32>
      %566 = vector.broadcast %564 : vector<1x64xf32> to vector<32x64xf32>
      %567 = arith.mulf %565, %566 : vector<32x64xf32>
      %568 = arith.addf %560, %567 : vector<32x64xf32>
      %569 = vector.extract_strided_slice %477 {offsets = [0, 4], sizes = [32, 1], strides = [1, 1]} : vector<32x8xf32> to vector<32x1xf32>
      %570 = vector.broadcast %569 : vector<32x1xf32> to vector<32x64xf32>
      %571 = arith.mulf %568, %570 : vector<32x64xf32>
      %cst_197 = arith.constant dense<0.000000e+00> : vector<64xf32>
      %572 = vector.multi_reduction <add>, %571, %cst_197 [0] : vector<32x64xf32> to vector<64xf32>
      %573 = vector.extract_strided_slice %469 {offsets = [5, 0], sizes = [1, 64], strides = [1, 1]} : vector<8x64xf32> to vector<1x64xf32>
      %574 = vector.shape_cast %573 : vector<1x64xf32> to vector<64xf32>
      %575 = vector.shape_cast %574 : vector<64xf32> to vector<1x64xf32>
      %576 = vector.broadcast %575 : vector<1x64xf32> to vector<32x64xf32>
      %577 = arith.mulf %576, %206 : vector<32x64xf32>
      %578 = math.exp %577 : vector<32x64xf32>
      %579 = arith.mulf %578, %568 : vector<32x64xf32>
      %580 = vector.extract_strided_slice %474 {offsets = [0, 5], sizes = [32, 1], strides = [1, 1]} : vector<32x8xf32> to vector<32x1xf32>
      %581 = vector.extract_strided_slice %471 {offsets = [5, 0], sizes = [1, 64], strides = [1, 1]} : vector<8x64xf32> to vector<1x64xf32>
      %582 = vector.shape_cast %581 : vector<1x64xf32> to vector<64xf32>
      %583 = vector.shape_cast %582 : vector<64xf32> to vector<1x64xf32>
      %584 = vector.broadcast %580 : vector<32x1xf32> to vector<32x64xf32>
      %585 = vector.broadcast %583 : vector<1x64xf32> to vector<32x64xf32>
      %586 = arith.mulf %584, %585 : vector<32x64xf32>
      %587 = arith.addf %579, %586 : vector<32x64xf32>
      %588 = vector.extract_strided_slice %477 {offsets = [0, 5], sizes = [32, 1], strides = [1, 1]} : vector<32x8xf32> to vector<32x1xf32>
      %589 = vector.broadcast %588 : vector<32x1xf32> to vector<32x64xf32>
      %590 = arith.mulf %587, %589 : vector<32x64xf32>
      %cst_198 = arith.constant dense<0.000000e+00> : vector<64xf32>
      %591 = vector.multi_reduction <add>, %590, %cst_198 [0] : vector<32x64xf32> to vector<64xf32>
      %592 = vector.extract_strided_slice %469 {offsets = [6, 0], sizes = [1, 64], strides = [1, 1]} : vector<8x64xf32> to vector<1x64xf32>
      %593 = vector.shape_cast %592 : vector<1x64xf32> to vector<64xf32>
      %594 = vector.shape_cast %593 : vector<64xf32> to vector<1x64xf32>
      %595 = vector.broadcast %594 : vector<1x64xf32> to vector<32x64xf32>
      %596 = arith.mulf %595, %206 : vector<32x64xf32>
      %597 = math.exp %596 : vector<32x64xf32>
      %598 = arith.mulf %597, %587 : vector<32x64xf32>
      %599 = vector.extract_strided_slice %474 {offsets = [0, 6], sizes = [32, 1], strides = [1, 1]} : vector<32x8xf32> to vector<32x1xf32>
      %600 = vector.extract_strided_slice %471 {offsets = [6, 0], sizes = [1, 64], strides = [1, 1]} : vector<8x64xf32> to vector<1x64xf32>
      %601 = vector.shape_cast %600 : vector<1x64xf32> to vector<64xf32>
      %602 = vector.shape_cast %601 : vector<64xf32> to vector<1x64xf32>
      %603 = vector.broadcast %599 : vector<32x1xf32> to vector<32x64xf32>
      %604 = vector.broadcast %602 : vector<1x64xf32> to vector<32x64xf32>
      %605 = arith.mulf %603, %604 : vector<32x64xf32>
      %606 = arith.addf %598, %605 : vector<32x64xf32>
      %607 = vector.extract_strided_slice %477 {offsets = [0, 6], sizes = [32, 1], strides = [1, 1]} : vector<32x8xf32> to vector<32x1xf32>
      %608 = vector.broadcast %607 : vector<32x1xf32> to vector<32x64xf32>
      %609 = arith.mulf %606, %608 : vector<32x64xf32>
      %cst_199 = arith.constant dense<0.000000e+00> : vector<64xf32>
      %610 = vector.multi_reduction <add>, %609, %cst_199 [0] : vector<32x64xf32> to vector<64xf32>
      %611 = vector.extract_strided_slice %469 {offsets = [7, 0], sizes = [1, 64], strides = [1, 1]} : vector<8x64xf32> to vector<1x64xf32>
      %612 = vector.shape_cast %611 : vector<1x64xf32> to vector<64xf32>
      %613 = vector.shape_cast %612 : vector<64xf32> to vector<1x64xf32>
      %614 = vector.broadcast %613 : vector<1x64xf32> to vector<32x64xf32>
      %615 = arith.mulf %614, %206 : vector<32x64xf32>
      %616 = math.exp %615 : vector<32x64xf32>
      %617 = arith.mulf %616, %606 : vector<32x64xf32>
      %618 = vector.extract_strided_slice %474 {offsets = [0, 7], sizes = [32, 1], strides = [1, 1]} : vector<32x8xf32> to vector<32x1xf32>
      %619 = vector.extract_strided_slice %471 {offsets = [7, 0], sizes = [1, 64], strides = [1, 1]} : vector<8x64xf32> to vector<1x64xf32>
      %620 = vector.shape_cast %619 : vector<1x64xf32> to vector<64xf32>
      %621 = vector.shape_cast %620 : vector<64xf32> to vector<1x64xf32>
      %622 = vector.broadcast %618 : vector<32x1xf32> to vector<32x64xf32>
      %623 = vector.broadcast %621 : vector<1x64xf32> to vector<32x64xf32>
      %624 = arith.mulf %622, %623 : vector<32x64xf32>
      %625 = arith.addf %617, %624 : vector<32x64xf32>
      %626 = vector.extract_strided_slice %477 {offsets = [0, 7], sizes = [32, 1], strides = [1, 1]} : vector<32x8xf32> to vector<32x1xf32>
      %627 = vector.broadcast %626 : vector<32x1xf32> to vector<32x64xf32>
      %628 = arith.mulf %625, %627 : vector<32x64xf32>
      %cst_200 = arith.constant dense<0.000000e+00> : vector<64xf32>
      %629 = vector.multi_reduction <add>, %628, %cst_200 [0] : vector<32x64xf32> to vector<64xf32>
      %630 = vector.shape_cast %496 : vector<64xf32> to vector<1x64xf32>
      %631 = vector.shape_cast %515 : vector<64xf32> to vector<1x64xf32>
      %632 = vector.shape_cast %534 : vector<64xf32> to vector<1x64xf32>
      %633 = vector.shape_cast %553 : vector<64xf32> to vector<1x64xf32>
      %634 = vector.shape_cast %572 : vector<64xf32> to vector<1x64xf32>
      %635 = vector.shape_cast %591 : vector<64xf32> to vector<1x64xf32>
      %636 = vector.shape_cast %610 : vector<64xf32> to vector<1x64xf32>
      %637 = vector.shape_cast %629 : vector<64xf32> to vector<1x64xf32>
      %638 = tpu.concatenate %630, %631, %632, %633, %634, %635, %636, %637 in 0 : vector<1x64xf32>, vector<1x64xf32>, vector<1x64xf32>, vector<1x64xf32>, vector<1x64xf32>, vector<1x64xf32>, vector<1x64xf32>, vector<1x64xf32> -> vector<8x64xf32>
      %639 = arith.index_cast %467 : i32 to index
      %c0_201 = arith.constant 0 : index
      %640 = vector.load %arg22[%639, %c0_201] : memref<16x64xf32, #tpu.memory_space<vmem>>, vector<8x64xf32>
      tpu.vector_store %arg22[%639, %c0_201], %638 {strides = array<i32>} : memref<16x64xf32, #tpu.memory_space<vmem>>, vector<8x64xf32>,
      scf.yield %625 : vector<32x64xf32>
    }
    %c2_i32_72 = arith.constant 2 : i32
    %c0_73 = arith.constant 0 : index
    %c0_74 = arith.constant 0 : index
    %210 = vector.load %arg22[%c0_73, %c0_74] : memref<16x64xf32, #tpu.memory_space<vmem>>, vector<16x64xf32>
    %c0_75 = arith.constant 0 : index
    %c0_76 = arith.constant 0 : index
    %211 = vector.load %arg12[%c0_75, %c0_76] : memref<2x64xf32, #tpu.memory_space<vmem>>, vector<1x64xf32>
    %212 = vector.shape_cast %211 : vector<1x64xf32> to vector<64xf32>
    %213 = vector.shape_cast %212 : vector<64xf32> to vector<1x64xf32>
    %214 = vector.broadcast %213 : vector<1x64xf32> to vector<16x64xf32>
    %215 = arith.mulf %214, %173 : vector<16x64xf32>
    %216 = arith.addf %210, %215 : vector<16x64xf32>
    %cst_77 = arith.constant -3.000000e+01 : f32
    %217 = vector.broadcast %cst_77 : f32 to vector<16x64xf32>
    %218 = arith.maximumf %42, %217 : vector<16x64xf32>
    %cst_78 = arith.constant 0.000000e+00 : f32
    %219 = vector.broadcast %cst_78 : f32 to vector<16x64xf32>
    %220 = arith.subf %219, %218 : vector<16x64xf32>
    %221 = math.exp %220 : vector<16x64xf32>
    %cst_79 = arith.constant 1.000000e+00 : f32
    %222 = vector.broadcast %cst_79 : f32 to vector<16x64xf32>
    %223 = arith.addf %222, %221 : vector<16x64xf32>
    %224 = tpu.reciprocal %223 {approx = true} : vector<16x64xf32> -> vector<16x64xf32>
    %225 = arith.mulf %42, %224 : vector<16x64xf32>
    %226 = arith.mulf %216, %225 : vector<16x64xf32>
    %c0_80 = arith.constant 0 : index
    %c0_81 = arith.constant 0 : index
    %c0_82 = arith.constant 0 : index
    %227 = vector.load %arg13[%c0_80, %c0_81, %c0_82] : memref<2x64x2xf32, #tpu.memory_space<vmem>>, vector<1x64x2xf32>
    %228 = vector.shape_cast %227 : vector<1x64x2xf32> to vector<64x2xf32>
    %cst_83 = arith.constant dense<0.000000e+00> : vector<16x2xf32>
    %229 = tpu.matmul %226, %228, %cst_83 {dimension_numbers = #tpu.dot_dimension_numbers<[1], [0], [0], [1], [0, 0, 1, 1], [], []>} : vector<16x64xf32>, vector<64x2xf32>, vector<16x2xf32> -> vector<16x2xf32>
    %230 = arith.addf %1, %229 : vector<16x2xf32>
    %231 = arith.mulf %230, %230 : vector<16x2xf32>
    %cst_84 = arith.constant dense<0.000000e+00> : vector<16xf32>
    %232 = vector.multi_reduction <add>, %231, %cst_84 [1] : vector<16x2xf32> to vector<16xf32>
    %233 = vector.shape_cast %232 : vector<16xf32> to vector<16x1xf32>
    %cst_85 = arith.constant 2.000000e+00 : f32
    %234 = vector.broadcast %cst_85 : f32 to vector<16x1xf32>
    %235 = arith.divf %233, %234 : vector<16x1xf32>
    %cst_86 = arith.constant 9.99999974E-6 : f32
    %236 = vector.broadcast %cst_86 : f32 to vector<16x1xf32>
    %237 = arith.addf %235, %236 : vector<16x1xf32>
    %238 = math.rsqrt %237 : vector<16x1xf32>
    %239 = vector.broadcast %238 : vector<16x1xf32> to vector<16x2xf32>
    %240 = arith.mulf %230, %239 : vector<16x2xf32>
    %c1_87 = arith.constant 1 : index
    %c0_88 = arith.constant 0 : index
    %241 = vector.load %arg2[%c1_87, %c0_88] : memref<2x2xf32, #tpu.memory_space<vmem>>, vector<1x2xf32>
    %242 = vector.shape_cast %241 : vector<1x2xf32> to vector<2xf32>
    %243 = vector.shape_cast %242 : vector<2xf32> to vector<1x2xf32>
    %244 = vector.broadcast %243 : vector<1x2xf32> to vector<16x2xf32>
    %245 = arith.mulf %240, %244 : vector<16x2xf32>
    %c1_89 = arith.constant 1 : index
    %c0_90 = arith.constant 0 : index
    %c0_91 = arith.constant 0 : index
    %246 = vector.load %arg3[%c1_89, %c0_90, %c0_91] : memref<2x2x64xf32, #tpu.memory_space<vmem>>, vector<1x2x64xf32>
    %247 = vector.shape_cast %246 : vector<1x2x64xf32> to vector<2x64xf32>
    %248 = vector.extract_strided_slice %245 {offsets = [0, 0], sizes = [16, 1], strides = [1, 1]} : vector<16x2xf32> to vector<16x1xf32>
    %249 = vector.extract_strided_slice %247 {offsets = [0, 0], sizes = [1, 64], strides = [1, 1]} : vector<2x64xf32> to vector<1x64xf32>
    %250 = vector.broadcast %248 : vector<16x1xf32> to vector<16x64xf32>
    %251 = vector.broadcast %249 : vector<1x64xf32> to vector<16x64xf32>
    %252 = arith.mulf %250, %251 : vector<16x64xf32>
    %253 = vector.extract_strided_slice %245 {offsets = [0, 1], sizes = [16, 1], strides = [1, 1]} : vector<16x2xf32> to vector<16x1xf32>
    %254 = vector.extract_strided_slice %247 {offsets = [1, 0], sizes = [1, 64], strides = [1, 1]} : vector<2x64xf32> to vector<1x64xf32>
    %255 = vector.broadcast %253 : vector<16x1xf32> to vector<16x64xf32>
    %256 = vector.broadcast %254 : vector<1x64xf32> to vector<16x64xf32>
    %257 = arith.mulf %255, %256 : vector<16x64xf32>
    %258 = arith.addf %252, %257 : vector<16x64xf32>
    %c1_92 = arith.constant 1 : index
    %c0_93 = arith.constant 0 : index
    %c0_94 = arith.constant 0 : index
    %259 = vector.load %arg4[%c1_92, %c0_93, %c0_94] : memref<2x2x64xf32, #tpu.memory_space<vmem>>, vector<1x2x64xf32>
    %260 = vector.shape_cast %259 : vector<1x2x64xf32> to vector<2x64xf32>
    %261 = vector.extract_strided_slice %245 {offsets = [0, 0], sizes = [16, 1], strides = [1, 1]} : vector<16x2xf32> to vector<16x1xf32>
    %262 = vector.extract_strided_slice %260 {offsets = [0, 0], sizes = [1, 64], strides = [1, 1]} : vector<2x64xf32> to vector<1x64xf32>
    %263 = vector.broadcast %261 : vector<16x1xf32> to vector<16x64xf32>
    %264 = vector.broadcast %262 : vector<1x64xf32> to vector<16x64xf32>
    %265 = arith.mulf %263, %264 : vector<16x64xf32>
    %266 = vector.extract_strided_slice %245 {offsets = [0, 1], sizes = [16, 1], strides = [1, 1]} : vector<16x2xf32> to vector<16x1xf32>
    %267 = vector.extract_strided_slice %260 {offsets = [1, 0], sizes = [1, 64], strides = [1, 1]} : vector<2x64xf32> to vector<1x64xf32>
    %268 = vector.broadcast %266 : vector<16x1xf32> to vector<16x64xf32>
    %269 = vector.broadcast %267 : vector<1x64xf32> to vector<16x64xf32>
    %270 = arith.mulf %268, %269 : vector<16x64xf32>
    %271 = arith.addf %265, %270 : vector<16x64xf32>
    %c1_95 = arith.constant 1 : index
    %c0_96 = arith.constant 0 : index
    %c0_97 = arith.constant 0 : index
    %272 = vector.load %arg5[%c1_95, %c0_96, %c0_97] : memref<2x16x64xf32, #tpu.memory_space<vmem>>, vector<1x16x64xf32>
    %273 = vector.shape_cast %272 : vector<1x16x64xf32> to vector<16x64xf32>
    %cst_98 = arith.constant 0.000000e+00 : f32
    %274 = vector.broadcast %cst_98 : f32 to vector<15x64xf32>
    %c0_99 = arith.constant 0 : index
    %c0_100 = arith.constant 0 : index
    %275 = vector.load %arg17[%c0_99, %c0_100] : memref<31x64xf32, #tpu.memory_space<vmem>>, vector<15x64xf32>
    tpu.vector_store %arg17[%c0_99, %c0_100], %274 {strides = array<i32>} : memref<31x64xf32, #tpu.memory_space<vmem>>, vector<15x64xf32>,
    %c15_101 = arith.constant 15 : index
    %c0_102 = arith.constant 0 : index
    %276 = vector.load %arg17[%c15_101, %c0_102] : memref<31x64xf32, #tpu.memory_space<vmem>>, vector<16x64xf32>
    tpu.vector_store %arg17[%c15_101, %c0_102], %258 {strides = array<i32>} : memref<31x64xf32, #tpu.memory_space<vmem>>, vector<16x64xf32>,
    %c1_103 = arith.constant 1 : index
    %c0_104 = arith.constant 0 : index
    %277 = vector.load %arg6[%c1_103, %c0_104] : memref<2x64xf32, #tpu.memory_space<vmem>>, vector<1x64xf32>
    %278 = vector.shape_cast %277 : vector<1x64xf32> to vector<64xf32>
    %279 = vector.shape_cast %278 : vector<64xf32> to vector<1x64xf32>
    %280 = vector.shape_cast %279 : vector<1x64xf32> to vector<1x64xf32>
    %281 = vector.broadcast %280 : vector<1x64xf32> to vector<16x64xf32>
    %c0_105 = arith.constant 0 : index
    %c0_106 = arith.constant 0 : index
    %282 = vector.load %arg17[%c0_105, %c0_106] : memref<31x64xf32, #tpu.memory_space<vmem>>, vector<16x64xf32>
    %283 = vector.extract_strided_slice %273 {offsets = [0, 0], sizes = [1, 64], strides = [1, 1]} : vector<16x64xf32> to vector<1x64xf32>
    %284 = vector.shape_cast %283 : vector<1x64xf32> to vector<64xf32>
    %285 = vector.shape_cast %284 : vector<64xf32> to vector<1x64xf32>
    %286 = vector.broadcast %285 : vector<1x64xf32> to vector<16x64xf32>
    %287 = arith.mulf %282, %286 : vector<16x64xf32>
    %288 = arith.addf %281, %287 : vector<16x64xf32>
    %c1_107 = arith.constant 1 : index
    %c0_108 = arith.constant 0 : index
    %289 = vector.load %arg17[%c1_107, %c0_108] : memref<31x64xf32, #tpu.memory_space<vmem>>, vector<16x64xf32>
    %290 = vector.extract_strided_slice %273 {offsets = [1, 0], sizes = [1, 64], strides = [1, 1]} : vector<16x64xf32> to vector<1x64xf32>
    %291 = vector.shape_cast %290 : vector<1x64xf32> to vector<64xf32>
    %292 = vector.shape_cast %291 : vector<64xf32> to vector<1x64xf32>
    %293 = vector.broadcast %292 : vector<1x64xf32> to vector<16x64xf32>
    %294 = arith.mulf %289, %293 : vector<16x64xf32>
    %295 = arith.addf %288, %294 : vector<16x64xf32>
    %c2_109 = arith.constant 2 : index
    %c0_110 = arith.constant 0 : index
    %296 = vector.load %arg17[%c2_109, %c0_110] : memref<31x64xf32, #tpu.memory_space<vmem>>, vector<16x64xf32>
    %297 = vector.extract_strided_slice %273 {offsets = [2, 0], sizes = [1, 64], strides = [1, 1]} : vector<16x64xf32> to vector<1x64xf32>
    %298 = vector.shape_cast %297 : vector<1x64xf32> to vector<64xf32>
    %299 = vector.shape_cast %298 : vector<64xf32> to vector<1x64xf32>
    %300 = vector.broadcast %299 : vector<1x64xf32> to vector<16x64xf32>
    %301 = arith.mulf %296, %300 : vector<16x64xf32>
    %302 = arith.addf %295, %301 : vector<16x64xf32>
    %c3_111 = arith.constant 3 : index
    %c0_112 = arith.constant 0 : index
    %303 = vector.load %arg17[%c3_111, %c0_112] : memref<31x64xf32, #tpu.memory_space<vmem>>, vector<16x64xf32>
    %304 = vector.extract_strided_slice %273 {offsets = [3, 0], sizes = [1, 64], strides = [1, 1]} : vector<16x64xf32> to vector<1x64xf32>
    %305 = vector.shape_cast %304 : vector<1x64xf32> to vector<64xf32>
    %306 = vector.shape_cast %305 : vector<64xf32> to vector<1x64xf32>
    %307 = vector.broadcast %306 : vector<1x64xf32> to vector<16x64xf32>
    %308 = arith.mulf %303, %307 : vector<16x64xf32>
    %309 = arith.addf %302, %308 : vector<16x64xf32>
    %c4_113 = arith.constant 4 : index
    %c0_114 = arith.constant 0 : index
    %310 = vector.load %arg17[%c4_113, %c0_114] : memref<31x64xf32, #tpu.memory_space<vmem>>, vector<16x64xf32>
    %311 = vector.extract_strided_slice %273 {offsets = [4, 0], sizes = [1, 64], strides = [1, 1]} : vector<16x64xf32> to vector<1x64xf32>
    %312 = vector.shape_cast %311 : vector<1x64xf32> to vector<64xf32>
    %313 = vector.shape_cast %312 : vector<64xf32> to vector<1x64xf32>
    %314 = vector.broadcast %313 : vector<1x64xf32> to vector<16x64xf32>
    %315 = arith.mulf %310, %314 : vector<16x64xf32>
    %316 = arith.addf %309, %315 : vector<16x64xf32>
    %c5_115 = arith.constant 5 : index
    %c0_116 = arith.constant 0 : index
    %317 = vector.load %arg17[%c5_115, %c0_116] : memref<31x64xf32, #tpu.memory_space<vmem>>, vector<16x64xf32>
    %318 = vector.extract_strided_slice %273 {offsets = [5, 0], sizes = [1, 64], strides = [1, 1]} : vector<16x64xf32> to vector<1x64xf32>
    %319 = vector.shape_cast %318 : vector<1x64xf32> to vector<64xf32>
    %320 = vector.shape_cast %319 : vector<64xf32> to vector<1x64xf32>
    %321 = vector.broadcast %320 : vector<1x64xf32> to vector<16x64xf32>
    %322 = arith.mulf %317, %321 : vector<16x64xf32>
    %323 = arith.addf %316, %322 : vector<16x64xf32>
    %c6_117 = arith.constant 6 : index
    %c0_118 = arith.constant 0 : index
    %324 = vector.load %arg17[%c6_117, %c0_118] : memref<31x64xf32, #tpu.memory_space<vmem>>, vector<16x64xf32>
    %325 = vector.extract_strided_slice %273 {offsets = [6, 0], sizes = [1, 64], strides = [1, 1]} : vector<16x64xf32> to vector<1x64xf32>
    %326 = vector.shape_cast %325 : vector<1x64xf32> to vector<64xf32>
    %327 = vector.shape_cast %326 : vector<64xf32> to vector<1x64xf32>
    %328 = vector.broadcast %327 : vector<1x64xf32> to vector<16x64xf32>
    %329 = arith.mulf %324, %328 : vector<16x64xf32>
    %330 = arith.addf %323, %329 : vector<16x64xf32>
    %c7_119 = arith.constant 7 : index
    %c0_120 = arith.constant 0 : index
    %331 = vector.load %arg17[%c7_119, %c0_120] : memref<31x64xf32, #tpu.memory_space<vmem>>, vector<16x64xf32>
    %332 = vector.extract_strided_slice %273 {offsets = [7, 0], sizes = [1, 64], strides = [1, 1]} : vector<16x64xf32> to vector<1x64xf32>
    %333 = vector.shape_cast %332 : vector<1x64xf32> to vector<64xf32>
    %334 = vector.shape_cast %333 : vector<64xf32> to vector<1x64xf32>
    %335 = vector.broadcast %334 : vector<1x64xf32> to vector<16x64xf32>
    %336 = arith.mulf %331, %335 : vector<16x64xf32>
    %337 = arith.addf %330, %336 : vector<16x64xf32>
    %c8_121 = arith.constant 8 : index
    %c0_122 = arith.constant 0 : index
    %338 = vector.load %arg17[%c8_121, %c0_122] : memref<31x64xf32, #tpu.memory_space<vmem>>, vector<16x64xf32>
    %339 = vector.extract_strided_slice %273 {offsets = [8, 0], sizes = [1, 64], strides = [1, 1]} : vector<16x64xf32> to vector<1x64xf32>
    %340 = vector.shape_cast %339 : vector<1x64xf32> to vector<64xf32>
    %341 = vector.shape_cast %340 : vector<64xf32> to vector<1x64xf32>
    %342 = vector.broadcast %341 : vector<1x64xf32> to vector<16x64xf32>
    %343 = arith.mulf %338, %342 : vector<16x64xf32>
    %344 = arith.addf %337, %343 : vector<16x64xf32>
    %c9_123 = arith.constant 9 : index
    %c0_124 = arith.constant 0 : index
    %345 = vector.load %arg17[%c9_123, %c0_124] : memref<31x64xf32, #tpu.memory_space<vmem>>, vector<16x64xf32>
    %346 = vector.extract_strided_slice %273 {offsets = [9, 0], sizes = [1, 64], strides = [1, 1]} : vector<16x64xf32> to vector<1x64xf32>
    %347 = vector.shape_cast %346 : vector<1x64xf32> to vector<64xf32>
    %348 = vector.shape_cast %347 : vector<64xf32> to vector<1x64xf32>
    %349 = vector.broadcast %348 : vector<1x64xf32> to vector<16x64xf32>
    %350 = arith.mulf %345, %349 : vector<16x64xf32>
    %351 = arith.addf %344, %350 : vector<16x64xf32>
    %c10_125 = arith.constant 10 : index
    %c0_126 = arith.constant 0 : index
    %352 = vector.load %arg17[%c10_125, %c0_126] : memref<31x64xf32, #tpu.memory_space<vmem>>, vector<16x64xf32>
    %353 = vector.extract_strided_slice %273 {offsets = [10, 0], sizes = [1, 64], strides = [1, 1]} : vector<16x64xf32> to vector<1x64xf32>
    %354 = vector.shape_cast %353 : vector<1x64xf32> to vector<64xf32>
    %355 = vector.shape_cast %354 : vector<64xf32> to vector<1x64xf32>
    %356 = vector.broadcast %355 : vector<1x64xf32> to vector<16x64xf32>
    %357 = arith.mulf %352, %356 : vector<16x64xf32>
    %358 = arith.addf %351, %357 : vector<16x64xf32>
    %c11_127 = arith.constant 11 : index
    %c0_128 = arith.constant 0 : index
    %359 = vector.load %arg17[%c11_127, %c0_128] : memref<31x64xf32, #tpu.memory_space<vmem>>, vector<16x64xf32>
    %360 = vector.extract_strided_slice %273 {offsets = [11, 0], sizes = [1, 64], strides = [1, 1]} : vector<16x64xf32> to vector<1x64xf32>
    %361 = vector.shape_cast %360 : vector<1x64xf32> to vector<64xf32>
    %362 = vector.shape_cast %361 : vector<64xf32> to vector<1x64xf32>
    %363 = vector.broadcast %362 : vector<1x64xf32> to vector<16x64xf32>
    %364 = arith.mulf %359, %363 : vector<16x64xf32>
    %365 = arith.addf %358, %364 : vector<16x64xf32>
    %c12_129 = arith.constant 12 : index
    %c0_130 = arith.constant 0 : index
    %366 = vector.load %arg17[%c12_129, %c0_130] : memref<31x64xf32, #tpu.memory_space<vmem>>, vector<16x64xf32>
    %367 = vector.extract_strided_slice %273 {offsets = [12, 0], sizes = [1, 64], strides = [1, 1]} : vector<16x64xf32> to vector<1x64xf32>
    %368 = vector.shape_cast %367 : vector<1x64xf32> to vector<64xf32>
    %369 = vector.shape_cast %368 : vector<64xf32> to vector<1x64xf32>
    %370 = vector.broadcast %369 : vector<1x64xf32> to vector<16x64xf32>
    %371 = arith.mulf %366, %370 : vector<16x64xf32>
    %372 = arith.addf %365, %371 : vector<16x64xf32>
    %c13_131 = arith.constant 13 : index
    %c0_132 = arith.constant 0 : index
    %373 = vector.load %arg17[%c13_131, %c0_132] : memref<31x64xf32, #tpu.memory_space<vmem>>, vector<16x64xf32>
    %374 = vector.extract_strided_slice %273 {offsets = [13, 0], sizes = [1, 64], strides = [1, 1]} : vector<16x64xf32> to vector<1x64xf32>
    %375 = vector.shape_cast %374 : vector<1x64xf32> to vector<64xf32>
    %376 = vector.shape_cast %375 : vector<64xf32> to vector<1x64xf32>
    %377 = vector.broadcast %376 : vector<1x64xf32> to vector<16x64xf32>
    %378 = arith.mulf %373, %377 : vector<16x64xf32>
    %379 = arith.addf %372, %378 : vector<16x64xf32>
    %c14_133 = arith.constant 14 : index
    %c0_134 = arith.constant 0 : index
    %380 = vector.load %arg17[%c14_133, %c0_134] : memref<31x64xf32, #tpu.memory_space<vmem>>, vector<16x64xf32>
    %381 = vector.extract_strided_slice %273 {offsets = [14, 0], sizes = [1, 64], strides = [1, 1]} : vector<16x64xf32> to vector<1x64xf32>
    %382 = vector.shape_cast %381 : vector<1x64xf32> to vector<64xf32>
    %383 = vector.shape_cast %382 : vector<64xf32> to vector<1x64xf32>
    %384 = vector.broadcast %383 : vector<1x64xf32> to vector<16x64xf32>
    %385 = arith.mulf %380, %384 : vector<16x64xf32>
    %386 = arith.addf %379, %385 : vector<16x64xf32>
    %c15_135 = arith.constant 15 : index
    %c0_136 = arith.constant 0 : index
    %387 = vector.load %arg17[%c15_135, %c0_136] : memref<31x64xf32, #tpu.memory_space<vmem>>, vector<16x64xf32>
    %388 = vector.extract_strided_slice %273 {offsets = [15, 0], sizes = [1, 64], strides = [1, 1]} : vector<16x64xf32> to vector<1x64xf32>
    %389 = vector.shape_cast %388 : vector<1x64xf32> to vector<64xf32>
    %390 = vector.shape_cast %389 : vector<64xf32> to vector<1x64xf32>
    %391 = vector.broadcast %390 : vector<1x64xf32> to vector<16x64xf32>
    %392 = arith.mulf %387, %391 : vector<16x64xf32>
    %393 = arith.addf %386, %392 : vector<16x64xf32>
    %cst_137 = arith.constant -3.000000e+01 : f32
    %394 = vector.broadcast %cst_137 : f32 to vector<16x64xf32>
    %395 = arith.maximumf %393, %394 : vector<16x64xf32>
    %cst_138 = arith.constant 0.000000e+00 : f32
    %396 = vector.broadcast %cst_138 : f32 to vector<16x64xf32>
    %397 = arith.subf %396, %395 : vector<16x64xf32>
    %398 = math.exp %397 : vector<16x64xf32>
    %cst_139 = arith.constant 1.000000e+00 : f32
    %399 = vector.broadcast %cst_139 : f32 to vector<16x64xf32>
    %400 = arith.addf %399, %398 : vector<16x64xf32>
    %401 = tpu.reciprocal %400 {approx = true} : vector<16x64xf32> -> vector<16x64xf32>
    %402 = arith.mulf %393, %401 : vector<16x64xf32>
    %c1_140 = arith.constant 1 : index
    %c0_141 = arith.constant 0 : index
    %c0_142 = arith.constant 0 : index
    %403 = vector.load %arg7[%c1_140, %c0_141, %c0_142] : memref<2x64x64xf32, #tpu.memory_space<vmem>>, vector<1x64x64xf32>
    %404 = vector.shape_cast %403 : vector<1x64x64xf32> to vector<64x64xf32>
    %cst_143 = arith.constant dense<0.000000e+00> : vector<16x64xf32>
    %405 = tpu.matmul %402, %404, %cst_143 {dimension_numbers = #tpu.dot_dimension_numbers<[1], [0], [0], [1], [0, 0, 1, 1], [], []>} : vector<16x64xf32>, vector<64x64xf32>, vector<16x64xf32> -> vector<16x64xf32>
    %c1_144 = arith.constant 1 : index
    %c0_145 = arith.constant 0 : index
    %406 = vector.load %arg8[%c1_144, %c0_145] : memref<2x64xf32, #tpu.memory_space<vmem>>, vector<1x64xf32>
    %407 = vector.shape_cast %406 : vector<1x64xf32> to vector<64xf32>
    %408 = vector.shape_cast %407 : vector<64xf32> to vector<1x64xf32>
    %409 = vector.broadcast %408 : vector<1x64xf32> to vector<16x64xf32>
    %410 = arith.addf %405, %409 : vector<16x64xf32>
    %cst_146 = arith.constant 2.000000e+01 : f32
    %411 = vector.broadcast %cst_146 : f32 to vector<16x64xf32>
    %412 = arith.minimumf %410, %411 : vector<16x64xf32>
    %413 = math.exp %412 : vector<16x64xf32>
    %cst_147 = arith.constant 2.000000e+01 : f32
    %414 = vector.broadcast %cst_147 : f32 to vector<16x64xf32>
    %415 = arith.cmpf ogt, %410, %414 : vector<16x64xf32>
    %cst_148 = arith.constant 1.000000e+00 : f32
    %416 = vector.broadcast %cst_148 : f32 to vector<16x64xf32>
    %417 = arith.addf %416, %413 : vector<16x64xf32>
    %418 = math.log %417 : vector<16x64xf32>
    %419 = arith.select %415, %410, %418 : vector<16x64xi1>, vector<16x64xf32>
    %c1_149 = arith.constant 1 : index
    %c0_150 = arith.constant 0 : index
    %c0_151 = arith.constant 0 : index
    %420 = vector.load %arg9[%c1_149, %c0_150, %c0_151] : memref<2x64x32xf32, #tpu.memory_space<vmem>>, vector<1x64x32xf32>
    %421 = vector.shape_cast %420 : vector<1x64x32xf32> to vector<64x32xf32>
    %cst_152 = arith.constant dense<0.000000e+00> : vector<16x32xf32>
    %422 = tpu.matmul %402, %421, %cst_152 {dimension_numbers = #tpu.dot_dimension_numbers<[1], [0], [0], [1], [0, 0, 1, 1], [], []>} : vector<16x64xf32>, vector<64x32xf32>, vector<16x32xf32> -> vector<16x32xf32>
    %c1_153 = arith.constant 1 : index
    %c0_154 = arith.constant 0 : index
    %c0_155 = arith.constant 0 : index
    %423 = vector.load %arg10[%c1_153, %c0_154, %c0_155] : memref<2x64x32xf32, #tpu.memory_space<vmem>>, vector<1x64x32xf32>
    %424 = vector.shape_cast %423 : vector<1x64x32xf32> to vector<64x32xf32>
    %cst_156 = arith.constant dense<0.000000e+00> : vector<16x32xf32>
    %425 = tpu.matmul %402, %424, %cst_156 {dimension_numbers = #tpu.dot_dimension_numbers<[1], [0], [0], [1], [0, 0, 1, 1], [], []>} : vector<16x64xf32>, vector<64x32xf32>, vector<16x32xf32> -> vector<16x32xf32>
    %c0_157 = arith.constant 0 : index
    %c0_158 = arith.constant 0 : index
    %426 = vector.load %arg18[%c0_157, %c0_158] : memref<16x64xf32, #tpu.memory_space<vmem>>, vector<16x64xf32>
    tpu.vector_store %arg18[%c0_157, %c0_158], %419 {strides = array<i32>} : memref<16x64xf32, #tpu.memory_space<vmem>>, vector<16x64xf32>,
    %427 = arith.mulf %419, %402 : vector<16x64xf32>
    %c0_159 = arith.constant 0 : index
    %c0_160 = arith.constant 0 : index
    %428 = vector.load %arg19[%c0_159, %c0_160] : memref<16x64xf32, #tpu.memory_space<vmem>>, vector<16x64xf32>
    tpu.vector_store %arg19[%c0_159, %c0_160], %427 {strides = array<i32>} : memref<16x64xf32, #tpu.memory_space<vmem>>, vector<16x64xf32>,
    %c0_161 = arith.constant 0 : index
    %c0_162 = arith.constant 0 : index
    %429 = vector.load %arg20[%c0_161, %c0_162] : memref<16x32xf32, #tpu.memory_space<vmem>>, vector<16x32xf32>
    tpu.vector_store %arg20[%c0_161, %c0_162], %422 {strides = array<i32>} : memref<16x32xf32, #tpu.memory_space<vmem>>, vector<16x32xf32>,
    %c0_163 = arith.constant 0 : index
    %c0_164 = arith.constant 0 : index
    %430 = vector.load %arg21[%c0_163, %c0_164] : memref<16x32xf32, #tpu.memory_space<vmem>>, vector<16x32xf32>
    tpu.vector_store %arg21[%c0_163, %c0_164], %425 {strides = array<i32>} : memref<16x32xf32, #tpu.memory_space<vmem>>, vector<16x32xf32>,
    %c1_165 = arith.constant 1 : index
    %c0_166 = arith.constant 0 : index
    %c0_167 = arith.constant 0 : index
    %431 = vector.load %arg11[%c1_165, %c0_166, %c0_167] : memref<2x32x64xf32, #tpu.memory_space<vmem>>, vector<1x32x64xf32>
    %432 = vector.shape_cast %431 : vector<1x32x64xf32> to vector<32x64xf32>
    %433 = math.exp %432 : vector<32x64xf32>
    %cst_168 = arith.constant 0.000000e+00 : f32
    %434 = vector.broadcast %cst_168 : f32 to vector<32x64xf32>
    %435 = arith.subf %434, %433 : vector<32x64xf32>
    %cst_169 = arith.constant 0.000000e+00 : f32
    %436 = vector.broadcast %cst_169 : f32 to vector<32x64xf32>
    %c0_i32_170 = arith.constant 0 : i32
    %c2_i32_171 = arith.constant 2 : i32
    %437 = arith.addi %c0_i32_170, %c2_i32_171 : i32
    %c1_i32_172 = arith.constant 1 : i32
    %438 = scf.for %arg23 = %c0_i32_170 to %437 step %c1_i32_172 iter_args(%arg24 = %436) -> (vector<32x64xf32>)  : i32 {
      %c8_i32 = arith.constant 8 : i32
      %466 = arith.muli %arg23, %c8_i32 : i32
      %467 = tpu.assume_multiple %466, 8 : i32
      %468 = arith.index_cast %467 : i32 to index
      %c0_189 = arith.constant 0 : index
      %469 = vector.load %arg18[%468, %c0_189] : memref<16x64xf32, #tpu.memory_space<vmem>>, vector<8x64xf32>
      %470 = arith.index_cast %467 : i32 to index
      %c0_190 = arith.constant 0 : index
      %471 = vector.load %arg19[%470, %c0_190] : memref<16x64xf32, #tpu.memory_space<vmem>>, vector<8x64xf32>
      %472 = arith.index_cast %467 : i32 to index
      %c0_191 = arith.constant 0 : index
      %473 = vector.load %arg20[%472, %c0_191] : memref<16x32xf32, #tpu.memory_space<vmem>>, vector<8x32xf32>
      %474 = tpu.transpose %473, [1, 0] : vector<8x32xf32> -> vector<32x8xf32>
      %475 = arith.index_cast %467 : i32 to index
      %c0_192 = arith.constant 0 : index
      %476 = vector.load %arg21[%475, %c0_192] : memref<16x32xf32, #tpu.memory_space<vmem>>, vector<8x32xf32>
      %477 = tpu.transpose %476, [1, 0] : vector<8x32xf32> -> vector<32x8xf32>
      %478 = vector.extract_strided_slice %469 {offsets = [0, 0], sizes = [1, 64], strides = [1, 1]} : vector<8x64xf32> to vector<1x64xf32>
      %479 = vector.shape_cast %478 : vector<1x64xf32> to vector<64xf32>
      %480 = vector.shape_cast %479 : vector<64xf32> to vector<1x64xf32>
      %481 = vector.broadcast %480 : vector<1x64xf32> to vector<32x64xf32>
      %482 = arith.mulf %481, %435 : vector<32x64xf32>
      %483 = math.exp %482 : vector<32x64xf32>
      %484 = arith.mulf %483, %arg24 : vector<32x64xf32>
      %485 = vector.extract_strided_slice %474 {offsets = [0, 0], sizes = [32, 1], strides = [1, 1]} : vector<32x8xf32> to vector<32x1xf32>
      %486 = vector.extract_strided_slice %471 {offsets = [0, 0], sizes = [1, 64], strides = [1, 1]} : vector<8x64xf32> to vector<1x64xf32>
      %487 = vector.shape_cast %486 : vector<1x64xf32> to vector<64xf32>
      %488 = vector.shape_cast %487 : vector<64xf32> to vector<1x64xf32>
      %489 = vector.broadcast %485 : vector<32x1xf32> to vector<32x64xf32>
      %490 = vector.broadcast %488 : vector<1x64xf32> to vector<32x64xf32>
      %491 = arith.mulf %489, %490 : vector<32x64xf32>
      %492 = arith.addf %484, %491 : vector<32x64xf32>
      %493 = vector.extract_strided_slice %477 {offsets = [0, 0], sizes = [32, 1], strides = [1, 1]} : vector<32x8xf32> to vector<32x1xf32>
      %494 = vector.broadcast %493 : vector<32x1xf32> to vector<32x64xf32>
      %495 = arith.mulf %492, %494 : vector<32x64xf32>
      %cst_193 = arith.constant dense<0.000000e+00> : vector<64xf32>
      %496 = vector.multi_reduction <add>, %495, %cst_193 [0] : vector<32x64xf32> to vector<64xf32>
      %497 = vector.extract_strided_slice %469 {offsets = [1, 0], sizes = [1, 64], strides = [1, 1]} : vector<8x64xf32> to vector<1x64xf32>
      %498 = vector.shape_cast %497 : vector<1x64xf32> to vector<64xf32>
      %499 = vector.shape_cast %498 : vector<64xf32> to vector<1x64xf32>
      %500 = vector.broadcast %499 : vector<1x64xf32> to vector<32x64xf32>
      %501 = arith.mulf %500, %435 : vector<32x64xf32>
      %502 = math.exp %501 : vector<32x64xf32>
      %503 = arith.mulf %502, %492 : vector<32x64xf32>
      %504 = vector.extract_strided_slice %474 {offsets = [0, 1], sizes = [32, 1], strides = [1, 1]} : vector<32x8xf32> to vector<32x1xf32>
      %505 = vector.extract_strided_slice %471 {offsets = [1, 0], sizes = [1, 64], strides = [1, 1]} : vector<8x64xf32> to vector<1x64xf32>
      %506 = vector.shape_cast %505 : vector<1x64xf32> to vector<64xf32>
      %507 = vector.shape_cast %506 : vector<64xf32> to vector<1x64xf32>
      %508 = vector.broadcast %504 : vector<32x1xf32> to vector<32x64xf32>
      %509 = vector.broadcast %507 : vector<1x64xf32> to vector<32x64xf32>
      %510 = arith.mulf %508, %509 : vector<32x64xf32>
      %511 = arith.addf %503, %510 : vector<32x64xf32>
      %512 = vector.extract_strided_slice %477 {offsets = [0, 1], sizes = [32, 1], strides = [1, 1]} : vector<32x8xf32> to vector<32x1xf32>
      %513 = vector.broadcast %512 : vector<32x1xf32> to vector<32x64xf32>
      %514 = arith.mulf %511, %513 : vector<32x64xf32>
      %cst_194 = arith.constant dense<0.000000e+00> : vector<64xf32>
      %515 = vector.multi_reduction <add>, %514, %cst_194 [0] : vector<32x64xf32> to vector<64xf32>
      %516 = vector.extract_strided_slice %469 {offsets = [2, 0], sizes = [1, 64], strides = [1, 1]} : vector<8x64xf32> to vector<1x64xf32>
      %517 = vector.shape_cast %516 : vector<1x64xf32> to vector<64xf32>
      %518 = vector.shape_cast %517 : vector<64xf32> to vector<1x64xf32>
      %519 = vector.broadcast %518 : vector<1x64xf32> to vector<32x64xf32>
      %520 = arith.mulf %519, %435 : vector<32x64xf32>
      %521 = math.exp %520 : vector<32x64xf32>
      %522 = arith.mulf %521, %511 : vector<32x64xf32>
      %523 = vector.extract_strided_slice %474 {offsets = [0, 2], sizes = [32, 1], strides = [1, 1]} : vector<32x8xf32> to vector<32x1xf32>
      %524 = vector.extract_strided_slice %471 {offsets = [2, 0], sizes = [1, 64], strides = [1, 1]} : vector<8x64xf32> to vector<1x64xf32>
      %525 = vector.shape_cast %524 : vector<1x64xf32> to vector<64xf32>
      %526 = vector.shape_cast %525 : vector<64xf32> to vector<1x64xf32>
      %527 = vector.broadcast %523 : vector<32x1xf32> to vector<32x64xf32>
      %528 = vector.broadcast %526 : vector<1x64xf32> to vector<32x64xf32>
      %529 = arith.mulf %527, %528 : vector<32x64xf32>
      %530 = arith.addf %522, %529 : vector<32x64xf32>
      %531 = vector.extract_strided_slice %477 {offsets = [0, 2], sizes = [32, 1], strides = [1, 1]} : vector<32x8xf32> to vector<32x1xf32>
      %532 = vector.broadcast %531 : vector<32x1xf32> to vector<32x64xf32>
      %533 = arith.mulf %530, %532 : vector<32x64xf32>
      %cst_195 = arith.constant dense<0.000000e+00> : vector<64xf32>
      %534 = vector.multi_reduction <add>, %533, %cst_195 [0] : vector<32x64xf32> to vector<64xf32>
      %535 = vector.extract_strided_slice %469 {offsets = [3, 0], sizes = [1, 64], strides = [1, 1]} : vector<8x64xf32> to vector<1x64xf32>
      %536 = vector.shape_cast %535 : vector<1x64xf32> to vector<64xf32>
      %537 = vector.shape_cast %536 : vector<64xf32> to vector<1x64xf32>
      %538 = vector.broadcast %537 : vector<1x64xf32> to vector<32x64xf32>
      %539 = arith.mulf %538, %435 : vector<32x64xf32>
      %540 = math.exp %539 : vector<32x64xf32>
      %541 = arith.mulf %540, %530 : vector<32x64xf32>
      %542 = vector.extract_strided_slice %474 {offsets = [0, 3], sizes = [32, 1], strides = [1, 1]} : vector<32x8xf32> to vector<32x1xf32>
      %543 = vector.extract_strided_slice %471 {offsets = [3, 0], sizes = [1, 64], strides = [1, 1]} : vector<8x64xf32> to vector<1x64xf32>
      %544 = vector.shape_cast %543 : vector<1x64xf32> to vector<64xf32>
      %545 = vector.shape_cast %544 : vector<64xf32> to vector<1x64xf32>
      %546 = vector.broadcast %542 : vector<32x1xf32> to vector<32x64xf32>
      %547 = vector.broadcast %545 : vector<1x64xf32> to vector<32x64xf32>
      %548 = arith.mulf %546, %547 : vector<32x64xf32>
      %549 = arith.addf %541, %548 : vector<32x64xf32>
      %550 = vector.extract_strided_slice %477 {offsets = [0, 3], sizes = [32, 1], strides = [1, 1]} : vector<32x8xf32> to vector<32x1xf32>
      %551 = vector.broadcast %550 : vector<32x1xf32> to vector<32x64xf32>
      %552 = arith.mulf %549, %551 : vector<32x64xf32>
      %cst_196 = arith.constant dense<0.000000e+00> : vector<64xf32>
      %553 = vector.multi_reduction <add>, %552, %cst_196 [0] : vector<32x64xf32> to vector<64xf32>
      %554 = vector.extract_strided_slice %469 {offsets = [4, 0], sizes = [1, 64], strides = [1, 1]} : vector<8x64xf32> to vector<1x64xf32>
      %555 = vector.shape_cast %554 : vector<1x64xf32> to vector<64xf32>
      %556 = vector.shape_cast %555 : vector<64xf32> to vector<1x64xf32>
      %557 = vector.broadcast %556 : vector<1x64xf32> to vector<32x64xf32>
      %558 = arith.mulf %557, %435 : vector<32x64xf32>
      %559 = math.exp %558 : vector<32x64xf32>
      %560 = arith.mulf %559, %549 : vector<32x64xf32>
      %561 = vector.extract_strided_slice %474 {offsets = [0, 4], sizes = [32, 1], strides = [1, 1]} : vector<32x8xf32> to vector<32x1xf32>
      %562 = vector.extract_strided_slice %471 {offsets = [4, 0], sizes = [1, 64], strides = [1, 1]} : vector<8x64xf32> to vector<1x64xf32>
      %563 = vector.shape_cast %562 : vector<1x64xf32> to vector<64xf32>
      %564 = vector.shape_cast %563 : vector<64xf32> to vector<1x64xf32>
      %565 = vector.broadcast %561 : vector<32x1xf32> to vector<32x64xf32>
      %566 = vector.broadcast %564 : vector<1x64xf32> to vector<32x64xf32>
      %567 = arith.mulf %565, %566 : vector<32x64xf32>
      %568 = arith.addf %560, %567 : vector<32x64xf32>
      %569 = vector.extract_strided_slice %477 {offsets = [0, 4], sizes = [32, 1], strides = [1, 1]} : vector<32x8xf32> to vector<32x1xf32>
      %570 = vector.broadcast %569 : vector<32x1xf32> to vector<32x64xf32>
      %571 = arith.mulf %568, %570 : vector<32x64xf32>
      %cst_197 = arith.constant dense<0.000000e+00> : vector<64xf32>
      %572 = vector.multi_reduction <add>, %571, %cst_197 [0] : vector<32x64xf32> to vector<64xf32>
      %573 = vector.extract_strided_slice %469 {offsets = [5, 0], sizes = [1, 64], strides = [1, 1]} : vector<8x64xf32> to vector<1x64xf32>
      %574 = vector.shape_cast %573 : vector<1x64xf32> to vector<64xf32>
      %575 = vector.shape_cast %574 : vector<64xf32> to vector<1x64xf32>
      %576 = vector.broadcast %575 : vector<1x64xf32> to vector<32x64xf32>
      %577 = arith.mulf %576, %435 : vector<32x64xf32>
      %578 = math.exp %577 : vector<32x64xf32>
      %579 = arith.mulf %578, %568 : vector<32x64xf32>
      %580 = vector.extract_strided_slice %474 {offsets = [0, 5], sizes = [32, 1], strides = [1, 1]} : vector<32x8xf32> to vector<32x1xf32>
      %581 = vector.extract_strided_slice %471 {offsets = [5, 0], sizes = [1, 64], strides = [1, 1]} : vector<8x64xf32> to vector<1x64xf32>
      %582 = vector.shape_cast %581 : vector<1x64xf32> to vector<64xf32>
      %583 = vector.shape_cast %582 : vector<64xf32> to vector<1x64xf32>
      %584 = vector.broadcast %580 : vector<32x1xf32> to vector<32x64xf32>
      %585 = vector.broadcast %583 : vector<1x64xf32> to vector<32x64xf32>
      %586 = arith.mulf %584, %585 : vector<32x64xf32>
      %587 = arith.addf %579, %586 : vector<32x64xf32>
      %588 = vector.extract_strided_slice %477 {offsets = [0, 5], sizes = [32, 1], strides = [1, 1]} : vector<32x8xf32> to vector<32x1xf32>
      %589 = vector.broadcast %588 : vector<32x1xf32> to vector<32x64xf32>
      %590 = arith.mulf %587, %589 : vector<32x64xf32>
      %cst_198 = arith.constant dense<0.000000e+00> : vector<64xf32>
      %591 = vector.multi_reduction <add>, %590, %cst_198 [0] : vector<32x64xf32> to vector<64xf32>
      %592 = vector.extract_strided_slice %469 {offsets = [6, 0], sizes = [1, 64], strides = [1, 1]} : vector<8x64xf32> to vector<1x64xf32>
      %593 = vector.shape_cast %592 : vector<1x64xf32> to vector<64xf32>
      %594 = vector.shape_cast %593 : vector<64xf32> to vector<1x64xf32>
      %595 = vector.broadcast %594 : vector<1x64xf32> to vector<32x64xf32>
      %596 = arith.mulf %595, %435 : vector<32x64xf32>
      %597 = math.exp %596 : vector<32x64xf32>
      %598 = arith.mulf %597, %587 : vector<32x64xf32>
      %599 = vector.extract_strided_slice %474 {offsets = [0, 6], sizes = [32, 1], strides = [1, 1]} : vector<32x8xf32> to vector<32x1xf32>
      %600 = vector.extract_strided_slice %471 {offsets = [6, 0], sizes = [1, 64], strides = [1, 1]} : vector<8x64xf32> to vector<1x64xf32>
      %601 = vector.shape_cast %600 : vector<1x64xf32> to vector<64xf32>
      %602 = vector.shape_cast %601 : vector<64xf32> to vector<1x64xf32>
      %603 = vector.broadcast %599 : vector<32x1xf32> to vector<32x64xf32>
      %604 = vector.broadcast %602 : vector<1x64xf32> to vector<32x64xf32>
      %605 = arith.mulf %603, %604 : vector<32x64xf32>
      %606 = arith.addf %598, %605 : vector<32x64xf32>
      %607 = vector.extract_strided_slice %477 {offsets = [0, 6], sizes = [32, 1], strides = [1, 1]} : vector<32x8xf32> to vector<32x1xf32>
      %608 = vector.broadcast %607 : vector<32x1xf32> to vector<32x64xf32>
      %609 = arith.mulf %606, %608 : vector<32x64xf32>
      %cst_199 = arith.constant dense<0.000000e+00> : vector<64xf32>
      %610 = vector.multi_reduction <add>, %609, %cst_199 [0] : vector<32x64xf32> to vector<64xf32>
      %611 = vector.extract_strided_slice %469 {offsets = [7, 0], sizes = [1, 64], strides = [1, 1]} : vector<8x64xf32> to vector<1x64xf32>
      %612 = vector.shape_cast %611 : vector<1x64xf32> to vector<64xf32>
      %613 = vector.shape_cast %612 : vector<64xf32> to vector<1x64xf32>
      %614 = vector.broadcast %613 : vector<1x64xf32> to vector<32x64xf32>
      %615 = arith.mulf %614, %435 : vector<32x64xf32>
      %616 = math.exp %615 : vector<32x64xf32>
      %617 = arith.mulf %616, %606 : vector<32x64xf32>
      %618 = vector.extract_strided_slice %474 {offsets = [0, 7], sizes = [32, 1], strides = [1, 1]} : vector<32x8xf32> to vector<32x1xf32>
      %619 = vector.extract_strided_slice %471 {offsets = [7, 0], sizes = [1, 64], strides = [1, 1]} : vector<8x64xf32> to vector<1x64xf32>
      %620 = vector.shape_cast %619 : vector<1x64xf32> to vector<64xf32>
      %621 = vector.shape_cast %620 : vector<64xf32> to vector<1x64xf32>
      %622 = vector.broadcast %618 : vector<32x1xf32> to vector<32x64xf32>
      %623 = vector.broadcast %621 : vector<1x64xf32> to vector<32x64xf32>
      %624 = arith.mulf %622, %623 : vector<32x64xf32>
      %625 = arith.addf %617, %624 : vector<32x64xf32>
      %626 = vector.extract_strided_slice %477 {offsets = [0, 7], sizes = [32, 1], strides = [1, 1]} : vector<32x8xf32> to vector<32x1xf32>
      %627 = vector.broadcast %626 : vector<32x1xf32> to vector<32x64xf32>
      %628 = arith.mulf %625, %627 : vector<32x64xf32>
      %cst_200 = arith.constant dense<0.000000e+00> : vector<64xf32>
      %629 = vector.multi_reduction <add>, %628, %cst_200 [0] : vector<32x64xf32> to vector<64xf32>
      %630 = vector.shape_cast %496 : vector<64xf32> to vector<1x64xf32>
      %631 = vector.shape_cast %515 : vector<64xf32> to vector<1x64xf32>
      %632 = vector.shape_cast %534 : vector<64xf32> to vector<1x64xf32>
      %633 = vector.shape_cast %553 : vector<64xf32> to vector<1x64xf32>
      %634 = vector.shape_cast %572 : vector<64xf32> to vector<1x64xf32>
      %635 = vector.shape_cast %591 : vector<64xf32> to vector<1x64xf32>
      %636 = vector.shape_cast %610 : vector<64xf32> to vector<1x64xf32>
      %637 = vector.shape_cast %629 : vector<64xf32> to vector<1x64xf32>
      %638 = tpu.concatenate %630, %631, %632, %633, %634, %635, %636, %637 in 0 : vector<1x64xf32>, vector<1x64xf32>, vector<1x64xf32>, vector<1x64xf32>, vector<1x64xf32>, vector<1x64xf32>, vector<1x64xf32>, vector<1x64xf32> -> vector<8x64xf32>
      %639 = arith.index_cast %467 : i32 to index
      %c0_201 = arith.constant 0 : index
      %640 = vector.load %arg22[%639, %c0_201] : memref<16x64xf32, #tpu.memory_space<vmem>>, vector<8x64xf32>
      tpu.vector_store %arg22[%639, %c0_201], %638 {strides = array<i32>} : memref<16x64xf32, #tpu.memory_space<vmem>>, vector<8x64xf32>,
      scf.yield %625 : vector<32x64xf32>
    }
    %c2_i32_173 = arith.constant 2 : i32
    %c0_174 = arith.constant 0 : index
    %c0_175 = arith.constant 0 : index
    %439 = vector.load %arg22[%c0_174, %c0_175] : memref<16x64xf32, #tpu.memory_space<vmem>>, vector<16x64xf32>
    %c1_176 = arith.constant 1 : index
    %c0_177 = arith.constant 0 : index
    %440 = vector.load %arg12[%c1_176, %c0_177] : memref<2x64xf32, #tpu.memory_space<vmem>>, vector<1x64xf32>
    %441 = vector.shape_cast %440 : vector<1x64xf32> to vector<64xf32>
    %442 = vector.shape_cast %441 : vector<64xf32> to vector<1x64xf32>
    %443 = vector.broadcast %442 : vector<1x64xf32> to vector<16x64xf32>
    %444 = arith.mulf %443, %402 : vector<16x64xf32>
    %445 = arith.addf %439, %444 : vector<16x64xf32>
    %cst_178 = arith.constant -3.000000e+01 : f32
    %446 = vector.broadcast %cst_178 : f32 to vector<16x64xf32>
    %447 = arith.maximumf %271, %446 : vector<16x64xf32>
    %cst_179 = arith.constant 0.000000e+00 : f32
    %448 = vector.broadcast %cst_179 : f32 to vector<16x64xf32>
    %449 = arith.subf %448, %447 : vector<16x64xf32>
    %450 = math.exp %449 : vector<16x64xf32>
    %cst_180 = arith.constant 1.000000e+00 : f32
    %451 = vector.broadcast %cst_180 : f32 to vector<16x64xf32>
    %452 = arith.addf %451, %450 : vector<16x64xf32>
    %453 = tpu.reciprocal %452 {approx = true} : vector<16x64xf32> -> vector<16x64xf32>
    %454 = arith.mulf %271, %453 : vector<16x64xf32>
    %455 = arith.mulf %445, %454 : vector<16x64xf32>
    %456 = vector.extract_strided_slice %455 {offsets = [11, 0], sizes = [1, 64], strides = [1, 1]} : vector<16x64xf32> to vector<1x64xf32>
    %457 = vector.shape_cast %456 : vector<1x64xf32> to vector<64xf32>
    %458 = vector.shape_cast %457 : vector<64xf32> to vector<1x64xf32>
    %c0_181 = arith.constant 0 : index
    %c0_182 = arith.constant 0 : index
    %459 = vector.load %arg14[%c0_181, %c0_182] : memref<64x5xf32, #tpu.memory_space<vmem>>, vector<64x5xf32>
    %cst_183 = arith.constant dense<0.000000e+00> : vector<1x5xf32>
    %460 = tpu.matmul %458, %459, %cst_183 {dimension_numbers = #tpu.dot_dimension_numbers<[1], [0], [0], [1], [0, 0, 1, 1], [], []>} : vector<1x64xf32>, vector<64x5xf32>, vector<1x5xf32> -> vector<1x5xf32>
    %c0_184 = arith.constant 0 : index
    %c0_185 = arith.constant 0 : index
    %461 = vector.load %arg15[%c0_184, %c0_185] : memref<1x5xf32, #tpu.memory_space<vmem>>, vector<1x5xf32>
    %462 = arith.addf %460, %461 : vector<1x5xf32>
    %c0_186 = arith.constant 0 : index
    %c0_187 = arith.constant 0 : index
    %c0_188 = arith.constant 0 : index
    %463 = vector.load %arg16[%c0_186, %c0_187, %c0_188] : memref<1x1x5xf32, #tpu.memory_space<vmem>>, vector<1x1x5xf32>
    %464 = vector.shape_cast %463 : vector<1x1x5xf32> to vector<1x5xf32>
    %465 = vector.shape_cast %462 : vector<1x5xf32> to vector<1x1x5xf32>
    tpu.vector_store %arg16[%c0_186, %c0_187, %c0_188], %465 {strides = array<i32>} : memref<1x1x5xf32, #tpu.memory_space<vmem>>, vector<1x1x5xf32>,
    return
  }
  func.func @transform_0(%arg0: i32) -> (i32, i32, i32) {
    %c0_i32 = arith.constant 0 : i32
    %c0_i32_0 = arith.constant 0 : i32
    %c0_i32_1 = arith.constant 0 : i32
    return %arg0, %c0_i32, %c0_i32_0 : i32, i32, i32
  }
  func.func @transform_1(%arg0: i32) -> (i32, i32) {
    %c0_i32 = arith.constant 0 : i32
    %c0_i32_0 = arith.constant 0 : i32
    %c0_i32_1 = arith.constant 0 : i32
    return %c0_i32, %c0_i32_0 : i32, i32
  }
  func.func @transform_2(%arg0: i32) -> (i32, i32, i32) {
    %c0_i32 = arith.constant 0 : i32
    %c0_i32_0 = arith.constant 0 : i32
    %c0_i32_1 = arith.constant 0 : i32
    %c0_i32_2 = arith.constant 0 : i32
    return %c0_i32, %c0_i32_0, %c0_i32_1 : i32, i32, i32
  }
  func.func @transform_3(%arg0: i32) -> (i32, i32, i32) {
    %c0_i32 = arith.constant 0 : i32
    %c0_i32_0 = arith.constant 0 : i32
    %c0_i32_1 = arith.constant 0 : i32
    %c0_i32_2 = arith.constant 0 : i32
    return %c0_i32, %c0_i32_0, %c0_i32_1 : i32, i32, i32
  }
  func.func @transform_4(%arg0: i32) -> (i32, i32, i32) {
    %c0_i32 = arith.constant 0 : i32
    %c0_i32_0 = arith.constant 0 : i32
    %c0_i32_1 = arith.constant 0 : i32
    %c0_i32_2 = arith.constant 0 : i32
    return %c0_i32, %c0_i32_0, %c0_i32_1 : i32, i32, i32
  }
  func.func @transform_5(%arg0: i32) -> (i32, i32) {
    %c0_i32 = arith.constant 0 : i32
    %c0_i32_0 = arith.constant 0 : i32
    %c0_i32_1 = arith.constant 0 : i32
    return %c0_i32, %c0_i32_0 : i32, i32
  }
  func.func @transform_6(%arg0: i32) -> (i32, i32, i32) {
    %c0_i32 = arith.constant 0 : i32
    %c0_i32_0 = arith.constant 0 : i32
    %c0_i32_1 = arith.constant 0 : i32
    %c0_i32_2 = arith.constant 0 : i32
    return %c0_i32, %c0_i32_0, %c0_i32_1 : i32, i32, i32
  }
  func.func @transform_7(%arg0: i32) -> (i32, i32) {
    %c0_i32 = arith.constant 0 : i32
    %c0_i32_0 = arith.constant 0 : i32
    %c0_i32_1 = arith.constant 0 : i32
    return %c0_i32, %c0_i32_0 : i32, i32
  }
  func.func @transform_8(%arg0: i32) -> (i32, i32, i32) {
    %c0_i32 = arith.constant 0 : i32
    %c0_i32_0 = arith.constant 0 : i32
    %c0_i32_1 = arith.constant 0 : i32
    %c0_i32_2 = arith.constant 0 : i32
    return %c0_i32, %c0_i32_0, %c0_i32_1 : i32, i32, i32
  }
  func.func @transform_9(%arg0: i32) -> (i32, i32, i32) {
    %c0_i32 = arith.constant 0 : i32
    %c0_i32_0 = arith.constant 0 : i32
    %c0_i32_1 = arith.constant 0 : i32
    %c0_i32_2 = arith.constant 0 : i32
    return %c0_i32, %c0_i32_0, %c0_i32_1 : i32, i32, i32
  }
  func.func @transform_10(%arg0: i32) -> (i32, i32, i32) {
    %c0_i32 = arith.constant 0 : i32
    %c0_i32_0 = arith.constant 0 : i32
    %c0_i32_1 = arith.constant 0 : i32
    %c0_i32_2 = arith.constant 0 : i32
    return %c0_i32, %c0_i32_0, %c0_i32_1 : i32, i32, i32
  }
  func.func @transform_11(%arg0: i32) -> (i32, i32) {
    %c0_i32 = arith.constant 0 : i32
    %c0_i32_0 = arith.constant 0 : i32
    %c0_i32_1 = arith.constant 0 : i32
    return %c0_i32, %c0_i32_0 : i32, i32
  }
  func.func @transform_12(%arg0: i32) -> (i32, i32, i32) {
    %c0_i32 = arith.constant 0 : i32
    %c0_i32_0 = arith.constant 0 : i32
    %c0_i32_1 = arith.constant 0 : i32
    %c0_i32_2 = arith.constant 0 : i32
    return %c0_i32, %c0_i32_0, %c0_i32_1 : i32, i32, i32
  }
  func.func @transform_13(%arg0: i32) -> (i32, i32) {
    %c0_i32 = arith.constant 0 : i32
    %c0_i32_0 = arith.constant 0 : i32
    %c0_i32_1 = arith.constant 0 : i32
    return %c0_i32, %c0_i32_0 : i32, i32
  }
  func.func @transform_14(%arg0: i32) -> (i32, i32) {
    %c0_i32 = arith.constant 0 : i32
    %c0_i32_0 = arith.constant 0 : i32
    %c0_i32_1 = arith.constant 0 : i32
    return %c0_i32, %c0_i32_0 : i32, i32
  }
  func.func @transform_15(%arg0: i32) -> (i32, i32, i32) {
    %c0_i32 = arith.constant 0 : i32
    %c0_i32_0 = arith.constant 0 : i32
    %c0_i32_1 = arith.constant 0 : i32
    return %arg0, %c0_i32, %c0_i32_0 : i32, i32, i32
  }
}

</mosaic_0001>

<llo_original>
// kernel: tpu_custom_call.1
$region0: #{tpu_custom_call.1}
  #allocation0 [shape = 'u32[]', space=smem, size = 0x4, offset = 0x4, fixed_abs, tag = 'smem constant byte address 0x4 - core index']
  #allocation1 [shape = 'u32[144,128]{1,0:T(1,128)}', space=vmem, size = 0x12000, scoped, tag = 'internal scratch']
  #allocation2 [shape = 'f32[31,64]{1,0:T(8,128)}', space=vmem, size = 0x4000, scoped, tag = 'scratch operand']
  #allocation3 [shape = 'f32[16,64]{1,0:T(8,128)}', space=vmem, size = 0x2000, scoped, tag = 'scratch operand']
  #allocation4 [shape = 'f32[16,64]{1,0:T(8,128)}', space=vmem, size = 0x2000, scoped, tag = 'scratch operand']
  #allocation5 [shape = 'f32[16,32]{1,0:T(8,128)}', space=vmem, size = 0x2000, scoped, tag = 'scratch operand']
  #allocation6 [shape = 'f32[16,32]{1,0:T(8,128)}', space=vmem, size = 0x2000, scoped, tag = 'scratch operand']
  #allocation7 [shape = 'f32[16,64]{1,0:T(8,128)}', space=vmem, size = 0x2000, scoped, tag = 'scratch operand']
  %s0 = inlined_call_operand.vmem [shape: f32[2,16,2], index: 0, kind: input, shape index: {}]
  %s1 = inlined_call_operand.vmem [shape: f32[2,2], index: 1, kind: input, shape index: {}]
  %s2 = inlined_call_operand.vmem [shape: f32[2,2,64], index: 2, kind: input, shape index: {}]
  %s3 = inlined_call_operand.vmem [shape: f32[2,2,64], index: 3, kind: input, shape index: {}]
  %s4 = inlined_call_operand.vmem [shape: f32[2,16,64], index: 4, kind: input, shape index: {}]
  %s5 = inlined_call_operand.vmem [shape: f32[2,64], index: 5, kind: input, shape index: {}]
  %s6 = inlined_call_operand.vmem [shape: f32[2,64,64], index: 6, kind: input, shape index: {}]
  %s7 = inlined_call_operand.vmem [shape: f32[2,64], index: 7, kind: input, shape index: {}]
  %s8 = inlined_call_operand.vmem [shape: f32[2,64,32], index: 8, kind: input, shape index: {}]
  %s9 = inlined_call_operand.vmem [shape: f32[2,64,32], index: 9, kind: input, shape index: {}]
  %s10 = inlined_call_operand.vmem [shape: f32[2,32,64], index: 10, kind: input, shape index: {}]
  %s11 = inlined_call_operand.vmem [shape: f32[2,64], index: 11, kind: input, shape index: {}]
  %s12 = inlined_call_operand.vmem [shape: f32[2,64,2], index: 12, kind: input, shape index: {}]
  %s13 = inlined_call_operand.vmem [shape: f32[64,5], index: 13, kind: input, shape index: {}]
  %s14 = inlined_call_operand.vmem [shape: f32[1,5], index: 14, kind: input, shape index: {}]
  %s15 = inlined_call_operand.hbm [shape: f32[2,1,5], index: 15, kind: output, shape index: {}]
  %s16 = sld [smem:[#allocation0]]
  $region107: #{tpu_custom_call.1} parent=0
    _
  %s18 = ssub.s32 1, %s16
  %s19 = scalar_select 0, %s18, %s16
  $region1: #{tpu_custom_call.1} parent=0
    #allocation8 [shape = 'u8[1024]{0}', space=vmem, size = 0x400, scoped, tag = 'output window, operand 0']
    #allocation9 [shape = 's32[2]{0}', space=sflag, size = 0x8, scoped, tag = 'scoped memory for tpu_custom_call.1']
    %20 = vsyncpa [#allocation9], 0
    %s21 = scalar_lea.sflag [#allocation9], 1
    %22 = vsyncpa %s21, 0
    loop: start=0, step=1, limit=4
    $region2: #{tpu_custom_call.1} parent=1 // loop_pre_header
      _
    $region3: #{tpu_custom_call.1} parent=1 // loop_header
      %s24 = sphi 0, %s28
      %p25 = scmp.ge.s32.totalorder %s24, 4
      %s34 = sphi 0, %s36
      %s37 = sphi 0, %s34
      %s38 = sphi 0, %s37
      %s54 = sphi 0, %s38
      %s58 = sphi 0, %s58
      %s60 = sphi 0, %s58
      %s61 = sphi 0, %s60
      %s75 = sphi 0, %s61
      %s79 = sphi 0, %s79
      %s81 = sphi 0, %s79
      %s82 = sphi 0, %s81
      %s96 = sphi 0, %s82
      %s100 = sphi 0, %s100
      %s102 = sphi 0, %s100
      %s103 = sphi 0, %s102
      %s117 = sphi 0, %s103
      %s121 = sphi 0, %s121
      %s123 = sphi 0, %s121
      %s124 = sphi 0, %s123
      %s138 = sphi 0, %s124
      %s142 = sphi 0, %s142
      %s144 = sphi 0, %s142
      %s145 = sphi 0, %s144
      %s159 = sphi 0, %s145
      %s163 = sphi 0, %s163
      %s165 = sphi 0, %s163
      %s166 = sphi 0, %s165
      %s180 = sphi 0, %s166
      %s184 = sphi 0, %s184
      %s186 = sphi 0, %s184
      %s187 = sphi 0, %s186
      %s201 = sphi 0, %s187
      %s205 = sphi 0, %s205
      %s207 = sphi 0, %s205
      %s208 = sphi 0, %s207
      %s222 = sphi 0, %s208
      %s226 = sphi 0, %s226
      %s228 = sphi 0, %s226
      %s229 = sphi 0, %s228
      %s243 = sphi 0, %s229
      %s247 = sphi 0, %s247
      %s249 = sphi 0, %s247
      %s250 = sphi 0, %s249
      %s264 = sphi 0, %s250
      %s268 = sphi 0, %s268
      %s270 = sphi 0, %s268
      %s271 = sphi 0, %s270
      %s285 = sphi 0, %s271
      %s289 = sphi 0, %s289
      %s291 = sphi 0, %s289
      %s292 = sphi 0, %s291
      %s306 = sphi 0, %s292
      %s310 = sphi 0, %s310
      %s312 = sphi 0, %s310
      %s313 = sphi 0, %s312
      %s327 = sphi 0, %s313
      %s331 = sphi 0, %s331
      %s333 = sphi 0, %s331
      %s334 = sphi 0, %s333
      %s348 = sphi 0, %s334
      %s354 = sphi 0, %s356
      %s357 = sphi 0, %s354
      %s358 = sphi 0, %s357
      %s374 = sphi 0, %s358
    $region4: #{tpu_custom_call.1} parent=1 // loop_header_branch
      %27 = sbr.rel (%p25) target = $region8
    $region5: #{tpu_custom_call.1} parent=1 // loop_body
      %s29 = ssub.s32 %s24, 1
      %s30 = ssub.s32 %s24, 2
      %s31 = sadd.s32 %s24, 1
      %s32 = ssub.s32 %s24, %s31
      %p33 = scmp.eq.s32.totalorder %s32, 0
      %s35 = sadd.s32 %s34, 1
      %s36 = scalar_select %p33, %s34, %s35
      %p39 = pneg %p33
      %p40 = scmp.eq.s32.totalorder %s24, 1
      %p41 = por %p39, %p40
      %p42 = scmp.ne.s32.totalorder %s34, %s37
      %p43 = scmp.eq.s32.totalorder %s24, 0
      %p44 = por %p42, %p43
      %p45 = scmp.ne.s32.totalorder %s34, %s37
      %p46 = scmp.eq.s32.totalorder %s29, 1
      %p47 = por %p45, %p46
      %p48 = scmp.ne.s32.totalorder %s37, %s38
      %p49 = scmp.eq.s32.totalorder %s29, 0
      %p50 = por %p48, %p49
      %p51 = scmp.ne.s32.totalorder %s37, %s38
      %p52 = scmp.eq.s32.totalorder %s30, 1
      %p53 = por %p51, %p52
      %p55 = scmp.ne.s32.totalorder %s38, %s54
      %p56 = scmp.eq.s32.totalorder %s30, 0
      %p57 = por %p55, %p56
      %s59 = sadd.s32 %s58, 1
      %p62 = scmp.eq.s32.totalorder %s24, 1
      %p63 = scmp.ne.s32.totalorder %s58, %s60
      %p64 = scmp.eq.s32.totalorder %s24, 0
      %p65 = por %p63, %p64
      %p66 = scmp.ne.s32.totalorder %s58, %s60
      %p67 = scmp.eq.s32.totalorder %s29, 1
      %p68 = por %p66, %p67
      %p69 = scmp.ne.s32.totalorder %s60, %s61
      %p70 = scmp.eq.s32.totalorder %s29, 0
      %p71 = por %p69, %p70
      %p72 = scmp.ne.s32.totalorder %s60, %s61
      %p73 = scmp.eq.s32.totalorder %s30, 1
      %p74 = por %p72, %p73
      %p76 = scmp.ne.s32.totalorder %s61, %s75
      %p77 = scmp.eq.s32.totalorder %s30, 0
      %p78 = por %p76, %p77
      %s80 = sadd.s32 %s79, 1
      %p83 = scmp.eq.s32.totalorder %s24, 1
      %p84 = scmp.ne.s32.totalorder %s79, %s81
      %p85 = scmp.eq.s32.totalorder %s24, 0
      %p86 = por %p84, %p85
      %p87 = scmp.ne.s32.totalorder %s79, %s81
      %p88 = scmp.eq.s32.totalorder %s29, 1
      %p89 = por %p87, %p88
      %p90 = scmp.ne.s32.totalorder %s81, %s82
      %p91 = scmp.eq.s32.totalorder %s29, 0
      %p92 = por %p90, %p91
      %p93 = scmp.ne.s32.totalorder %s81, %s82
      %p94 = scmp.eq.s32.totalorder %s30, 1
      %p95 = por %p93, %p94
      %p97 = scmp.ne.s32.totalorder %s82, %s96
      %p98 = scmp.eq.s32.totalorder %s30, 0
      %p99 = por %p97, %p98
      %s101 = sadd.s32 %s100, 1
      %p104 = scmp.eq.s32.totalorder %s24, 1
      %p105 = scmp.ne.s32.totalorder %s100, %s102
      %p106 = scmp.eq.s32.totalorder %s24, 0
      %p107 = por %p105, %p106
      %p108 = scmp.ne.s32.totalorder %s100, %s102
      %p109 = scmp.eq.s32.totalorder %s29, 1
      %p110 = por %p108, %p109
      %p111 = scmp.ne.s32.totalorder %s102, %s103
      %p112 = scmp.eq.s32.totalorder %s29, 0
      %p113 = por %p111, %p112
      %p114 = scmp.ne.s32.totalorder %s102, %s103
      %p115 = scmp.eq.s32.totalorder %s30, 1
      %p116 = por %p114, %p115
      %p118 = scmp.ne.s32.totalorder %s103, %s117
      %p119 = scmp.eq.s32.totalorder %s30, 0
      %p120 = por %p118, %p119
      %s122 = sadd.s32 %s121, 1
      %p125 = scmp.eq.s32.totalorder %s24, 1
      %p126 = scmp.ne.s32.totalorder %s121, %s123
      %p127 = scmp.eq.s32.totalorder %s24, 0
      %p128 = por %p126, %p127
      %p129 = scmp.ne.s32.totalorder %s121, %s123
      %p130 = scmp.eq.s32.totalorder %s29, 1
      %p131 = por %p129, %p130
      %p132 = scmp.ne.s32.totalorder %s123, %s124
      %p133 = scmp.eq.s32.totalorder %s29, 0
      %p134 = por %p132, %p133
      %p135 = scmp.ne.s32.totalorder %s123, %s124
      %p136 = scmp.eq.s32.totalorder %s30, 1
      %p137 = por %p135, %p136
      %p139 = scmp.ne.s32.totalorder %s124, %s138
      %p140 = scmp.eq.s32.totalorder %s30, 0
      %p141 = por %p139, %p140
      %s143 = sadd.s32 %s142, 1
      %p146 = scmp.eq.s32.totalorder %s24, 1
      %p147 = scmp.ne.s32.totalorder %s142, %s144
      %p148 = scmp.eq.s32.totalorder %s24, 0
      %p149 = por %p147, %p148
      %p150 = scmp.ne.s32.totalorder %s142, %s144
      %p151 = scmp.eq.s32.totalorder %s29, 1
      %p152 = por %p150, %p151
      %p153 = scmp.ne.s32.totalorder %s144, %s145
      %p154 = scmp.eq.s32.totalorder %s29, 0
      %p155 = por %p153, %p154
      %p156 = scmp.ne.s32.totalorder %s144, %s145
      %p157 = scmp.eq.s32.totalorder %s30, 1
      %p158 = por %p156, %p157
      %p160 = scmp.ne.s32.totalorder %s145, %s159
      %p161 = scmp.eq.s32.totalorder %s30, 0
      %p162 = por %p160, %p161
      %s164 = sadd.s32 %s163, 1
      %p167 = scmp.eq.s32.totalorder %s24, 1
      %p168 = scmp.ne.s32.totalorder %s163, %s165
      %p169 = scmp.eq.s32.totalorder %s24, 0
      %p170 = por %p168, %p169
      %p171 = scmp.ne.s32.totalorder %s163, %s165
      %p172 = scmp.eq.s32.totalorder %s29, 1
      %p173 = por %p171, %p172
      %p174 = scmp.ne.s32.totalorder %s165, %s166
      %p175 = scmp.eq.s32.totalorder %s29, 0
      %p176 = por %p174, %p175
      %p177 = scmp.ne.s32.totalorder %s165, %s166
      %p178 = scmp.eq.s32.totalorder %s30, 1
      %p179 = por %p177, %p178
      %p181 = scmp.ne.s32.totalorder %s166, %s180
      %p182 = scmp.eq.s32.totalorder %s30, 0
      %p183 = por %p181, %p182
      %s185 = sadd.s32 %s184, 1
      %p188 = scmp.eq.s32.totalorder %s24, 1
      %p189 = scmp.ne.s32.totalorder %s184, %s186
      %p190 = scmp.eq.s32.totalorder %s24, 0
      %p191 = por %p189, %p190
      %p192 = scmp.ne.s32.totalorder %s184, %s186
      %p193 = scmp.eq.s32.totalorder %s29, 1
      %p194 = por %p192, %p193
      %p195 = scmp.ne.s32.totalorder %s186, %s187
      %p196 = scmp.eq.s32.totalorder %s29, 0
      %p197 = por %p195, %p196
      %p198 = scmp.ne.s32.totalorder %s186, %s187
      %p199 = scmp.eq.s32.totalorder %s30, 1
      %p200 = por %p198, %p199
      %p202 = scmp.ne.s32.totalorder %s187, %s201
      %p203 = scmp.eq.s32.totalorder %s30, 0
      %p204 = por %p202, %p203
      %s206 = sadd.s32 %s205, 1
      %p209 = scmp.eq.s32.totalorder %s24, 1
      %p210 = scmp.ne.s32.totalorder %s205, %s207
      %p211 = scmp.eq.s32.totalorder %s24, 0
      %p212 = por %p210, %p211
      %p213 = scmp.ne.s32.totalorder %s205, %s207
      %p214 = scmp.eq.s32.totalorder %s29, 1
      %p215 = por %p213, %p214
      %p216 = scmp.ne.s32.totalorder %s207, %s208
      %p217 = scmp.eq.s32.totalorder %s29, 0
      %p218 = por %p216, %p217
      %p219 = scmp.ne.s32.totalorder %s207, %s208
      %p220 = scmp.eq.s32.totalorder %s30, 1
      %p221 = por %p219, %p220
      %p223 = scmp.ne.s32.totalorder %s208, %s222
      %p224 = scmp.eq.s32.totalorder %s30, 0
      %p225 = por %p223, %p224
      %s227 = sadd.s32 %s226, 1
      %p230 = scmp.eq.s32.totalorder %s24, 1
      %p231 = scmp.ne.s32.totalorder %s226, %s228
      %p232 = scmp.eq.s32.totalorder %s24, 0
      %p233 = por %p231, %p232
      %p234 = scmp.ne.s32.totalorder %s226, %s228
      %p235 = scmp.eq.s32.totalorder %s29, 1
      %p236 = por %p234, %p235
      %p237 = scmp.ne.s32.totalorder %s228, %s229
      %p238 = scmp.eq.s32.totalorder %s29, 0
      %p239 = por %p237, %p238
      %p240 = scmp.ne.s32.totalorder %s228, %s229
      %p241 = scmp.eq.s32.totalorder %s30, 1
      %p242 = por %p240, %p241
      %p244 = scmp.ne.s32.totalorder %s229, %s243
      %p245 = scmp.eq.s32.totalorder %s30, 0
      %p246 = por %p244, %p245
      %s248 = sadd.s32 %s247, 1
      %p251 = scmp.eq.s32.totalorder %s24, 1
      %p252 = scmp.ne.s32.totalorder %s247, %s249
      %p253 = scmp.eq.s32.totalorder %s24, 0
      %p254 = por %p252, %p253
      %p255 = scmp.ne.s32.totalorder %s247, %s249
      %p256 = scmp.eq.s32.totalorder %s29, 1
      %p257 = por %p255, %p256
      %p258 = scmp.ne.s32.totalorder %s249, %s250
      %p259 = scmp.eq.s32.totalorder %s29, 0
      %p260 = por %p258, %p259
      %p261 = scmp.ne.s32.totalorder %s249, %s250
      %p262 = scmp.eq.s32.totalorder %s30, 1
      %p263 = por %p261, %p262
      %p265 = scmp.ne.s32.totalorder %s250, %s264
      %p266 = scmp.eq.s32.totalorder %s30, 0
      %p267 = por %p265, %p266
      %s269 = sadd.s32 %s268, 1
      %p272 = scmp.eq.s32.totalorder %s24, 1
      %p273 = scmp.ne.s32.totalorder %s268, %s270
      %p274 = scmp.eq.s32.totalorder %s24, 0
      %p275 = por %p273, %p274
      %p276 = scmp.ne.s32.totalorder %s268, %s270
      %p277 = scmp.eq.s32.totalorder %s29, 1
      %p278 = por %p276, %p277
      %p279 = scmp.ne.s32.totalorder %s270, %s271
      %p280 = scmp.eq.s32.totalorder %s29, 0
      %p281 = por %p279, %p280
      %p282 = scmp.ne.s32.totalorder %s270, %s271
      %p283 = scmp.eq.s32.totalorder %s30, 1
      %p284 = por %p282, %p283
      %p286 = scmp.ne.s32.totalorder %s271, %s285
      %p287 = scmp.eq.s32.totalorder %s30, 0
      %p288 = por %p286, %p287
      %s290 = sadd.s32 %s289, 1
      %p293 = scmp.eq.s32.totalorder %s24, 1
      %p294 = scmp.ne.s32.totalorder %s289, %s291
      %p295 = scmp.eq.s32.totalorder %s24, 0
      %p296 = por %p294, %p295
      %p297 = scmp.ne.s32.totalorder %s289, %s291
      %p298 = scmp.eq.s32.totalorder %s29, 1
      %p299 = por %p297, %p298
      %p300 = scmp.ne.s32.totalorder %s291, %s292
      %p301 = scmp.eq.s32.totalorder %s29, 0
      %p302 = por %p300, %p301
      %p303 = scmp.ne.s32.totalorder %s291, %s292
      %p304 = scmp.eq.s32.totalorder %s30, 1
      %p305 = por %p303, %p304
      %p307 = scmp.ne.s32.totalorder %s292, %s306
      %p308 = scmp.eq.s32.totalorder %s30, 0
      %p309 = por %p307, %p308
      %s311 = sadd.s32 %s310, 1
      %p314 = scmp.eq.s32.totalorder %s24, 1
      %p315 = scmp.ne.s32.totalorder %s310, %s312
      %p316 = scmp.eq.s32.totalorder %s24, 0
      %p317 = por %p315, %p316
      %p318 = scmp.ne.s32.totalorder %s310, %s312
      %p319 = scmp.eq.s32.totalorder %s29, 1
      %p320 = por %p318, %p319
      %p321 = scmp.ne.s32.totalorder %s312, %s313
      %p322 = scmp.eq.s32.totalorder %s29, 0
      %p323 = por %p321, %p322
      %p324 = scmp.ne.s32.totalorder %s312, %s313
      %p325 = scmp.eq.s32.totalorder %s30, 1
      %p326 = por %p324, %p325
      %p328 = scmp.ne.s32.totalorder %s313, %s327
      %p329 = scmp.eq.s32.totalorder %s30, 0
      %p330 = por %p328, %p329
      %s332 = sadd.s32 %s331, 1
      %p335 = scmp.eq.s32.totalorder %s24, 1
      %p336 = scmp.ne.s32.totalorder %s331, %s333
      %p337 = scmp.eq.s32.totalorder %s24, 0
      %p338 = por %p336, %p337
      %p339 = scmp.ne.s32.totalorder %s331, %s333
      %p340 = scmp.eq.s32.totalorder %s29, 1
      %p341 = por %p339, %p340
      %p342 = scmp.ne.s32.totalorder %s333, %s334
      %p343 = scmp.eq.s32.totalorder %s29, 0
      %p344 = por %p342, %p343
      %p345 = scmp.ne.s32.totalorder %s333, %s334
      %p346 = scmp.eq.s32.totalorder %s30, 1
      %p347 = por %p345, %p346
      %p349 = scmp.ne.s32.totalorder %s334, %s348
      %p350 = scmp.eq.s32.totalorder %s30, 0
      %p351 = por %p349, %p350
      %s352 = ssub.s32 %s24, %s31
      %p353 = scmp.eq.s32.totalorder %s352, 0
      %s355 = sadd.s32 %s354, 1
      %s356 = scalar_select %p353, %s354, %s355
      %p359 = pneg %p353
      %p360 = scmp.eq.s32.totalorder %s24, 1
      %p361 = por %p359, %p360
      %p362 = scmp.ne.s32.totalorder %s354, %s357
      %p363 = scmp.eq.s32.totalorder %s24, 0
      %p364 = por %p362, %p363
      %p365 = scmp.ne.s32.totalorder %s354, %s357
      %p366 = scmp.eq.s32.totalorder %s29, 1
      %p367 = por %p365, %p366
      %p368 = scmp.ne.s32.totalorder %s357, %s358
      %p369 = scmp.eq.s32.totalorder %s29, 0
      %p370 = por %p368, %p369
      %p371 = scmp.ne.s32.totalorder %s357, %s358
      %p372 = scmp.eq.s32.totalorder %s30, 1
      %p373 = por %p371, %p372
      %p375 = scmp.ne.s32.totalorder %s358, %s374
      %p376 = scmp.eq.s32.totalorder %s30, 0
      %p377 = por %p375, %p376
      %p378 = scmp.le.s32.totalorder 1, %s24
      %p379 = scmp.lt.s32.totalorder %s24, 3
      %p380 = pnand %p378, %p379
      %p381 = pneg %p380
      // Predicated region
      $region9: #{tpu_custom_call.1} parent=5 // pred_check
        _
      $region10: #{tpu_custom_call.1} parent=5 // pred_check_branch
        %383 = sbr.rel (%p380) target = $region12
      $region11: #{tpu_custom_call.1} parent=5 // pred_region
        %s384 = ssub.s32 %s24, 1
        // Predicated region
        $region13: #{tpu_custom_call.1} parent=11 // pred_check
          %p385 = pneg %p71
        $region14: #{tpu_custom_call.1} parent=11 // pred_check_branch
          %387 = sbr.rel (%p385) target = $region16
        $region15: #{tpu_custom_call.1} parent=11 // pred_region
          _
        $region16: #{tpu_custom_call.1} parent=11 // pred_fallthru
          _
        // Predicated region
        $region17: #{tpu_custom_call.1} parent=11 // pred_check
          %p388 = pneg %p92
        $region18: #{tpu_custom_call.1} parent=11 // pred_check_branch
          %390 = sbr.rel (%p388) target = $region20
        $region19: #{tpu_custom_call.1} parent=11 // pred_region
          _
        $region20: #{tpu_custom_call.1} parent=11 // pred_fallthru
          _
        // Predicated region
        $region21: #{tpu_custom_call.1} parent=11 // pred_check
          %p391 = pneg %p113
        $region22: #{tpu_custom_call.1} parent=11 // pred_check_branch
          %393 = sbr.rel (%p391) target = $region24
        $region23: #{tpu_custom_call.1} parent=11 // pred_region
          _
        $region24: #{tpu_custom_call.1} parent=11 // pred_fallthru
          _
        // Predicated region
        $region25: #{tpu_custom_call.1} parent=11 // pred_check
          %p394 = pneg %p134
        $region26: #{tpu_custom_call.1} parent=11 // pred_check_branch
          %396 = sbr.rel (%p394) target = $region28
        $region27: #{tpu_custom_call.1} parent=11 // pred_region
          _
        $region28: #{tpu_custom_call.1} parent=11 // pred_fallthru
          _
        // Predicated region
        $region29: #{tpu_custom_call.1} parent=11 // pred_check
          %p397 = pneg %p155
        $region30: #{tpu_custom_call.1} parent=11 // pred_check_branch
          %399 = sbr.rel (%p397) target = $region32
        $region31: #{tpu_custom_call.1} parent=11 // pred_region
          _
        $region32: #{tpu_custom_call.1} parent=11 // pred_fallthru
          _
        // Predicated region
        $region33: #{tpu_custom_call.1} parent=11 // pred_check
          %p400 = pneg %p176
        $region34: #{tpu_custom_call.1} parent=11 // pred_check_branch
          %402 = sbr.rel (%p400) target = $region36
        $region35: #{tpu_custom_call.1} parent=11 // pred_region
          _
        $region36: #{tpu_custom_call.1} parent=11 // pred_fallthru
          _
        // Predicated region
        $region37: #{tpu_custom_call.1} parent=11 // pred_check
          %p403 = pneg %p197
        $region38: #{tpu_custom_call.1} parent=11 // pred_check_branch
          %405 = sbr.rel (%p403) target = $region40
        $region39: #{tpu_custom_call.1} parent=11 // pred_region
          _
        $region40: #{tpu_custom_call.1} parent=11 // pred_fallthru
          _
        // Predicated region
        $region41: #{tpu_custom_call.1} parent=11 // pred_check
          %p406 = pneg %p218
        $region42: #{tpu_custom_call.1} parent=11 // pred_check_branch
          %408 = sbr.rel (%p406) target = $region44
        $region43: #{tpu_custom_call.1} parent=11 // pred_region
          _
        $region44: #{tpu_custom_call.1} parent=11 // pred_fallthru
          _
        // Predicated region
        $region45: #{tpu_custom_call.1} parent=11 // pred_check
          %p409 = pneg %p239
        $region46: #{tpu_custom_call.1} parent=11 // pred_check_branch
          %411 = sbr.rel (%p409) target = $region48
        $region47: #{tpu_custom_call.1} parent=11 // pred_region
          _
        $region48: #{tpu_custom_call.1} parent=11 // pred_fallthru
          _
        // Predicated region
        $region49: #{tpu_custom_call.1} parent=11 // pred_check
          %p412 = pneg %p260
        $region50: #{tpu_custom_call.1} parent=11 // pred_check_branch
          %414 = sbr.rel (%p412) target = $region52
        $region51: #{tpu_custom_call.1} parent=11 // pred_region
          _
        $region52: #{tpu_custom_call.1} parent=11 // pred_fallthru
          _
        // Predicated region
        $region53: #{tpu_custom_call.1} parent=11 // pred_check
          %p415 = pneg %p281
        $region54: #{tpu_custom_call.1} parent=11 // pred_check_branch
          %417 = sbr.rel (%p415) target = $region56
        $region55: #{tpu_custom_call.1} parent=11 // pred_region
          _
        $region56: #{tpu_custom_call.1} parent=11 // pred_fallthru
          _
        // Predicated region
        $region57: #{tpu_custom_call.1} parent=11 // pred_check
          %p418 = pneg %p302
        $region58: #{tpu_custom_call.1} parent=11 // pred_check_branch
          %420 = sbr.rel (%p418) target = $region60
        $region59: #{tpu_custom_call.1} parent=11 // pred_region
          _
        $region60: #{tpu_custom_call.1} parent=11 // pred_fallthru
          _
        // Predicated region
        $region61: #{tpu_custom_call.1} parent=11 // pred_check
          %p421 = pneg %p323
        $region62: #{tpu_custom_call.1} parent=11 // pred_check_branch
          %423 = sbr.rel (%p421) target = $region64
        $region63: #{tpu_custom_call.1} parent=11 // pred_region
          _
        $region64: #{tpu_custom_call.1} parent=11 // pred_fallthru
          _
        // Predicated region
        $region65: #{tpu_custom_call.1} parent=11 // pred_check
          %p424 = pneg %p344
        $region66: #{tpu_custom_call.1} parent=11 // pred_check_branch
          %426 = sbr.rel (%p424) target = $region68
        $region67: #{tpu_custom_call.1} parent=11 // pred_region
          _
        $region68: #{tpu_custom_call.1} parent=11 // pred_fallthru
          _
      $region12: #{tpu_custom_call.1} parent=5 // pred_fallthru
        _
      %p427 = scmp.lt.s32.totalorder %s24, 2
      // Predicated region
      $region69: #{tpu_custom_call.1} parent=5 // pred_check
        %p428 = pneg %p427
      $region70: #{tpu_custom_call.1} parent=5 // pred_check_branch
        %430 = sbr.rel (%p428) target = $region72
      $region71: #{tpu_custom_call.1} parent=5 // pred_region
        // Predicated region
        $region73: #{tpu_custom_call.1} parent=71 // pred_check
          %p431 = pneg %p44
        $region74: #{tpu_custom_call.1} parent=71 // pred_check_branch
          %433 = sbr.rel (%p431) target = $region76
        $region75: #{tpu_custom_call.1} parent=71 // pred_region
          %p434 = scmp.lt.s32.totalorder %s24, 1
          %s435 = scalar_select %p434, %s24, 1
          %s436 = smul.addr %s435, 2
          %s437 = smul.addr %s436, 8
          %s438 = scalar_lea.vmem %s0, %s437
        $region76: #{tpu_custom_call.1} parent=71 // pred_fallthru
          _
      $region72: #{tpu_custom_call.1} parent=5 // pred_fallthru
        _
      %p439 = scmp.le.s32.totalorder 1, %s24
      %p440 = scmp.lt.s32.totalorder %s24, 3
      %p441 = pnand %p439, %p440
      %p442 = pneg %p441
      // Predicated region
      $region77: #{tpu_custom_call.1} parent=5 // pred_check
        _
      $region78: #{tpu_custom_call.1} parent=5 // pred_check_branch
        %444 = sbr.rel (%p441) target = $region80
      $region79: #{tpu_custom_call.1} parent=5 // pred_region
        %s445 = ssub.s32 %s24, 1
        %p446 = scmp.lt.s32.totalorder %s29, 1
        %s447 = scalar_select %p446, %s29, 1
        %s448 = smul.addr %s447, 2
        %s449 = smul.addr %s448, 8
        %s450 = scalar_lea.vmem %s0, %s449
        %p451 = pneg %p50
        %p452 = pneg %p47
        %p453 = pneg %p71
        %p454 = pneg %p68
        %p455 = pneg %p92
        %p456 = pneg %p89
        %p457 = pneg %p113
        %p458 = pneg %p110
        %p459 = pneg %p134
        %p460 = pneg %p131
        %p461 = pneg %p155
        %p462 = pneg %p152
        %p463 = pneg %p176
        %p464 = pneg %p173
        %p465 = pneg %p197
        %p466 = pneg %p194
        %p467 = pneg %p218
        %p468 = pneg %p215
        %p469 = pneg %p239
        %p470 = pneg %p236
        %p471 = pneg %p260
        %p472 = pneg %p257
        %p473 = pneg %p281
        %p474 = pneg %p278
        %p475 = pneg %p302
        %p476 = pneg %p299
        %p477 = pneg %p323
        %p478 = pneg %p320
        %p479 = pneg %p344
        %p480 = pneg %p341
        %p481 = pneg %p370
        %p482 = pneg %p367
        %s483 = sand.u32 %s357, 1
        %s484 = scalar_lea.sflag [#allocation9], %s483
        %s485 = sand.u32 %s357, 1
        %s486 = scalar_lea.vmem [#allocation8], %s485
        %p487 = scmp.lt.s32.totalorder %s29, 1
        %s488 = scalar_select %p487, %s29, 1
        %s489 = smul.addr %s488, 2
        %s490 = smul.addr %s489, 8
        %s491 = scalar_lea.vmem %s0, %s490
        %v492 = vld [vmem:[%s491] sm:$0xff]
        %v493 = vld [vmem:[%s491 + $0x8] sm:$0xff]
        %v494 = vmul.f32 %v492, %v492
        %v495 = vmul.f32 %v493, %v493
        %vm496 = vcmask 15360
        %v497 = vsel %vm496, %v494, 0.0
        %498 = vadd.xlane.f32.xlu0 %v497
        %v499 = vpop.xlane.xlu0 %498
        %v500 = vsel %vm496, %v495, 0.0
        %501 = vadd.xlane.f32.xlu0 %v500
        %v502 = vpop.xlane.xlu0 %501
        %v503 = vrcp.pop 2.0
        %v504 = vmul.f32 %v499, %v503
        %v505 = vmul.f32 %v502, %v503
        %v506 = vadd.f32 %v504, 1e-05
        %v507 = vadd.f32 %v505, 1e-05
        %v508 = vrsqrt.pop %v506
        %v509 = vrsqrt.pop %v507
        %v510 = vmul.f32 %v492, %v508
        %v511 = vmul.f32 %v493, %v509
        %v512 = vld [vmem:[%s1] sm:$0x1]
        %v513 = vlaneseq
        %v514 = vshrl.u32 %v513, 7
        %v515 = vsub.s32 0, %v514
        %v516 = vrot.slane %v512, %v515
        %v517 = vmul.f32 %v510, %v516
        %v518 = vmul.f32 %v511, %v516
        %v519 = vld [vmem:[%s2] sm:$0x3]
        %521 = vset.pattern.permute.xlu0 0
        %522 = vperm.xlu0 %521, %v517
        %v523 = vpop.permute.xlu0 %522
        %526 = vset.pattern.permute.xlu0 0
        %527 = vperm.xlu0 %526, %v518
        %v528 = vpop.permute.xlu0 %527
        %v530 = vlaneseq
        %v531 = vshrl.u32 %v530, 7
        %v532 = vsub.s32 0, %v531
        %v533 = vrot.slane %v519, %v532
        %v534 = vmul.f32 %v523, %v533
        %v535 = vmul.f32 %v528, %v533
        %536 = vset.pattern.permute.xlu0 1
        %537 = vperm.xlu0 %536, %v517
        %v538 = vpop.permute.xlu0 %537
        %540 = vset.pattern.permute.xlu0 1
        %541 = vperm.xlu0 %540, %v518
        %v542 = vpop.permute.xlu0 %541
        %v544 = vlaneseq
        %v545 = vshrl.u32 %v544, 7
        %v546 = vsub.s32 1, %v545
        %v547 = vrot.slane %v519, %v546
        %v548 = vmul.f32 %v538, %v547
        %v549 = vmul.f32 %v542, %v547
        %v550 = vadd.f32 %v534, %v548
        %v551 = vadd.f32 %v535, %v549
        %v552 = vld [vmem:[%s3] sm:$0x3]
        %v553 = vlaneseq
        %v554 = vshrl.u32 %v553, 7
        %v555 = vsub.s32 0, %v554
        %v556 = vrot.slane %v552, %v555
        %v557 = vmul.f32 %v523, %v556
        %v558 = vmul.f32 %v528, %v556
        %v559 = vlaneseq
        %v560 = vshrl.u32 %v559, 7
        %v561 = vsub.s32 1, %v560
        %v562 = vrot.slane %v552, %v561
        %v563 = vmul.f32 %v538, %v562
        %v564 = vmul.f32 %v542, %v562
        %v565 = vadd.f32 %v557, %v563
        %v566 = vadd.f32 %v558, %v564
        %v567 = vld [vmem:[%s4] sm:$0xff]
        %v568 = vld [vmem:[%s4 + $0x8] sm:$0xff]
        %vm569 = vcmask 523264
        %570 = vst.msk [vmem:[#allocation2] sm:$0xff] %vm569, 0.0
        %vm571 = vcmask 522240
        %572 = vst.msk [vmem:[#allocation2 + $0x8] sm:$0x7f] %vm571, 0.0
        %573 = vst.msk [vmem:[#allocation2 + $0xf] sm:$0xff] %vm569, %v550
        %574 = vst.msk [vmem:[#allocation2 + $0x17] sm:$0xff] %vm569, %v551
        %v575 = vld [vmem:[%s5] sm:$0x1]
        %v576 = vlaneseq
        %v577 = vshrl.u32 %v576, 7
        %v578 = vsub.s32 0, %v577
        %v579 = vrot.slane %v575, %v578
        %v580 = vld [vmem:[#allocation2] sm:$0xff]
        %v581 = vld [vmem:[#allocation2 + $0x8] sm:$0xff]
        %v582 = vlaneseq
        %v583 = vshrl.u32 %v582, 7
        %v584 = vsub.s32 0, %v583
        %v585 = vrot.slane %v567, %v584
        %v586 = vmul.f32 %v580, %v585
        %v587 = vmul.f32 %v581, %v585
        %v588 = vadd.f32 %v579, %v586
        %v589 = vadd.f32 %v579, %v587
        %v590 = vld [vmem:[#allocation2 + $0x1] sm:$0xff]
        %v591 = vld [vmem:[#allocation2 + $0x9] sm:$0xff]
        %v592 = vlaneseq
        %v593 = vshrl.u32 %v592, 7
        %v594 = vsub.s32 1, %v593
        %v595 = vrot.slane %v567, %v594
        %v596 = vmul.f32 %v590, %v595
        %v597 = vmul.f32 %v591, %v595
        %v598 = vadd.f32 %v588, %v596
        %v599 = vadd.f32 %v589, %v597
        %v600 = vld [vmem:[#allocation2 + $0x2] sm:$0xff]
        %v601 = vld [vmem:[#allocation2 + $0xa] sm:$0xff]
        %v602 = vlaneseq
        %v603 = vshrl.u32 %v602, 7
        %v604 = vsub.s32 2, %v603
        %v605 = vrot.slane %v567, %v604
        %v606 = vmul.f32 %v600, %v605
        %v607 = vmul.f32 %v601, %v605
        %v608 = vadd.f32 %v598, %v606
        %v609 = vadd.f32 %v599, %v607
        %v610 = vld [vmem:[#allocation2 + $0x3] sm:$0xff]
        %v611 = vld [vmem:[#allocation2 + $0xb] sm:$0xff]
        %v612 = vlaneseq
        %v613 = vshrl.u32 %v612, 7
        %v614 = vsub.s32 3, %v613
        %v615 = vrot.slane %v567, %v614
        %v616 = vmul.f32 %v610, %v615
        %v617 = vmul.f32 %v611, %v615
        %v618 = vadd.f32 %v608, %v616
        %v619 = vadd.f32 %v609, %v617
        %v620 = vld [vmem:[#allocation2 + $0x4] sm:$0xff]
        %v621 = vld [vmem:[#allocation2 + $0xc] sm:$0xff]
        %v622 = vlaneseq
        %v623 = vshrl.u32 %v622, 7
        %v624 = vsub.s32 4, %v623
        %v625 = vrot.slane %v567, %v624
        %v626 = vmul.f32 %v620, %v625
        %v627 = vmul.f32 %v621, %v625
        %v628 = vadd.f32 %v618, %v626
        %v629 = vadd.f32 %v619, %v627
        %v630 = vld [vmem:[#allocation2 + $0x5] sm:$0xff]
        %v631 = vld [vmem:[#allocation2 + $0xd] sm:$0xff]
        %v632 = vlaneseq
        %v633 = vshrl.u32 %v632, 7
        %v634 = vsub.s32 5, %v633
        %v635 = vrot.slane %v567, %v634
        %v636 = vmul.f32 %v630, %v635
        %v637 = vmul.f32 %v631, %v635
        %v638 = vadd.f32 %v628, %v636
        %v639 = vadd.f32 %v629, %v637
        %v640 = vld [vmem:[#allocation2 + $0x6] sm:$0xff]
        %v641 = vld [vmem:[#allocation2 + $0xe] sm:$0xff]
        %v642 = vlaneseq
        %v643 = vshrl.u32 %v642, 7
        %v644 = vsub.s32 6, %v643
        %v645 = vrot.slane %v567, %v644
        %v646 = vmul.f32 %v640, %v645
        %v647 = vmul.f32 %v641, %v645
        %v648 = vadd.f32 %v638, %v646
        %v649 = vadd.f32 %v639, %v647
        %v650 = vld [vmem:[#allocation2 + $0x7] sm:$0xff]
        %v651 = vld [vmem:[#allocation2 + $0xf] sm:$0xff]
        %v652 = vlaneseq
        %v653 = vshrl.u32 %v652, 7
        %v654 = vsub.s32 7, %v653
        %v655 = vrot.slane %v567, %v654
        %v656 = vmul.f32 %v650, %v655
        %v657 = vmul.f32 %v651, %v655
        %v658 = vadd.f32 %v648, %v656
        %v659 = vadd.f32 %v649, %v657
        %v660 = vld [vmem:[#allocation2 + $0x10] sm:$0xff]
        %v661 = vlaneseq
        %v662 = vshrl.u32 %v661, 7
        %v663 = vsub.s32 0, %v662
        %v664 = vrot.slane %v568, %v663
        %v665 = vmul.f32 %v581, %v664
        %v666 = vmul.f32 %v660, %v664
        %v667 = vadd.f32 %v658, %v665
        %v668 = vadd.f32 %v659, %v666
        %v669 = vld [vmem:[#allocation2 + $0x11] sm:$0xff]
        %v670 = vlaneseq
        %v671 = vshrl.u32 %v670, 7
        %v672 = vsub.s32 1, %v671
        %v673 = vrot.slane %v568, %v672
        %v674 = vmul.f32 %v591, %v673
        %v675 = vmul.f32 %v669, %v673
        %v676 = vadd.f32 %v667, %v674
        %v677 = vadd.f32 %v668, %v675
        %v678 = vld [vmem:[#allocation2 + $0x12] sm:$0xff]
        %v679 = vlaneseq
        %v680 = vshrl.u32 %v679, 7
        %v681 = vsub.s32 2, %v680
        %v682 = vrot.slane %v568, %v681
        %v683 = vmul.f32 %v601, %v682
        %v684 = vmul.f32 %v678, %v682
        %v685 = vadd.f32 %v676, %v683
        %v686 = vadd.f32 %v677, %v684
        %v687 = vld [vmem:[#allocation2 + $0x13] sm:$0xff]
        %v688 = vlaneseq
        %v689 = vshrl.u32 %v688, 7
        %v690 = vsub.s32 3, %v689
        %v691 = vrot.slane %v568, %v690
        %v692 = vmul.f32 %v611, %v691
        %v693 = vmul.f32 %v687, %v691
        %v694 = vadd.f32 %v685, %v692
        %v695 = vadd.f32 %v686, %v693
        %v696 = vld [vmem:[#allocation2 + $0x14] sm:$0xff]
        %v697 = vlaneseq
        %v698 = vshrl.u32 %v697, 7
        %v699 = vsub.s32 4, %v698
        %v700 = vrot.slane %v568, %v699
        %v701 = vmul.f32 %v621, %v700
        %v702 = vmul.f32 %v696, %v700
        %v703 = vadd.f32 %v694, %v701
        %v704 = vadd.f32 %v695, %v702
        %v705 = vld [vmem:[#allocation2 + $0x15] sm:$0xff]
        %v706 = vlaneseq
        %v707 = vshrl.u32 %v706, 7
        %v708 = vsub.s32 5, %v707
        %v709 = vrot.slane %v568, %v708
        %v710 = vmul.f32 %v631, %v709
        %v711 = vmul.f32 %v705, %v709
        %v712 = vadd.f32 %v703, %v710
        %v713 = vadd.f32 %v704, %v711
        %v714 = vld [vmem:[#allocation2 + $0x16] sm:$0xff]
        %v715 = vlaneseq
        %v716 = vshrl.u32 %v715, 7
        %v717 = vsub.s32 6, %v716
        %v718 = vrot.slane %v568, %v717
        %v719 = vmul.f32 %v641, %v718
        %v720 = vmul.f32 %v714, %v718
        %v721 = vadd.f32 %v712, %v719
        %v722 = vadd.f32 %v713, %v720
        %v723 = vld [vmem:[#allocation2 + $0x17] sm:$0xff]
        %v724 = vlaneseq
        %v725 = vshrl.u32 %v724, 7
        %v726 = vsub.s32 7, %v725
        %v727 = vrot.slane %v568, %v726
        %v728 = vmul.f32 %v651, %v727
        %v729 = vmul.f32 %v723, %v727
        %v730 = vadd.f32 %v721, %v728
        %v731 = vadd.f32 %v722, %v729
        %v732 = vmax.f32 %v730, -30.0
        %v733 = vmax.f32 %v731, -30.0
        %v734 = vsub.f32 0.0, %v732
        %v735 = vsub.f32 0.0, %v733
        %v736 = vmul.f32 %v734, 1.442695
        %v737 = vpow.pop %v736
        %v738 = vmul.f32 %v735, 1.442695
        %v739 = vpow.pop %v738
        %v740 = vadd.f32 %v737, 1.0
        %v741 = vadd.f32 %v739, 1.0
        %v742 = vrcp.pop %v740
        %v743 = vrcp.pop %v741
        %v744 = vmul.f32 %v730, %v742
        %v745 = vmul.f32 %v731, %v743
        %v746 = vld [vmem:[%s6] sm:$0xff]
        %v747 = vld [vmem:[%s6 + $0x8] sm:$0xff]
        %v748 = vld [vmem:[%s6 + $0x10] sm:$0xff]
        %v749 = vld [vmem:[%s6 + $0x18] sm:$0xff]
        %v750 = vld [vmem:[%s6 + $0x20] sm:$0xff]
        %v751 = vld [vmem:[%s6 + $0x28] sm:$0xff]
        %v752 = vld [vmem:[%s6 + $0x30] sm:$0xff]
        %v753 = vld [vmem:[%s6 + $0x38] sm:$0xff]
        %v754 = vld [vmem:[%s7] sm:$0x1]
        %v755 = vlaneseq
        %v756 = vshrl.u32 %v755, 7
        %v757 = vsub.s32 0, %v756
        %v758 = vrot.slane %v754, %v757
        %v760 = vsel %vm569, %v744, 0
        %v763 = vsel %vm569, %v745, 0
        %765 = vmatprep.subr.mxu0 0.0
        %766 = vmatpush1.msra.mxu0 0.0
        %767 = vmatprep.subr.mxu0 0.0
        %768 = vmatpush1.msra.mxu0 0.0
        %769 = vmatprep.subr.mxu0 0.0
        %770 = vmatpush1.msra.mxu0 0.0
        %771 = vmatprep.subr.mxu0 0.0
        %772 = vmatpush1.msra.mxu0 0.0
        %773 = vmatprep.subr.mxu0 0.0
        %774 = vmatpush1.msra.mxu0 0.0
        %775 = vmatprep.subr.mxu0 0.0
        %776 = vmatpush1.msra.mxu0 0.0
        %777 = vmatprep.subr.mxu0 0.0
        %778 = vmatpush1.msra.mxu0 0.0
        %779 = vmatprep.subr.mxu0 0.0
        %780 = vmatpush1.msra.mxu0 0.0
        %781 = vmatprep.subr.mxu0 0.0
        %782 = vmatpush1.msra.mxu0 %v753
        %783 = vmatprep.subr.mxu0 0.0
        %784 = vmatpush1.msra.mxu0 %v752
        %785 = vmatprep.subr.mxu0 0.0
        %786 = vmatpush1.msra.mxu0 %v751
        %787 = vmatprep.subr.mxu0 0.0
        %788 = vmatpush1.msra.mxu0 %v750
        %789 = vmatprep.subr.mxu0 0.0
        %790 = vmatpush1.msra.mxu0 %v749
        %791 = vmatprep.subr.mxu0 0.0
        %792 = vmatpush1.msra.mxu0 %v748
        %793 = vmatprep.subr.mxu0 0.0
        %794 = vmatpush1.msra.mxu0 %v747
        %795 = vmatprep.subr.mxu0 0.0
        %796 = vmatpush1.msra.mxu0 %v746
        %797 = vmatprep.subr.mxu0 0.0
        %798 = vmatpush2.msra.mxu0 0.0
        %799 = vmatprep.subr.mxu0 0.0
        %800 = vmatpush2.msra.mxu0 0.0
        %801 = vmatprep.subr.mxu0 0.0
        %802 = vmatpush2.msra.mxu0 0.0
        %803 = vmatprep.subr.mxu0 0.0
        %804 = vmatpush2.msra.mxu0 0.0
        %805 = vmatprep.subr.mxu0 0.0
        %806 = vmatpush2.msra.mxu0 0.0
        %807 = vmatprep.subr.mxu0 0.0
        %808 = vmatpush2.msra.mxu0 0.0
        %809 = vmatprep.subr.mxu0 0.0
        %810 = vmatpush2.msra.mxu0 0.0
        %811 = vmatprep.subr.mxu0 0.0
        %812 = vmatpush2.msra.mxu0 0.0
        %813 = vmatprep.subr.mxu0 0.0
        %814 = vmatpush2.msra.mxu0 0.0
        %815 = vmatprep.subr.mxu0 0.0
        %816 = vmatpush2.msra.mxu0 0.0
        %817 = vmatprep.subr.mxu0 0.0
        %818 = vmatpush2.msra.mxu0 0.0
        %819 = vmatprep.subr.mxu0 0.0
        %820 = vmatpush2.msra.mxu0 0.0
        %821 = vmatprep.subr.mxu0 0.0
        %822 = vmatpush2.msra.mxu0 0.0
        %823 = vmatprep.subr.mxu0 0.0
        %824 = vmatpush2.msra.mxu0 0.0
        %825 = vmatprep.subr.mxu0 0.0
        %826 = vmatpush2.msra.mxu0 0.0
        %827 = vmatprep.subr.mxu0 0.0
        %828 = vmatpush2.msra.mxu0 0.0
        %829 = vmatprep.mubr.f32.mxu0 0.0
        %830 = vmatmul.mubr.f32.gmra.mxu0 %v760
        %v831 = vpop.f32.mrf.mxu0
        %v832 = vadd.f32 %v758, %v831
        %v833 = vpop.f32.mrf.mxu0
        %834 = vmatprep.mubr.f32.mxu0 0.0
        %835 = vmatmul.mubr.f32.gmra.mxu0 %v763
        %v836 = vpop.f32.mrf.mxu0
        %v837 = vadd.f32 %v758, %v836
        %v838 = vpop.f32.mrf.mxu0
        %839 = vdwg.mxu0
        %v840 = vmin.f32 %v832, 20.0
        %v841 = vmin.f32 %v837, 20.0
        %v842 = vmul.f32 %v840, 1.442695
        %v843 = vpow.pop %v842
        %v844 = vmul.f32 %v841, 1.442695
        %v845 = vpow.pop %v844
        %vm846 = vcmp.gt.f32.partialorder %v832, 20.0
        %vm847 = vcmp.gt.f32.partialorder %v837, 20.0
        %v848 = vadd.f32 %v843, 1.0
        %v849 = vadd.f32 %v845, 1.0
        %v850 = vlog2.pop %v848
        %v851 = vmul.f32 %v850, 0.6931472
        %v852 = vlog2.pop %v849
        %v853 = vmul.f32 %v852, 0.6931472
        %v854 = vsel %vm846, %v832, %v851
        %v855 = vsel %vm847, %v837, %v853
        %v856 = vld [vmem:[%s8] sm:$0xff]
        %v857 = vld [vmem:[%s8 + $0x8] sm:$0xff]
        %v858 = vld [vmem:[%s8 + $0x10] sm:$0xff]
        %v859 = vld [vmem:[%s8 + $0x18] sm:$0xff]
        %v860 = vld [vmem:[%s8 + $0x20] sm:$0xff]
        %v861 = vld [vmem:[%s8 + $0x28] sm:$0xff]
        %v862 = vld [vmem:[%s8 + $0x30] sm:$0xff]
        %v863 = vld [vmem:[%s8 + $0x38] sm:$0xff]
        %864 = vmatprep.subr.mxu0 0.0
        %865 = vmatpush1.msra.mxu0 0.0
        %866 = vmatprep.subr.mxu0 0.0
        %867 = vmatpush1.msra.mxu0 0.0
        %868 = vmatprep.subr.mxu0 0.0
        %869 = vmatpush1.msra.mxu0 0.0
        %870 = vmatprep.subr.mxu0 0.0
        %871 = vmatpush1.msra.mxu0 0.0
        %872 = vmatprep.subr.mxu0 0.0
        %873 = vmatpush1.msra.mxu0 0.0
        %874 = vmatprep.subr.mxu0 0.0
        %875 = vmatpush1.msra.mxu0 0.0
        %876 = vmatprep.subr.mxu0 0.0
        %877 = vmatpush1.msra.mxu0 0.0
        %878 = vmatprep.subr.mxu0 0.0
        %879 = vmatpush1.msra.mxu0 0.0
        %880 = vmatprep.subr.mxu0 0.0
        %881 = vmatpush1.msra.mxu0 %v863
        %882 = vmatprep.subr.mxu0 0.0
        %883 = vmatpush1.msra.mxu0 %v862
        %884 = vmatprep.subr.mxu0 0.0
        %885 = vmatpush1.msra.mxu0 %v861
        %886 = vmatprep.subr.mxu0 0.0
        %887 = vmatpush1.msra.mxu0 %v860
        %888 = vmatprep.subr.mxu0 0.0
        %889 = vmatpush1.msra.mxu0 %v859
        %890 = vmatprep.subr.mxu0 0.0
        %891 = vmatpush1.msra.mxu0 %v858
        %892 = vmatprep.subr.mxu0 0.0
        %893 = vmatpush1.msra.mxu0 %v857
        %894 = vmatprep.subr.mxu0 0.0
        %895 = vmatpush1.msra.mxu0 %v856
        %896 = vmatprep.subr.mxu0 0.0
        %897 = vmatpush2.msra.mxu0 0.0
        %898 = vmatprep.subr.mxu0 0.0
        %899 = vmatpush2.msra.mxu0 0.0
        %900 = vmatprep.subr.mxu0 0.0
        %901 = vmatpush2.msra.mxu0 0.0
        %902 = vmatprep.subr.mxu0 0.0
        %903 = vmatpush2.msra.mxu0 0.0
        %904 = vmatprep.subr.mxu0 0.0
        %905 = vmatpush2.msra.mxu0 0.0
        %906 = vmatprep.subr.mxu0 0.0
        %907 = vmatpush2.msra.mxu0 0.0
        %908 = vmatprep.subr.mxu0 0.0
        %909 = vmatpush2.msra.mxu0 0.0
        %910 = vmatprep.subr.mxu0 0.0
        %911 = vmatpush2.msra.mxu0 0.0
        %912 = vmatprep.subr.mxu0 0.0
        %913 = vmatpush2.msra.mxu0 0.0
        %914 = vmatprep.subr.mxu0 0.0
        %915 = vmatpush2.msra.mxu0 0.0
        %916 = vmatprep.subr.mxu0 0.0
        %917 = vmatpush2.msra.mxu0 0.0
        %918 = vmatprep.subr.mxu0 0.0
        %919 = vmatpush2.msra.mxu0 0.0
        %920 = vmatprep.subr.mxu0 0.0
        %921 = vmatpush2.msra.mxu0 0.0
        %922 = vmatprep.subr.mxu0 0.0
        %923 = vmatpush2.msra.mxu0 0.0
        %924 = vmatprep.subr.mxu0 0.0
        %925 = vmatpush2.msra.mxu0 0.0
        %926 = vmatprep.subr.mxu0 0.0
        %927 = vmatpush2.msra.mxu0 0.0
        %928 = vmatprep.mubr.f32.mxu0 0.0
        %929 = vmatmul.mubr.f32.gmra.mxu0 %v760
        %v930 = vpop.f32.mrf.mxu0
        %v931 = vadd.f32 0.0, %v930
        %v932 = vpop.f32.mrf.mxu0
        %933 = vmatprep.mubr.f32.mxu0 0.0
        %934 = vmatmul.mubr.f32.gmra.mxu0 %v763
        %v935 = vpop.f32.mrf.mxu0
        %v936 = vadd.f32 0.0, %v935
        %v937 = vpop.f32.mrf.mxu0
        %938 = vdwg.mxu0
        %v939 = vld [vmem:[%s9] sm:$0xff]
        %v940 = vld [vmem:[%s9 + $0x8] sm:$0xff]
        %v941 = vld [vmem:[%s9 + $0x10] sm:$0xff]
        %v942 = vld [vmem:[%s9 + $0x18] sm:$0xff]
        %v943 = vld [vmem:[%s9 + $0x20] sm:$0xff]
        %v944 = vld [vmem:[%s9 + $0x28] sm:$0xff]
        %v945 = vld [vmem:[%s9 + $0x30] sm:$0xff]
        %v946 = vld [vmem:[%s9 + $0x38] sm:$0xff]
        %947 = vmatprep.subr.mxu0 0.0
        %948 = vmatpush1.msra.mxu0 0.0
        %949 = vmatprep.subr.mxu0 0.0
        %950 = vmatpush1.msra.mxu0 0.0
        %951 = vmatprep.subr.mxu0 0.0
        %952 = vmatpush1.msra.mxu0 0.0
        %953 = vmatprep.subr.mxu0 0.0
        %954 = vmatpush1.msra.mxu0 0.0
        %955 = vmatprep.subr.mxu0 0.0
        %956 = vmatpush1.msra.mxu0 0.0
        %957 = vmatprep.subr.mxu0 0.0
        %958 = vmatpush1.msra.mxu0 0.0
        %959 = vmatprep.subr.mxu0 0.0
        %960 = vmatpush1.msra.mxu0 0.0
        %961 = vmatprep.subr.mxu0 0.0
        %962 = vmatpush1.msra.mxu0 0.0
        %963 = vmatprep.subr.mxu0 0.0
        %964 = vmatpush1.msra.mxu0 %v946
        %965 = vmatprep.subr.mxu0 0.0
        %966 = vmatpush1.msra.mxu0 %v945
        %967 = vmatprep.subr.mxu0 0.0
        %968 = vmatpush1.msra.mxu0 %v944
        %969 = vmatprep.subr.mxu0 0.0
        %970 = vmatpush1.msra.mxu0 %v943
        %971 = vmatprep.subr.mxu0 0.0
        %972 = vmatpush1.msra.mxu0 %v942
        %973 = vmatprep.subr.mxu0 0.0
        %974 = vmatpush1.msra.mxu0 %v941
        %975 = vmatprep.subr.mxu0 0.0
        %976 = vmatpush1.msra.mxu0 %v940
        %977 = vmatprep.subr.mxu0 0.0
        %978 = vmatpush1.msra.mxu0 %v939
        %979 = vmatprep.subr.mxu0 0.0
        %980 = vmatpush2.msra.mxu0 0.0
        %981 = vmatprep.subr.mxu0 0.0
        %982 = vmatpush2.msra.mxu0 0.0
        %983 = vmatprep.subr.mxu0 0.0
        %984 = vmatpush2.msra.mxu0 0.0
        %985 = vmatprep.subr.mxu0 0.0
        %986 = vmatpush2.msra.mxu0 0.0
        %987 = vmatprep.subr.mxu0 0.0
        %988 = vmatpush2.msra.mxu0 0.0
        %989 = vmatprep.subr.mxu0 0.0
        %990 = vmatpush2.msra.mxu0 0.0
        %991 = vmatprep.subr.mxu0 0.0
        %992 = vmatpush2.msra.mxu0 0.0
        %993 = vmatprep.subr.mxu0 0.0
        %994 = vmatpush2.msra.mxu0 0.0
        %995 = vmatprep.subr.mxu0 0.0
        %996 = vmatpush2.msra.mxu0 0.0
        %997 = vmatprep.subr.mxu0 0.0
        %998 = vmatpush2.msra.mxu0 0.0
        %999 = vmatprep.subr.mxu0 0.0
        %1000 = vmatpush2.msra.mxu0 0.0
        %1001 = vmatprep.subr.mxu0 0.0
        %1002 = vmatpush2.msra.mxu0 0.0
        %1003 = vmatprep.subr.mxu0 0.0
        %1004 = vmatpush2.msra.mxu0 0.0
        %1005 = vmatprep.subr.mxu0 0.0
        %1006 = vmatpush2.msra.mxu0 0.0
        %1007 = vmatprep.subr.mxu0 0.0
        %1008 = vmatpush2.msra.mxu0 0.0
        %1009 = vmatprep.subr.mxu0 0.0
        %1010 = vmatpush2.msra.mxu0 0.0
        %1011 = vmatprep.mubr.f32.mxu0 0.0
        %1012 = vmatmul.mubr.f32.gmra.mxu0 %v760
        %v1013 = vpop.f32.mrf.mxu0
        %v1014 = vadd.f32 0.0, %v1013
        %v1015 = vpop.f32.mrf.mxu0
        %1016 = vmatprep.mubr.f32.mxu0 0.0
        %1017 = vmatmul.mubr.f32.gmra.mxu0 %v763
        %v1018 = vpop.f32.mrf.mxu0
        %v1019 = vadd.f32 0.0, %v1018
        %v1020 = vpop.f32.mrf.mxu0
        %1021 = vdwg.mxu0
        %1022 = vst.msk [vmem:[#allocation3] sm:$0xff] %vm569, %v854
        %1023 = vst.msk [vmem:[#allocation3 + $0x8] sm:$0xff] %vm569, %v855
        %v1024 = vmul.f32 %v854, %v744
        %v1025 = vmul.f32 %v855, %v745
        %1026 = vst.msk [vmem:[#allocation4] sm:$0xff] %vm569, %v1024
        %1027 = vst.msk [vmem:[#allocation4 + $0x8] sm:$0xff] %vm569, %v1025
        %vm1028 = vcmask 261120
        %1029 = vst.msk [vmem:[#allocation5] sm:$0xff] %vm1028, %v931
        %1030 = vst.msk [vmem:[#allocation5 + $0x8] sm:$0xff] %vm1028, %v936
        %1031 = vst.msk [vmem:[#allocation6] sm:$0xff] %vm1028, %v1014
        %1032 = vst.msk [vmem:[#allocation6 + $0x8] sm:$0xff] %vm1028, %v1019
        %v1033 = vld [vmem:[%s10] sm:$0xff]
        %v1034 = vld [vmem:[%s10 + $0x8] sm:$0xff]
        %v1035 = vld [vmem:[%s10 + $0x10] sm:$0xff]
        %v1036 = vld [vmem:[%s10 + $0x18] sm:$0xff]
        %v1037 = vmul.f32 %v1033, 1.442695
        %v1038 = vpow.pop %v1037
        %v1039 = vmul.f32 %v1034, 1.442695
        %v1040 = vpow.pop %v1039
        %v1041 = vmul.f32 %v1035, 1.442695
        %v1042 = vpow.pop %v1041
        %v1043 = vmul.f32 %v1036, 1.442695
        %v1044 = vpow.pop %v1043
        %v1045 = vsub.f32 0.0, %v1038
        %v1046 = vsub.f32 0.0, %v1040
        %v1047 = vsub.f32 0.0, %v1042
        %v1048 = vsub.f32 0.0, %v1044
        loop: start=0, step=1, limit=2
        $region81: #{tpu_custom_call.1} parent=79 // loop_pre_header
          _
        $region82: #{tpu_custom_call.1} parent=79 // loop_header
          %s1050 = sphi 0, %s1054
          %p1051 = scmp.ge.s32.totalorder %s1050, 2
          %v1055 = vphi 0.0, %v1751
          %v1056 = vphi 0.0, %v1752
          %v1057 = vphi 0.0, %v1753
          %v1058 = vphi 0.0, %v1754
        $region83: #{tpu_custom_call.1} parent=79 // loop_header_branch
          %1053 = sbr.rel (%p1051) target = $region87
        $region84: #{tpu_custom_call.1} parent=79 // loop_body
          %s1059 = smul.u32 %s1050, 8
          %s1060 = scalar_lea.vmem [#allocation3], %s1059
          %v1061 = vld [vmem:[%s1060] sm:$0xff]
          %s1062 = scalar_lea.vmem [#allocation4], %s1059
          %v1063 = vld [vmem:[%s1062] sm:$0xff]
          %s1064 = scalar_lea.vmem [#allocation5], %s1059
          %v1065 = vld [vmem:[%s1064] sm:$0xff]
          %1066 = vxpose.xlu0.b32.start [1/16] %v1065, 128
          %1067 = vxpose.xlu0.b32.cont [2/16] 0.0, 128
          %1068 = vxpose.xlu0.b32.cont [3/16] 0.0, 128
          %1069 = vxpose.xlu0.b32.cont [4/16] 0.0, 128
          %1070 = vxpose.xlu0.b32.cont [5/16] 0.0, 128
          %1071 = vxpose.xlu0.b32.cont [6/16] 0.0, 128
          %1072 = vxpose.xlu0.b32.cont [7/16] 0.0, 128
          %1073 = vxpose.xlu0.b32.cont [8/16] 0.0, 128
          %1074 = vxpose.xlu0.b32.cont [9/16] 0.0, 128
          %1075 = vxpose.xlu0.b32.cont [10/16] 0.0, 128
          %1076 = vxpose.xlu0.b32.cont [11/16] 0.0, 128
          %1077 = vxpose.xlu0.b32.cont [12/16] 0.0, 128
          %1078 = vxpose.xlu0.b32.cont [13/16] 0.0, 128
          %1079 = vxpose.xlu0.b32.cont [14/16] 0.0, 128
          %1080 = vxpose.xlu0.b32.cont [15/16] 0.0, 128
          %1081 = vxpose.xlu0.b32.end [16/16] 0.0, 128
          %v1082 = vpop.trf.xlu0
          %v1083 = vpop.trf.xlu0
          %v1084 = vpop.trf.xlu0
          %v1085 = vpop.trf.xlu0
          %v1086 = vpop.trf.xlu0
          %v1087 = vpop.trf.xlu0
          %v1088 = vpop.trf.xlu0
          %v1089 = vpop.trf.xlu0
          %v1090 = vpop.trf.xlu0
          %v1091 = vpop.trf.xlu0
          %v1092 = vpop.trf.xlu0
          %v1093 = vpop.trf.xlu0
          %v1094 = vpop.trf.xlu0
          %v1095 = vpop.trf.xlu0
          %v1096 = vpop.trf.xlu0
          %v1097 = vpop.trf.xlu0
          %s1098 = scalar_lea.vmem [#allocation6], %s1059
          %v1099 = vld [vmem:[%s1098] sm:$0xff]
          %1100 = vxpose.xlu0.b32.start [1/16] %v1099, 128
          %1101 = vxpose.xlu0.b32.cont [2/16] 0.0, 128
          %1102 = vxpose.xlu0.b32.cont [3/16] 0.0, 128
          %1103 = vxpose.xlu0.b32.cont [4/16] 0.0, 128
          %1104 = vxpose.xlu0.b32.cont [5/16] 0.0, 128
          %1105 = vxpose.xlu0.b32.cont [6/16] 0.0, 128
          %1106 = vxpose.xlu0.b32.cont [7/16] 0.0, 128
          %1107 = vxpose.xlu0.b32.cont [8/16] 0.0, 128
          %1108 = vxpose.xlu0.b32.cont [9/16] 0.0, 128
          %1109 = vxpose.xlu0.b32.cont [10/16] 0.0, 128
          %1110 = vxpose.xlu0.b32.cont [11/16] 0.0, 128
          %1111 = vxpose.xlu0.b32.cont [12/16] 0.0, 128
          %1112 = vxpose.xlu0.b32.cont [13/16] 0.0, 128
          %1113 = vxpose.xlu0.b32.cont [14/16] 0.0, 128
          %1114 = vxpose.xlu0.b32.cont [15/16] 0.0, 128
          %1115 = vxpose.xlu0.b32.end [16/16] 0.0, 128
          %v1116 = vpop.trf.xlu0
          %v1117 = vpop.trf.xlu0
          %v1118 = vpop.trf.xlu0
          %v1119 = vpop.trf.xlu0
          %v1120 = vpop.trf.xlu0
          %v1121 = vpop.trf.xlu0
          %v1122 = vpop.trf.xlu0
          %v1123 = vpop.trf.xlu0
          %v1124 = vpop.trf.xlu0
          %v1125 = vpop.trf.xlu0
          %v1126 = vpop.trf.xlu0
          %v1127 = vpop.trf.xlu0
          %v1128 = vpop.trf.xlu0
          %v1129 = vpop.trf.xlu0
          %v1130 = vpop.trf.xlu0
          %v1131 = vpop.trf.xlu0
          %v1132 = vlaneseq
          %v1133 = vshrl.u32 %v1132, 7
          %v1134 = vsub.s32 0, %v1133
          %v1135 = vrot.slane %v1061, %v1134
          %v1136 = vmul.f32 %v1135, %v1045
          %v1137 = vmul.f32 %v1135, %v1046
          %v1138 = vmul.f32 %v1135, %v1047
          %v1139 = vmul.f32 %v1135, %v1048
          %v1140 = vmul.f32 %v1136, 1.442695
          %v1141 = vpow.pop %v1140
          %v1142 = vmul.f32 %v1137, 1.442695
          %v1143 = vpow.pop %v1142
          %v1144 = vmul.f32 %v1138, 1.442695
          %v1145 = vpow.pop %v1144
          %v1146 = vmul.f32 %v1139, 1.442695
          %v1147 = vpow.pop %v1146
          %v1148 = vmul.f32 %v1141, %v1055
          %v1149 = vmul.f32 %v1143, %v1056
          %v1150 = vmul.f32 %v1145, %v1057
          %v1151 = vmul.f32 %v1147, %v1058
          %1153 = vset.pattern.permute.xlu0 0
          %1154 = vperm.xlu0 %1153, %v1082
          %v1155 = vpop.permute.xlu0 %1154
          %1158 = vset.pattern.permute.xlu0 0
          %1159 = vperm.xlu0 %1158, %v1083
          %v1160 = vpop.permute.xlu0 %1159
          %1163 = vset.pattern.permute.xlu0 0
          %1164 = vperm.xlu0 %1163, %v1084
          %v1165 = vpop.permute.xlu0 %1164
          %1168 = vset.pattern.permute.xlu0 0
          %1169 = vperm.xlu0 %1168, %v1085
          %v1170 = vpop.permute.xlu0 %1169
          %v1172 = vlaneseq
          %v1173 = vshrl.u32 %v1172, 7
          %v1174 = vsub.s32 0, %v1173
          %v1175 = vrot.slane %v1063, %v1174
          %v1176 = vmul.f32 %v1155, %v1175
          %v1177 = vmul.f32 %v1160, %v1175
          %v1178 = vmul.f32 %v1165, %v1175
          %v1179 = vmul.f32 %v1170, %v1175
          %v1180 = vadd.f32 %v1148, %v1176
          %v1181 = vadd.f32 %v1149, %v1177
          %v1182 = vadd.f32 %v1150, %v1178
          %v1183 = vadd.f32 %v1151, %v1179
          %1185 = vset.pattern.permute.xlu0 0
          %1186 = vperm.xlu0 %1185, %v1116
          %v1187 = vpop.permute.xlu0 %1186
          %1190 = vset.pattern.permute.xlu0 0
          %1191 = vperm.xlu0 %1190, %v1117
          %v1192 = vpop.permute.xlu0 %1191
          %1195 = vset.pattern.permute.xlu0 0
          %1196 = vperm.xlu0 %1195, %v1118
          %v1197 = vpop.permute.xlu0 %1196
          %1200 = vset.pattern.permute.xlu0 0
          %1201 = vperm.xlu0 %1200, %v1119
          %v1202 = vpop.permute.xlu0 %1201
          %v1204 = vmul.f32 %v1180, %v1187
          %v1205 = vmul.f32 %v1181, %v1192
          %v1206 = vmul.f32 %v1182, %v1197
          %v1207 = vmul.f32 %v1183, %v1202
          %v1208 = vsel %vm569, %v1204, 0.0
          %v1209 = vsel %vm569, %v1205, 0.0
          %v1210 = vadd.f32 %v1208, %v1209
          %v1211 = vsel %vm569, %v1206, 0.0
          %v1212 = vadd.f32 %v1210, %v1211
          %v1213 = vsel %vm569, %v1207, 0.0
          %v1214 = vadd.f32 %v1212, %v1213
          %v1215 = vrot.slane %v1214, 4
          %v1216 = vadd.f32 %v1214, %v1215
          %v1217 = vrot.slane %v1216, 2
          %v1218 = vadd.f32 %v1216, %v1217
          %v1219 = vrot.slane %v1218, 1
          %v1220 = vadd.f32 %v1218, %v1219
          %v1221 = vlaneseq
          %v1222 = vshrl.u32 %v1221, 7
          %v1223 = vsub.s32 1, %v1222
          %v1224 = vrot.slane %v1061, %v1223
          %v1225 = vmul.f32 %v1224, %v1045
          %v1226 = vmul.f32 %v1224, %v1046
          %v1227 = vmul.f32 %v1224, %v1047
          %v1228 = vmul.f32 %v1224, %v1048
          %v1229 = vmul.f32 %v1225, 1.442695
          %v1230 = vpow.pop %v1229
          %v1231 = vmul.f32 %v1226, 1.442695
          %v1232 = vpow.pop %v1231
          %v1233 = vmul.f32 %v1227, 1.442695
          %v1234 = vpow.pop %v1233
          %v1235 = vmul.f32 %v1228, 1.442695
          %v1236 = vpow.pop %v1235
          %v1237 = vmul.f32 %v1230, %v1180
          %v1238 = vmul.f32 %v1232, %v1181
          %v1239 = vmul.f32 %v1234, %v1182
          %v1240 = vmul.f32 %v1236, %v1183
          %1241 = vset.pattern.permute.xlu0 1
          %1242 = vperm.xlu0 %1241, %v1082
          %v1243 = vpop.permute.xlu0 %1242
          %1245 = vset.pattern.permute.xlu0 1
          %1246 = vperm.xlu0 %1245, %v1083
          %v1247 = vpop.permute.xlu0 %1246
          %1249 = vset.pattern.permute.xlu0 1
          %1250 = vperm.xlu0 %1249, %v1084
          %v1251 = vpop.permute.xlu0 %1250
          %1253 = vset.pattern.permute.xlu0 1
          %1254 = vperm.xlu0 %1253, %v1085
          %v1255 = vpop.permute.xlu0 %1254
          %v1257 = vlaneseq
          %v1258 = vshrl.u32 %v1257, 7
          %v1259 = vsub.s32 1, %v1258
          %v1260 = vrot.slane %v1063, %v1259
          %v1261 = vmul.f32 %v1243, %v1260
          %v1262 = vmul.f32 %v1247, %v1260
          %v1263 = vmul.f32 %v1251, %v1260
          %v1264 = vmul.f32 %v1255, %v1260
          %v1265 = vadd.f32 %v1237, %v1261
          %v1266 = vadd.f32 %v1238, %v1262
          %v1267 = vadd.f32 %v1239, %v1263
          %v1268 = vadd.f32 %v1240, %v1264
          %1269 = vset.pattern.permute.xlu0 1
          %1270 = vperm.xlu0 %1269, %v1116
          %v1271 = vpop.permute.xlu0 %1270
          %1273 = vset.pattern.permute.xlu0 1
          %1274 = vperm.xlu0 %1273, %v1117
          %v1275 = vpop.permute.xlu0 %1274
          %1277 = vset.pattern.permute.xlu0 1
          %1278 = vperm.xlu0 %1277, %v1118
          %v1279 = vpop.permute.xlu0 %1278
          %1281 = vset.pattern.permute.xlu0 1
          %1282 = vperm.xlu0 %1281, %v1119
          %v1283 = vpop.permute.xlu0 %1282
          %v1285 = vmul.f32 %v1265, %v1271
          %v1286 = vmul.f32 %v1266, %v1275
          %v1287 = vmul.f32 %v1267, %v1279
          %v1288 = vmul.f32 %v1268, %v1283
          %v1289 = vsel %vm569, %v1285, 0.0
          %v1290 = vsel %vm569, %v1286, 0.0
          %v1291 = vadd.f32 %v1289, %v1290
          %v1292 = vsel %vm569, %v1287, 0.0
          %v1293 = vadd.f32 %v1291, %v1292
          %v1294 = vsel %vm569, %v1288, 0.0
          %v1295 = vadd.f32 %v1293, %v1294
          %v1296 = vrot.slane %v1295, 4
          %v1297 = vadd.f32 %v1295, %v1296
          %v1298 = vrot.slane %v1297, 2
          %v1299 = vadd.f32 %v1297, %v1298
          %v1300 = vrot.slane %v1299, 1
          %v1301 = vadd.f32 %v1299, %v1300
          %v1302 = vlaneseq
          %v1303 = vshrl.u32 %v1302, 7
          %v1304 = vsub.s32 2, %v1303
          %v1305 = vrot.slane %v1061, %v1304
          %v1306 = vmul.f32 %v1305, %v1045
          %v1307 = vmul.f32 %v1305, %v1046
          %v1308 = vmul.f32 %v1305, %v1047
          %v1309 = vmul.f32 %v1305, %v1048
          %v1310 = vmul.f32 %v1306, 1.442695
          %v1311 = vpow.pop %v1310
          %v1312 = vmul.f32 %v1307, 1.442695
          %v1313 = vpow.pop %v1312
          %v1314 = vmul.f32 %v1308, 1.442695
          %v1315 = vpow.pop %v1314
          %v1316 = vmul.f32 %v1309, 1.442695
          %v1317 = vpow.pop %v1316
          %v1318 = vmul.f32 %v1311, %v1265
          %v1319 = vmul.f32 %v1313, %v1266
          %v1320 = vmul.f32 %v1315, %v1267
          %v1321 = vmul.f32 %v1317, %v1268
          %1322 = vset.pattern.permute.xlu0 2
          %1323 = vperm.xlu0 %1322, %v1082
          %v1324 = vpop.permute.xlu0 %1323
          %1326 = vset.pattern.permute.xlu0 2
          %1327 = vperm.xlu0 %1326, %v1083
          %v1328 = vpop.permute.xlu0 %1327
          %1330 = vset.pattern.permute.xlu0 2
          %1331 = vperm.xlu0 %1330, %v1084
          %v1332 = vpop.permute.xlu0 %1331
          %1334 = vset.pattern.permute.xlu0 2
          %1335 = vperm.xlu0 %1334, %v1085
          %v1336 = vpop.permute.xlu0 %1335
          %v1338 = vlaneseq
          %v1339 = vshrl.u32 %v1338, 7
          %v1340 = vsub.s32 2, %v1339
          %v1341 = vrot.slane %v1063, %v1340
          %v1342 = vmul.f32 %v1324, %v1341
          %v1343 = vmul.f32 %v1328, %v1341
          %v1344 = vmul.f32 %v1332, %v1341
          %v1345 = vmul.f32 %v1336, %v1341
          %v1346 = vadd.f32 %v1318, %v1342
          %v1347 = vadd.f32 %v1319, %v1343
          %v1348 = vadd.f32 %v1320, %v1344
          %v1349 = vadd.f32 %v1321, %v1345
          %1350 = vset.pattern.permute.xlu0 2
          %1351 = vperm.xlu0 %1350, %v1116
          %v1352 = vpop.permute.xlu0 %1351
          %1354 = vset.pattern.permute.xlu0 2
          %1355 = vperm.xlu0 %1354, %v1117
          %v1356 = vpop.permute.xlu0 %1355
          %1358 = vset.pattern.permute.xlu0 2
          %1359 = vperm.xlu0 %1358, %v1118
          %v1360 = vpop.permute.xlu0 %1359
          %1362 = vset.pattern.permute.xlu0 2
          %1363 = vperm.xlu0 %1362, %v1119
          %v1364 = vpop.permute.xlu0 %1363
          %v1366 = vmul.f32 %v1346, %v1352
          %v1367 = vmul.f32 %v1347, %v1356
          %v1368 = vmul.f32 %v1348, %v1360
          %v1369 = vmul.f32 %v1349, %v1364
          %v1370 = vsel %vm569, %v1366, 0.0
          %v1371 = vsel %vm569, %v1367, 0.0
          %v1372 = vadd.f32 %v1370, %v1371
          %v1373 = vsel %vm569, %v1368, 0.0
          %v1374 = vadd.f32 %v1372, %v1373
          %v1375 = vsel %vm569, %v1369, 0.0
          %v1376 = vadd.f32 %v1374, %v1375
          %v1377 = vrot.slane %v1376, 4
          %v1378 = vadd.f32 %v1376, %v1377
          %v1379 = vrot.slane %v1378, 2
          %v1380 = vadd.f32 %v1378, %v1379
          %v1381 = vrot.slane %v1380, 1
          %v1382 = vadd.f32 %v1380, %v1381
          %v1383 = vlaneseq
          %v1384 = vshrl.u32 %v1383, 7
          %v1385 = vsub.s32 3, %v1384
          %v1386 = vrot.slane %v1061, %v1385
          %v1387 = vmul.f32 %v1386, %v1045
          %v1388 = vmul.f32 %v1386, %v1046
          %v1389 = vmul.f32 %v1386, %v1047
          %v1390 = vmul.f32 %v1386, %v1048
          %v1391 = vmul.f32 %v1387, 1.442695
          %v1392 = vpow.pop %v1391
          %v1393 = vmul.f32 %v1388, 1.442695
          %v1394 = vpow.pop %v1393
          %v1395 = vmul.f32 %v1389, 1.442695
          %v1396 = vpow.pop %v1395
          %v1397 = vmul.f32 %v1390, 1.442695
          %v1398 = vpow.pop %v1397
          %v1399 = vmul.f32 %v1392, %v1346
          %v1400 = vmul.f32 %v1394, %v1347
          %v1401 = vmul.f32 %v1396, %v1348
          %v1402 = vmul.f32 %v1398, %v1349
          %1403 = vset.pattern.permute.xlu0 3
          %1404 = vperm.xlu0 %1403, %v1082
          %v1405 = vpop.permute.xlu0 %1404
          %1407 = vset.pattern.permute.xlu0 3
          %1408 = vperm.xlu0 %1407, %v1083
          %v1409 = vpop.permute.xlu0 %1408
          %1411 = vset.pattern.permute.xlu0 3
          %1412 = vperm.xlu0 %1411, %v1084
          %v1413 = vpop.permute.xlu0 %1412
          %1415 = vset.pattern.permute.xlu0 3
          %1416 = vperm.xlu0 %1415, %v1085
          %v1417 = vpop.permute.xlu0 %1416
          %v1419 = vlaneseq
          %v1420 = vshrl.u32 %v1419, 7
          %v1421 = vsub.s32 3, %v1420
          %v1422 = vrot.slane %v1063, %v1421
          %v1423 = vmul.f32 %v1405, %v1422
          %v1424 = vmul.f32 %v1409, %v1422
          %v1425 = vmul.f32 %v1413, %v1422
          %v1426 = vmul.f32 %v1417, %v1422
          %v1427 = vadd.f32 %v1399, %v1423
          %v1428 = vadd.f32 %v1400, %v1424
          %v1429 = vadd.f32 %v1401, %v1425
          %v1430 = vadd.f32 %v1402, %v1426
          %1431 = vset.pattern.permute.xlu0 3
          %1432 = vperm.xlu0 %1431, %v1116
          %v1433 = vpop.permute.xlu0 %1432
          %1435 = vset.pattern.permute.xlu0 3
          %1436 = vperm.xlu0 %1435, %v1117
          %v1437 = vpop.permute.xlu0 %1436
          %1439 = vset.pattern.permute.xlu0 3
          %1440 = vperm.xlu0 %1439, %v1118
          %v1441 = vpop.permute.xlu0 %1440
          %1443 = vset.pattern.permute.xlu0 3
          %1444 = vperm.xlu0 %1443, %v1119
          %v1445 = vpop.permute.xlu0 %1444
          %v1447 = vmul.f32 %v1427, %v1433
          %v1448 = vmul.f32 %v1428, %v1437
          %v1449 = vmul.f32 %v1429, %v1441
          %v1450 = vmul.f32 %v1430, %v1445
          %v1451 = vsel %vm569, %v1447, 0.0
          %v1452 = vsel %vm569, %v1448, 0.0
          %v1453 = vadd.f32 %v1451, %v1452
          %v1454 = vsel %vm569, %v1449, 0.0
          %v1455 = vadd.f32 %v1453, %v1454
          %v1456 = vsel %vm569, %v1450, 0.0
          %v1457 = vadd.f32 %v1455, %v1456
          %v1458 = vrot.slane %v1457, 4
          %v1459 = vadd.f32 %v1457, %v1458
          %v1460 = vrot.slane %v1459, 2
          %v1461 = vadd.f32 %v1459, %v1460
          %v1462 = vrot.slane %v1461, 1
          %v1463 = vadd.f32 %v1461, %v1462
          %v1464 = vlaneseq
          %v1465 = vshrl.u32 %v1464, 7
          %v1466 = vsub.s32 4, %v1465
          %v1467 = vrot.slane %v1061, %v1466
          %v1468 = vmul.f32 %v1467, %v1045
          %v1469 = vmul.f32 %v1467, %v1046
          %v1470 = vmul.f32 %v1467, %v1047
          %v1471 = vmul.f32 %v1467, %v1048
          %v1472 = vmul.f32 %v1468, 1.442695
          %v1473 = vpow.pop %v1472
          %v1474 = vmul.f32 %v1469, 1.442695
          %v1475 = vpow.pop %v1474
          %v1476 = vmul.f32 %v1470, 1.442695
          %v1477 = vpow.pop %v1476
          %v1478 = vmul.f32 %v1471, 1.442695
          %v1479 = vpow.pop %v1478
          %v1480 = vmul.f32 %v1473, %v1427
          %v1481 = vmul.f32 %v1475, %v1428
          %v1482 = vmul.f32 %v1477, %v1429
          %v1483 = vmul.f32 %v1479, %v1430
          %1484 = vset.pattern.permute.xlu0 4
          %1485 = vperm.xlu0 %1484, %v1082
          %v1486 = vpop.permute.xlu0 %1485
          %1488 = vset.pattern.permute.xlu0 4
          %1489 = vperm.xlu0 %1488, %v1083
          %v1490 = vpop.permute.xlu0 %1489
          %1492 = vset.pattern.permute.xlu0 4
          %1493 = vperm.xlu0 %1492, %v1084
          %v1494 = vpop.permute.xlu0 %1493
          %1496 = vset.pattern.permute.xlu0 4
          %1497 = vperm.xlu0 %1496, %v1085
          %v1498 = vpop.permute.xlu0 %1497
          %v1500 = vlaneseq
          %v1501 = vshrl.u32 %v1500, 7
          %v1502 = vsub.s32 4, %v1501
          %v1503 = vrot.slane %v1063, %v1502
          %v1504 = vmul.f32 %v1486, %v1503
          %v1505 = vmul.f32 %v1490, %v1503
          %v1506 = vmul.f32 %v1494, %v1503
          %v1507 = vmul.f32 %v1498, %v1503
          %v1508 = vadd.f32 %v1480, %v1504
          %v1509 = vadd.f32 %v1481, %v1505
          %v1510 = vadd.f32 %v1482, %v1506
          %v1511 = vadd.f32 %v1483, %v1507
          %1512 = vset.pattern.permute.xlu0 4
          %1513 = vperm.xlu0 %1512, %v1116
          %v1514 = vpop.permute.xlu0 %1513
          %1516 = vset.pattern.permute.xlu0 4
          %1517 = vperm.xlu0 %1516, %v1117
          %v1518 = vpop.permute.xlu0 %1517
          %1520 = vset.pattern.permute.xlu0 4
          %1521 = vperm.xlu0 %1520, %v1118
          %v1522 = vpop.permute.xlu0 %1521
          %1524 = vset.pattern.permute.xlu0 4
          %1525 = vperm.xlu0 %1524, %v1119
          %v1526 = vpop.permute.xlu0 %1525
          %v1528 = vmul.f32 %v1508, %v1514
          %v1529 = vmul.f32 %v1509, %v1518
          %v1530 = vmul.f32 %v1510, %v1522
          %v1531 = vmul.f32 %v1511, %v1526
          %v1532 = vsel %vm569, %v1528, 0.0
          %v1533 = vsel %vm569, %v1529, 0.0
          %v1534 = vadd.f32 %v1532, %v1533
          %v1535 = vsel %vm569, %v1530, 0.0
          %v1536 = vadd.f32 %v1534, %v1535
          %v1537 = vsel %vm569, %v1531, 0.0
          %v1538 = vadd.f32 %v1536, %v1537
          %v1539 = vrot.slane %v1538, 4
          %v1540 = vadd.f32 %v1538, %v1539
          %v1541 = vrot.slane %v1540, 2
          %v1542 = vadd.f32 %v1540, %v1541
          %v1543 = vrot.slane %v1542, 1
          %v1544 = vadd.f32 %v1542, %v1543
          %v1545 = vlaneseq
          %v1546 = vshrl.u32 %v1545, 7
          %v1547 = vsub.s32 5, %v1546
          %v1548 = vrot.slane %v1061, %v1547
          %v1549 = vmul.f32 %v1548, %v1045
          %v1550 = vmul.f32 %v1548, %v1046
          %v1551 = vmul.f32 %v1548, %v1047
          %v1552 = vmul.f32 %v1548, %v1048
          %v1553 = vmul.f32 %v1549, 1.442695
          %v1554 = vpow.pop %v1553
          %v1555 = vmul.f32 %v1550, 1.442695
          %v1556 = vpow.pop %v1555
          %v1557 = vmul.f32 %v1551, 1.442695
          %v1558 = vpow.pop %v1557
          %v1559 = vmul.f32 %v1552, 1.442695
          %v1560 = vpow.pop %v1559
          %v1561 = vmul.f32 %v1554, %v1508
          %v1562 = vmul.f32 %v1556, %v1509
          %v1563 = vmul.f32 %v1558, %v1510
          %v1564 = vmul.f32 %v1560, %v1511
          %1565 = vset.pattern.permute.xlu0 5
          %1566 = vperm.xlu0 %1565, %v1082
          %v1567 = vpop.permute.xlu0 %1566
          %1569 = vset.pattern.permute.xlu0 5
          %1570 = vperm.xlu0 %1569, %v1083
          %v1571 = vpop.permute.xlu0 %1570
          %1573 = vset.pattern.permute.xlu0 5
          %1574 = vperm.xlu0 %1573, %v1084
          %v1575 = vpop.permute.xlu0 %1574
          %1577 = vset.pattern.permute.xlu0 5
          %1578 = vperm.xlu0 %1577, %v1085
          %v1579 = vpop.permute.xlu0 %1578
          %v1581 = vlaneseq
          %v1582 = vshrl.u32 %v1581, 7
          %v1583 = vsub.s32 5, %v1582
          %v1584 = vrot.slane %v1063, %v1583
          %v1585 = vmul.f32 %v1567, %v1584
          %v1586 = vmul.f32 %v1571, %v1584
          %v1587 = vmul.f32 %v1575, %v1584
          %v1588 = vmul.f32 %v1579, %v1584
          %v1589 = vadd.f32 %v1561, %v1585
          %v1590 = vadd.f32 %v1562, %v1586
          %v1591 = vadd.f32 %v1563, %v1587
          %v1592 = vadd.f32 %v1564, %v1588
          %1593 = vset.pattern.permute.xlu0 5
          %1594 = vperm.xlu0 %1593, %v1116
          %v1595 = vpop.permute.xlu0 %1594
          %1597 = vset.pattern.permute.xlu0 5
          %1598 = vperm.xlu0 %1597, %v1117
          %v1599 = vpop.permute.xlu0 %1598
          %1601 = vset.pattern.permute.xlu0 5
          %1602 = vperm.xlu0 %1601, %v1118
          %v1603 = vpop.permute.xlu0 %1602
          %1605 = vset.pattern.permute.xlu0 5
          %1606 = vperm.xlu0 %1605, %v1119
          %v1607 = vpop.permute.xlu0 %1606
          %v1609 = vmul.f32 %v1589, %v1595
          %v1610 = vmul.f32 %v1590, %v1599
          %v1611 = vmul.f32 %v1591, %v1603
          %v1612 = vmul.f32 %v1592, %v1607
          %v1613 = vsel %vm569, %v1609, 0.0
          %v1614 = vsel %vm569, %v1610, 0.0
          %v1615 = vadd.f32 %v1613, %v1614
          %v1616 = vsel %vm569, %v1611, 0.0
          %v1617 = vadd.f32 %v1615, %v1616
          %v1618 = vsel %vm569, %v1612, 0.0
          %v1619 = vadd.f32 %v1617, %v1618
          %v1620 = vrot.slane %v1619, 4
          %v1621 = vadd.f32 %v1619, %v1620
          %v1622 = vrot.slane %v1621, 2
          %v1623 = vadd.f32 %v1621, %v1622
          %v1624 = vrot.slane %v1623, 1
          %v1625 = vadd.f32 %v1623, %v1624
          %v1626 = vlaneseq
          %v1627 = vshrl.u32 %v1626, 7
          %v1628 = vsub.s32 6, %v1627
          %v1629 = vrot.slane %v1061, %v1628
          %v1630 = vmul.f32 %v1629, %v1045
          %v1631 = vmul.f32 %v1629, %v1046
          %v1632 = vmul.f32 %v1629, %v1047
          %v1633 = vmul.f32 %v1629, %v1048
          %v1634 = vmul.f32 %v1630, 1.442695
          %v1635 = vpow.pop %v1634
          %v1636 = vmul.f32 %v1631, 1.442695
          %v1637 = vpow.pop %v1636
          %v1638 = vmul.f32 %v1632, 1.442695
          %v1639 = vpow.pop %v1638
          %v1640 = vmul.f32 %v1633, 1.442695
          %v1641 = vpow.pop %v1640
          %v1642 = vmul.f32 %v1635, %v1589
          %v1643 = vmul.f32 %v1637, %v1590
          %v1644 = vmul.f32 %v1639, %v1591
          %v1645 = vmul.f32 %v1641, %v1592
          %1646 = vset.pattern.permute.xlu0 6
          %1647 = vperm.xlu0 %1646, %v1082
          %v1648 = vpop.permute.xlu0 %1647
          %1650 = vset.pattern.permute.xlu0 6
          %1651 = vperm.xlu0 %1650, %v1083
          %v1652 = vpop.permute.xlu0 %1651
          %1654 = vset.pattern.permute.xlu0 6
          %1655 = vperm.xlu0 %1654, %v1084
          %v1656 = vpop.permute.xlu0 %1655
          %1658 = vset.pattern.permute.xlu0 6
          %1659 = vperm.xlu0 %1658, %v1085
          %v1660 = vpop.permute.xlu0 %1659
          %v1662 = vlaneseq
          %v1663 = vshrl.u32 %v1662, 7
          %v1664 = vsub.s32 6, %v1663
          %v1665 = vrot.slane %v1063, %v1664
          %v1666 = vmul.f32 %v1648, %v1665
          %v1667 = vmul.f32 %v1652, %v1665
          %v1668 = vmul.f32 %v1656, %v1665
          %v1669 = vmul.f32 %v1660, %v1665
          %v1670 = vadd.f32 %v1642, %v1666
          %v1671 = vadd.f32 %v1643, %v1667
          %v1672 = vadd.f32 %v1644, %v1668
          %v1673 = vadd.f32 %v1645, %v1669
          %1674 = vset.pattern.permute.xlu0 6
          %1675 = vperm.xlu0 %1674, %v1116
          %v1676 = vpop.permute.xlu0 %1675
          %1678 = vset.pattern.permute.xlu0 6
          %1679 = vperm.xlu0 %1678, %v1117
          %v1680 = vpop.permute.xlu0 %1679
          %1682 = vset.pattern.permute.xlu0 6
          %1683 = vperm.xlu0 %1682, %v1118
          %v1684 = vpop.permute.xlu0 %1683
          %1686 = vset.pattern.permute.xlu0 6
          %1687 = vperm.xlu0 %1686, %v1119
          %v1688 = vpop.permute.xlu0 %1687
          %v1690 = vmul.f32 %v1670, %v1676
          %v1691 = vmul.f32 %v1671, %v1680
          %v1692 = vmul.f32 %v1672, %v1684
          %v1693 = vmul.f32 %v1673, %v1688
          %v1694 = vsel %vm569, %v1690, 0.0
          %v1695 = vsel %vm569, %v1691, 0.0
          %v1696 = vadd.f32 %v1694, %v1695
          %v1697 = vsel %vm569, %v1692, 0.0
          %v1698 = vadd.f32 %v1696, %v1697
          %v1699 = vsel %vm569, %v1693, 0.0
          %v1700 = vadd.f32 %v1698, %v1699
          %v1701 = vrot.slane %v1700, 4
          %v1702 = vadd.f32 %v1700, %v1701
          %v1703 = vrot.slane %v1702, 2
          %v1704 = vadd.f32 %v1702, %v1703
          %v1705 = vrot.slane %v1704, 1
          %v1706 = vadd.f32 %v1704, %v1705
          %v1707 = vlaneseq
          %v1708 = vshrl.u32 %v1707, 7
          %v1709 = vsub.s32 7, %v1708
          %v1710 = vrot.slane %v1061, %v1709
          %v1711 = vmul.f32 %v1710, %v1045
          %v1712 = vmul.f32 %v1710, %v1046
          %v1713 = vmul.f32 %v1710, %v1047
          %v1714 = vmul.f32 %v1710, %v1048
          %v1715 = vmul.f32 %v1711, 1.442695
          %v1716 = vpow.pop %v1715
          %v1717 = vmul.f32 %v1712, 1.442695
          %v1718 = vpow.pop %v1717
          %v1719 = vmul.f32 %v1713, 1.442695
          %v1720 = vpow.pop %v1719
          %v1721 = vmul.f32 %v1714, 1.442695
          %v1722 = vpow.pop %v1721
          %v1723 = vmul.f32 %v1716, %v1670
          %v1724 = vmul.f32 %v1718, %v1671
          %v1725 = vmul.f32 %v1720, %v1672
          %v1726 = vmul.f32 %v1722, %v1673
          %1727 = vset.pattern.permute.xlu0 7
          %1728 = vperm.xlu0 %1727, %v1082
          %v1729 = vpop.permute.xlu0 %1728
          %1731 = vset.pattern.permute.xlu0 7
          %1732 = vperm.xlu0 %1731, %v1083
          %v1733 = vpop.permute.xlu0 %1732
          %1735 = vset.pattern.permute.xlu0 7
          %1736 = vperm.xlu0 %1735, %v1084
          %v1737 = vpop.permute.xlu0 %1736
          %1739 = vset.pattern.permute.xlu0 7
          %1740 = vperm.xlu0 %1739, %v1085
          %v1741 = vpop.permute.xlu0 %1740
          %v1743 = vlaneseq
          %v1744 = vshrl.u32 %v1743, 7
          %v1745 = vsub.s32 7, %v1744
          %v1746 = vrot.slane %v1063, %v1745
          %v1747 = vmul.f32 %v1729, %v1746
          %v1748 = vmul.f32 %v1733, %v1746
          %v1749 = vmul.f32 %v1737, %v1746
          %v1750 = vmul.f32 %v1741, %v1746
          %v1751 = vadd.f32 %v1723, %v1747
          %v1752 = vadd.f32 %v1724, %v1748
          %v1753 = vadd.f32 %v1725, %v1749
          %v1754 = vadd.f32 %v1726, %v1750
          %1755 = vset.pattern.permute.xlu0 7
          %1756 = vperm.xlu0 %1755, %v1116
          %v1757 = vpop.permute.xlu0 %1756
          %1759 = vset.pattern.permute.xlu0 7
          %1760 = vperm.xlu0 %1759, %v1117
          %v1761 = vpop.permute.xlu0 %1760
          %1763 = vset.pattern.permute.xlu0 7
          %1764 = vperm.xlu0 %1763, %v1118
          %v1765 = vpop.permute.xlu0 %1764
          %1767 = vset.pattern.permute.xlu0 7
          %1768 = vperm.xlu0 %1767, %v1119
          %v1769 = vpop.permute.xlu0 %1768
          %v1771 = vmul.f32 %v1751, %v1757
          %v1772 = vmul.f32 %v1752, %v1761
          %v1773 = vmul.f32 %v1753, %v1765
          %v1774 = vmul.f32 %v1754, %v1769
          %v1775 = vsel %vm569, %v1771, 0.0
          %v1776 = vsel %vm569, %v1772, 0.0
          %v1777 = vadd.f32 %v1775, %v1776
          %v1778 = vsel %vm569, %v1773, 0.0
          %v1779 = vadd.f32 %v1777, %v1778
          %v1780 = vsel %vm569, %v1774, 0.0
          %v1781 = vadd.f32 %v1779, %v1780
          %v1782 = vrot.slane %v1781, 4
          %v1783 = vadd.f32 %v1781, %v1782
          %v1784 = vrot.slane %v1783, 2
          %v1785 = vadd.f32 %v1783, %v1784
          %v1786 = vrot.slane %v1785, 1
          %v1787 = vadd.f32 %v1785, %v1786
          %vm1788 = vcmask 1040384
          %v1789 = vsel %vm1788, %v1220, %v1301
          %vm1790 = vcmask 1041408
          %v1791 = vsel %vm1790, %v1789, %v1382
          %vm1792 = vcmask 1042432
          %v1793 = vsel %vm1792, %v1791, %v1463
          %vm1794 = vcmask 1043456
          %v1795 = vsel %vm1794, %v1793, %v1544
          %vm1796 = vcmask 1044480
          %v1797 = vsel %vm1796, %v1795, %v1625
          %vm1798 = vcmask 1045504
          %v1799 = vsel %vm1798, %v1797, %v1706
          %vm1800 = vcmask 1046528
          %v1801 = vsel %vm1800, %v1799, %v1787
          %s1802 = scalar_lea.vmem [#allocation7], %s1059
          %1803 = vst.msk [vmem:[%s1802] sm:$0xff] %vm569, %v1801
        $region85: #{tpu_custom_call.1} parent=79 // loop_footer
          %s1054 = sadd.s32 1, %s1050
        $region86: #{tpu_custom_call.1} parent=79 // loop_footer_branch
          %1049 = sbr.rel target = $region82
        $region87: #{tpu_custom_call.1} parent=79 // loop_exit
          _
        %v1804 = vld [vmem:[#allocation7] sm:$0xff]
        %v1805 = vld [vmem:[#allocation7 + $0x8] sm:$0xff]
        %v1806 = vld [vmem:[%s11] sm:$0x1]
        %v1807 = vlaneseq
        %v1808 = vshrl.u32 %v1807, 7
        %v1809 = vsub.s32 0, %v1808
        %v1810 = vrot.slane %v1806, %v1809
        %v1811 = vmul.f32 %v1810, %v744
        %v1812 = vmul.f32 %v1810, %v745
        %v1813 = vadd.f32 %v1804, %v1811
        %v1814 = vadd.f32 %v1805, %v1812
        %v1815 = vmax.f32 %v565, -30.0
        %v1816 = vmax.f32 %v566, -30.0
        %v1817 = vsub.f32 0.0, %v1815
        %v1818 = vsub.f32 0.0, %v1816
        %v1819 = vmul.f32 %v1817, 1.442695
        %v1820 = vpow.pop %v1819
        %v1821 = vmul.f32 %v1818, 1.442695
        %v1822 = vpow.pop %v1821
        %v1823 = vadd.f32 %v1820, 1.0
        %v1824 = vadd.f32 %v1822, 1.0
        %v1825 = vrcp.pop %v1823
        %v1826 = vrcp.pop %v1824
        %v1827 = vmul.f32 %v565, %v1825
        %v1828 = vmul.f32 %v566, %v1826
        %v1829 = vmul.f32 %v1813, %v1827
        %v1830 = vmul.f32 %v1814, %v1828
        %v1831 = vld [vmem:[%s12] sm:$0xff]
        %v1832 = vld [vmem:[%s12 + $0x8] sm:$0xff]
        %v1833 = vld [vmem:[%s12 + $0x10] sm:$0xff]
        %v1834 = vld [vmem:[%s12 + $0x18] sm:$0xff]
        %v1835 = vld [vmem:[%s12 + $0x20] sm:$0xff]
        %v1836 = vld [vmem:[%s12 + $0x28] sm:$0xff]
        %v1837 = vld [vmem:[%s12 + $0x30] sm:$0xff]
        %v1838 = vld [vmem:[%s12 + $0x38] sm:$0xff]
        %v1840 = vsel %vm569, %v1829, 0
        %v1843 = vsel %vm569, %v1830, 0
        %1845 = vmatprep.subr.mxu0 0.0
        %1846 = vmatpush1.msra.mxu0 0.0
        %1847 = vmatprep.subr.mxu0 0.0
        %1848 = vmatpush1.msra.mxu0 0.0
        %1849 = vmatprep.subr.mxu0 0.0
        %1850 = vmatpush1.msra.mxu0 0.0
        %1851 = vmatprep.subr.mxu0 0.0
        %1852 = vmatpush1.msra.mxu0 0.0
        %1853 = vmatprep.subr.mxu0 0.0
        %1854 = vmatpush1.msra.mxu0 0.0
        %1855 = vmatprep.subr.mxu0 0.0
        %1856 = vmatpush1.msra.mxu0 0.0
        %1857 = vmatprep.subr.mxu0 0.0
        %1858 = vmatpush1.msra.mxu0 0.0
        %1859 = vmatprep.subr.mxu0 0.0
        %1860 = vmatpush1.msra.mxu0 0.0
        %1861 = vmatprep.subr.mxu0 0.0
        %1862 = vmatpush1.msra.mxu0 %v1838
        %1863 = vmatprep.subr.mxu0 0.0
        %1864 = vmatpush1.msra.mxu0 %v1837
        %1865 = vmatprep.subr.mxu0 0.0
        %1866 = vmatpush1.msra.mxu0 %v1836
        %1867 = vmatprep.subr.mxu0 0.0
        %1868 = vmatpush1.msra.mxu0 %v1835
        %1869 = vmatprep.subr.mxu0 0.0
        %1870 = vmatpush1.msra.mxu0 %v1834
        %1871 = vmatprep.subr.mxu0 0.0
        %1872 = vmatpush1.msra.mxu0 %v1833
        %1873 = vmatprep.subr.mxu0 0.0
        %1874 = vmatpush1.msra.mxu0 %v1832
        %1875 = vmatprep.subr.mxu0 0.0
        %1876 = vmatpush1.msra.mxu0 %v1831
        %1877 = vmatprep.subr.mxu0 0.0
        %1878 = vmatpush2.msra.mxu0 0.0
        %1879 = vmatprep.subr.mxu0 0.0
        %1880 = vmatpush2.msra.mxu0 0.0
        %1881 = vmatprep.subr.mxu0 0.0
        %1882 = vmatpush2.msra.mxu0 0.0
        %1883 = vmatprep.subr.mxu0 0.0
        %1884 = vmatpush2.msra.mxu0 0.0
        %1885 = vmatprep.subr.mxu0 0.0
        %1886 = vmatpush2.msra.mxu0 0.0
        %1887 = vmatprep.subr.mxu0 0.0
        %1888 = vmatpush2.msra.mxu0 0.0
        %1889 = vmatprep.subr.mxu0 0.0
        %1890 = vmatpush2.msra.mxu0 0.0
        %1891 = vmatprep.subr.mxu0 0.0
        %1892 = vmatpush2.msra.mxu0 0.0
        %1893 = vmatprep.subr.mxu0 0.0
        %1894 = vmatpush2.msra.mxu0 0.0
        %1895 = vmatprep.subr.mxu0 0.0
        %1896 = vmatpush2.msra.mxu0 0.0
        %1897 = vmatprep.subr.mxu0 0.0
        %1898 = vmatpush2.msra.mxu0 0.0
        %1899 = vmatprep.subr.mxu0 0.0
        %1900 = vmatpush2.msra.mxu0 0.0
        %1901 = vmatprep.subr.mxu0 0.0
        %1902 = vmatpush2.msra.mxu0 0.0
        %1903 = vmatprep.subr.mxu0 0.0
        %1904 = vmatpush2.msra.mxu0 0.0
        %1905 = vmatprep.subr.mxu0 0.0
        %1906 = vmatpush2.msra.mxu0 0.0
        %1907 = vmatprep.subr.mxu0 0.0
        %1908 = vmatpush2.msra.mxu0 0.0
        %1909 = vmatprep.mubr.f32.mxu0 0.0
        %1910 = vmatmul.mubr.f32.gmra.mxu0 %v1840
        %v1911 = vpop.f32.mrf.mxu0
        %v1912 = vadd.f32 0.0, %v1911
        %v1913 = vpop.f32.mrf.mxu0
        %1914 = vmatprep.mubr.f32.mxu0 0.0
        %1915 = vmatmul.mubr.f32.gmra.mxu0 %v1843
        %v1916 = vpop.f32.mrf.mxu0
        %v1917 = vadd.f32 0.0, %v1916
        %v1918 = vpop.f32.mrf.mxu0
        %1919 = vdwg.mxu0
        %v1920 = vadd.f32 %v492, %v1912
        %v1921 = vadd.f32 %v493, %v1917
        %v1922 = vmul.f32 %v1920, %v1920
        %v1923 = vmul.f32 %v1921, %v1921
        %v1924 = vsel %vm496, %v1922, 0.0
        %1925 = vadd.xlane.f32.xlu0 %v1924
        %v1926 = vpop.xlane.xlu0 %1925
        %v1927 = vsel %vm496, %v1923, 0.0
        %1928 = vadd.xlane.f32.xlu0 %v1927
        %v1929 = vpop.xlane.xlu0 %1928
        %v1930 = vmul.f32 %v1926, %v503
        %v1931 = vmul.f32 %v1929, %v503
        %v1932 = vadd.f32 %v1930, 1e-05
        %v1933 = vadd.f32 %v1931, 1e-05
        %v1934 = vrsqrt.pop %v1932
        %v1935 = vrsqrt.pop %v1933
        %v1936 = vmul.f32 %v1920, %v1934
        %v1937 = vmul.f32 %v1921, %v1935
        %v1938 = vld [vmem:[%s1 + $0x1] sm:$0x1]
        %v1939 = vlaneseq
        %v1940 = vshrl.u32 %v1939, 7
        %v1941 = vsub.s32 0, %v1940
        %v1942 = vrot.slane %v1938, %v1941
        %v1943 = vmul.f32 %v1936, %v1942
        %v1944 = vmul.f32 %v1937, %v1942
        %s1945 = scalar_lea.vmem %s2, 2
        %v1946 = vld [vmem:[%s1945] sm:$0x3]
        %1948 = vset.pattern.permute.xlu0 0
        %1949 = vperm.xlu0 %1948, %v1943
        %v1950 = vpop.permute.xlu0 %1949
        %1953 = vset.pattern.permute.xlu0 0
        %1954 = vperm.xlu0 %1953, %v1944
        %v1955 = vpop.permute.xlu0 %1954
        %v1957 = vlaneseq
        %v1958 = vshrl.u32 %v1957, 7
        %v1959 = vsub.s32 0, %v1958
        %v1960 = vrot.slane %v1946, %v1959
        %v1961 = vmul.f32 %v1950, %v1960
        %v1962 = vmul.f32 %v1955, %v1960
        %1963 = vset.pattern.permute.xlu0 1
        %1964 = vperm.xlu0 %1963, %v1943
        %v1965 = vpop.permute.xlu0 %1964
        %1967 = vset.pattern.permute.xlu0 1
        %1968 = vperm.xlu0 %1967, %v1944
        %v1969 = vpop.permute.xlu0 %1968
        %v1971 = vlaneseq
        %v1972 = vshrl.u32 %v1971, 7
        %v1973 = vsub.s32 1, %v1972
        %v1974 = vrot.slane %v1946, %v1973
        %v1975 = vmul.f32 %v1965, %v1974
        %v1976 = vmul.f32 %v1969, %v1974
        %v1977 = vadd.f32 %v1961, %v1975
        %v1978 = vadd.f32 %v1962, %v1976
        %s1979 = scalar_lea.vmem %s3, 2
        %v1980 = vld [vmem:[%s1979] sm:$0x3]
        %v1981 = vlaneseq
        %v1982 = vshrl.u32 %v1981, 7
        %v1983 = vsub.s32 0, %v1982
        %v1984 = vrot.slane %v1980, %v1983
        %v1985 = vmul.f32 %v1955, %v1984
        %v1986 = vlaneseq
        %v1987 = vshrl.u32 %v1986, 7
        %v1988 = vsub.s32 1, %v1987
        %v1989 = vrot.slane %v1980, %v1988
        %v1990 = vmul.f32 %v1969, %v1989
        %v1991 = vadd.f32 %v1985, %v1990
        %s1992 = scalar_lea.vmem %s4, 16
        %v1993 = vld [vmem:[%s1992] sm:$0xff]
        %v1994 = vld [vmem:[%s1992 + $0x8] sm:$0xff]
        %1995 = vst.msk [vmem:[#allocation2] sm:$0xff] %vm569, 0.0
        %1996 = vst.msk [vmem:[#allocation2 + $0x8] sm:$0x7f] %vm571, 0.0
        %1997 = vst.msk [vmem:[#allocation2 + $0xf] sm:$0xff] %vm569, %v1977
        %1998 = vst.msk [vmem:[#allocation2 + $0x17] sm:$0xff] %vm569, %v1978
        %v1999 = vld [vmem:[%s5 + $0x1] sm:$0x1]
        %v2000 = vlaneseq
        %v2001 = vshrl.u32 %v2000, 7
        %v2002 = vsub.s32 0, %v2001
        %v2003 = vrot.slane %v1999, %v2002
        %v2004 = vld [vmem:[#allocation2] sm:$0xff]
        %v2005 = vld [vmem:[#allocation2 + $0x8] sm:$0xff]
        %v2006 = vlaneseq
        %v2007 = vshrl.u32 %v2006, 7
        %v2008 = vsub.s32 0, %v2007
        %v2009 = vrot.slane %v1993, %v2008
        %v2010 = vmul.f32 %v2004, %v2009
        %v2011 = vmul.f32 %v2005, %v2009
        %v2012 = vadd.f32 %v2003, %v2010
        %v2013 = vadd.f32 %v2003, %v2011
        %v2014 = vld [vmem:[#allocation2 + $0x1] sm:$0xff]
        %v2015 = vld [vmem:[#allocation2 + $0x9] sm:$0xff]
        %v2016 = vlaneseq
        %v2017 = vshrl.u32 %v2016, 7
        %v2018 = vsub.s32 1, %v2017
        %v2019 = vrot.slane %v1993, %v2018
        %v2020 = vmul.f32 %v2014, %v2019
        %v2021 = vmul.f32 %v2015, %v2019
        %v2022 = vadd.f32 %v2012, %v2020
        %v2023 = vadd.f32 %v2013, %v2021
        %v2024 = vld [vmem:[#allocation2 + $0x2] sm:$0xff]
        %v2025 = vld [vmem:[#allocation2 + $0xa] sm:$0xff]
        %v2026 = vlaneseq
        %v2027 = vshrl.u32 %v2026, 7
        %v2028 = vsub.s32 2, %v2027
        %v2029 = vrot.slane %v1993, %v2028
        %v2030 = vmul.f32 %v2024, %v2029
        %v2031 = vmul.f32 %v2025, %v2029
        %v2032 = vadd.f32 %v2022, %v2030
        %v2033 = vadd.f32 %v2023, %v2031
        %v2034 = vld [vmem:[#allocation2 + $0x3] sm:$0xff]
        %v2035 = vld [vmem:[#allocation2 + $0xb] sm:$0xff]
        %v2036 = vlaneseq
        %v2037 = vshrl.u32 %v2036, 7
        %v2038 = vsub.s32 3, %v2037
        %v2039 = vrot.slane %v1993, %v2038
        %v2040 = vmul.f32 %v2034, %v2039
        %v2041 = vmul.f32 %v2035, %v2039
        %v2042 = vadd.f32 %v2032, %v2040
        %v2043 = vadd.f32 %v2033, %v2041
        %v2044 = vld [vmem:[#allocation2 + $0x4] sm:$0xff]
        %v2045 = vld [vmem:[#allocation2 + $0xc] sm:$0xff]
        %v2046 = vlaneseq
        %v2047 = vshrl.u32 %v2046, 7
        %v2048 = vsub.s32 4, %v2047
        %v2049 = vrot.slane %v1993, %v2048
        %v2050 = vmul.f32 %v2044, %v2049
        %v2051 = vmul.f32 %v2045, %v2049
        %v2052 = vadd.f32 %v2042, %v2050
        %v2053 = vadd.f32 %v2043, %v2051
        %v2054 = vld [vmem:[#allocation2 + $0x5] sm:$0xff]
        %v2055 = vld [vmem:[#allocation2 + $0xd] sm:$0xff]
        %v2056 = vlaneseq
        %v2057 = vshrl.u32 %v2056, 7
        %v2058 = vsub.s32 5, %v2057
        %v2059 = vrot.slane %v1993, %v2058
        %v2060 = vmul.f32 %v2054, %v2059
        %v2061 = vmul.f32 %v2055, %v2059
        %v2062 = vadd.f32 %v2052, %v2060
        %v2063 = vadd.f32 %v2053, %v2061
        %v2064 = vld [vmem:[#allocation2 + $0x6] sm:$0xff]
        %v2065 = vld [vmem:[#allocation2 + $0xe] sm:$0xff]
        %v2066 = vlaneseq
        %v2067 = vshrl.u32 %v2066, 7
        %v2068 = vsub.s32 6, %v2067
        %v2069 = vrot.slane %v1993, %v2068
        %v2070 = vmul.f32 %v2064, %v2069
        %v2071 = vmul.f32 %v2065, %v2069
        %v2072 = vadd.f32 %v2062, %v2070
        %v2073 = vadd.f32 %v2063, %v2071
        %v2074 = vld [vmem:[#allocation2 + $0x7] sm:$0xff]
        %v2075 = vld [vmem:[#allocation2 + $0xf] sm:$0xff]
        %v2076 = vlaneseq
        %v2077 = vshrl.u32 %v2076, 7
        %v2078 = vsub.s32 7, %v2077
        %v2079 = vrot.slane %v1993, %v2078
        %v2080 = vmul.f32 %v2074, %v2079
        %v2081 = vmul.f32 %v2075, %v2079
        %v2082 = vadd.f32 %v2072, %v2080
        %v2083 = vadd.f32 %v2073, %v2081
        %v2084 = vld [vmem:[#allocation2 + $0x10] sm:$0xff]
        %v2085 = vlaneseq
        %v2086 = vshrl.u32 %v2085, 7
        %v2087 = vsub.s32 0, %v2086
        %v2088 = vrot.slane %v1994, %v2087
        %v2089 = vmul.f32 %v2005, %v2088
        %v2090 = vmul.f32 %v2084, %v2088
        %v2091 = vadd.f32 %v2082, %v2089
        %v2092 = vadd.f32 %v2083, %v2090
        %v2093 = vld [vmem:[#allocation2 + $0x11] sm:$0xff]
        %v2094 = vlaneseq
        %v2095 = vshrl.u32 %v2094, 7
        %v2096 = vsub.s32 1, %v2095
        %v2097 = vrot.slane %v1994, %v2096
        %v2098 = vmul.f32 %v2015, %v2097
        %v2099 = vmul.f32 %v2093, %v2097
        %v2100 = vadd.f32 %v2091, %v2098
        %v2101 = vadd.f32 %v2092, %v2099
        %v2102 = vld [vmem:[#allocation2 + $0x12] sm:$0xff]
        %v2103 = vlaneseq
        %v2104 = vshrl.u32 %v2103, 7
        %v2105 = vsub.s32 2, %v2104
        %v2106 = vrot.slane %v1994, %v2105
        %v2107 = vmul.f32 %v2025, %v2106
        %v2108 = vmul.f32 %v2102, %v2106
        %v2109 = vadd.f32 %v2100, %v2107
        %v2110 = vadd.f32 %v2101, %v2108
        %v2111 = vld [vmem:[#allocation2 + $0x13] sm:$0xff]
        %v2112 = vlaneseq
        %v2113 = vshrl.u32 %v2112, 7
        %v2114 = vsub.s32 3, %v2113
        %v2115 = vrot.slane %v1994, %v2114
        %v2116 = vmul.f32 %v2035, %v2115
        %v2117 = vmul.f32 %v2111, %v2115
        %v2118 = vadd.f32 %v2109, %v2116
        %v2119 = vadd.f32 %v2110, %v2117
        %v2120 = vld [vmem:[#allocation2 + $0x14] sm:$0xff]
        %v2121 = vlaneseq
        %v2122 = vshrl.u32 %v2121, 7
        %v2123 = vsub.s32 4, %v2122
        %v2124 = vrot.slane %v1994, %v2123
        %v2125 = vmul.f32 %v2045, %v2124
        %v2126 = vmul.f32 %v2120, %v2124
        %v2127 = vadd.f32 %v2118, %v2125
        %v2128 = vadd.f32 %v2119, %v2126
        %v2129 = vld [vmem:[#allocation2 + $0x15] sm:$0xff]
        %v2130 = vlaneseq
        %v2131 = vshrl.u32 %v2130, 7
        %v2132 = vsub.s32 5, %v2131
        %v2133 = vrot.slane %v1994, %v2132
        %v2134 = vmul.f32 %v2055, %v2133
        %v2135 = vmul.f32 %v2129, %v2133
        %v2136 = vadd.f32 %v2127, %v2134
        %v2137 = vadd.f32 %v2128, %v2135
        %v2138 = vld [vmem:[#allocation2 + $0x16] sm:$0xff]
        %v2139 = vlaneseq
        %v2140 = vshrl.u32 %v2139, 7
        %v2141 = vsub.s32 6, %v2140
        %v2142 = vrot.slane %v1994, %v2141
        %v2143 = vmul.f32 %v2065, %v2142
        %v2144 = vmul.f32 %v2138, %v2142
        %v2145 = vadd.f32 %v2136, %v2143
        %v2146 = vadd.f32 %v2137, %v2144
        %v2147 = vld [vmem:[#allocation2 + $0x17] sm:$0xff]
        %v2148 = vlaneseq
        %v2149 = vshrl.u32 %v2148, 7
        %v2150 = vsub.s32 7, %v2149
        %v2151 = vrot.slane %v1994, %v2150
        %v2152 = vmul.f32 %v2075, %v2151
        %v2153 = vmul.f32 %v2147, %v2151
        %v2154 = vadd.f32 %v2145, %v2152
        %v2155 = vadd.f32 %v2146, %v2153
        %v2156 = vmax.f32 %v2154, -30.0
        %v2157 = vmax.f32 %v2155, -30.0
        %v2158 = vsub.f32 0.0, %v2156
        %v2159 = vsub.f32 0.0, %v2157
        %v2160 = vmul.f32 %v2158, 1.442695
        %v2161 = vpow.pop %v2160
        %v2162 = vmul.f32 %v2159, 1.442695
        %v2163 = vpow.pop %v2162
        %v2164 = vadd.f32 %v2161, 1.0
        %v2165 = vadd.f32 %v2163, 1.0
        %v2166 = vrcp.pop %v2164
        %v2167 = vrcp.pop %v2165
        %v2168 = vmul.f32 %v2154, %v2166
        %v2169 = vmul.f32 %v2155, %v2167
        %s2170 = scalar_lea.vmem %s6, 64
        %v2171 = vld [vmem:[%s2170] sm:$0xff]
        %v2172 = vld [vmem:[%s2170 + $0x8] sm:$0xff]
        %v2173 = vld [vmem:[%s2170 + $0x10] sm:$0xff]
        %v2174 = vld [vmem:[%s2170 + $0x18] sm:$0xff]
        %v2175 = vld [vmem:[%s2170 + $0x20] sm:$0xff]
        %v2176 = vld [vmem:[%s2170 + $0x28] sm:$0xff]
        %v2177 = vld [vmem:[%s2170 + $0x30] sm:$0xff]
        %v2178 = vld [vmem:[%s2170 + $0x38] sm:$0xff]
        %v2179 = vld [vmem:[%s7 + $0x1] sm:$0x1]
        %v2180 = vlaneseq
        %v2181 = vshrl.u32 %v2180, 7
        %v2182 = vsub.s32 0, %v2181
        %v2183 = vrot.slane %v2179, %v2182
        %v2185 = vsel %vm569, %v2168, 0
        %v2188 = vsel %vm569, %v2169, 0
        %2190 = vmatprep.subr.mxu0 0.0
        %2191 = vmatpush1.msra.mxu0 0.0
        %2192 = vmatprep.subr.mxu0 0.0
        %2193 = vmatpush1.msra.mxu0 0.0
        %2194 = vmatprep.subr.mxu0 0.0
        %2195 = vmatpush1.msra.mxu0 0.0
        %2196 = vmatprep.subr.mxu0 0.0
        %2197 = vmatpush1.msra.mxu0 0.0
        %2198 = vmatprep.subr.mxu0 0.0
        %2199 = vmatpush1.msra.mxu0 0.0
        %2200 = vmatprep.subr.mxu0 0.0
        %2201 = vmatpush1.msra.mxu0 0.0
        %2202 = vmatprep.subr.mxu0 0.0
        %2203 = vmatpush1.msra.mxu0 0.0
        %2204 = vmatprep.subr.mxu0 0.0
        %2205 = vmatpush1.msra.mxu0 0.0
        %2206 = vmatprep.subr.mxu0 0.0
        %2207 = vmatpush1.msra.mxu0 %v2178
        %2208 = vmatprep.subr.mxu0 0.0
        %2209 = vmatpush1.msra.mxu0 %v2177
        %2210 = vmatprep.subr.mxu0 0.0
        %2211 = vmatpush1.msra.mxu0 %v2176
        %2212 = vmatprep.subr.mxu0 0.0
        %2213 = vmatpush1.msra.mxu0 %v2175
        %2214 = vmatprep.subr.mxu0 0.0
        %2215 = vmatpush1.msra.mxu0 %v2174
        %2216 = vmatprep.subr.mxu0 0.0
        %2217 = vmatpush1.msra.mxu0 %v2173
        %2218 = vmatprep.subr.mxu0 0.0
        %2219 = vmatpush1.msra.mxu0 %v2172
        %2220 = vmatprep.subr.mxu0 0.0
        %2221 = vmatpush1.msra.mxu0 %v2171
        %2222 = vmatprep.subr.mxu0 0.0
        %2223 = vmatpush2.msra.mxu0 0.0
        %2224 = vmatprep.subr.mxu0 0.0
        %2225 = vmatpush2.msra.mxu0 0.0
        %2226 = vmatprep.subr.mxu0 0.0
        %2227 = vmatpush2.msra.mxu0 0.0
        %2228 = vmatprep.subr.mxu0 0.0
        %2229 = vmatpush2.msra.mxu0 0.0
        %2230 = vmatprep.subr.mxu0 0.0
        %2231 = vmatpush2.msra.mxu0 0.0
        %2232 = vmatprep.subr.mxu0 0.0
        %2233 = vmatpush2.msra.mxu0 0.0
        %2234 = vmatprep.subr.mxu0 0.0
        %2235 = vmatpush2.msra.mxu0 0.0
        %2236 = vmatprep.subr.mxu0 0.0
        %2237 = vmatpush2.msra.mxu0 0.0
        %2238 = vmatprep.subr.mxu0 0.0
        %2239 = vmatpush2.msra.mxu0 0.0
        %2240 = vmatprep.subr.mxu0 0.0
        %2241 = vmatpush2.msra.mxu0 0.0
        %2242 = vmatprep.subr.mxu0 0.0
        %2243 = vmatpush2.msra.mxu0 0.0
        %2244 = vmatprep.subr.mxu0 0.0
        %2245 = vmatpush2.msra.mxu0 0.0
        %2246 = vmatprep.subr.mxu0 0.0
        %2247 = vmatpush2.msra.mxu0 0.0
        %2248 = vmatprep.subr.mxu0 0.0
        %2249 = vmatpush2.msra.mxu0 0.0
        %2250 = vmatprep.subr.mxu0 0.0
        %2251 = vmatpush2.msra.mxu0 0.0
        %2252 = vmatprep.subr.mxu0 0.0
        %2253 = vmatpush2.msra.mxu0 0.0
        %2254 = vmatprep.mubr.f32.mxu0 0.0
        %2255 = vmatmul.mubr.f32.gmra.mxu0 %v2185
        %v2256 = vpop.f32.mrf.mxu0
        %v2257 = vadd.f32 %v2183, %v2256
        %v2258 = vpop.f32.mrf.mxu0
        %2259 = vmatprep.mubr.f32.mxu0 0.0
        %2260 = vmatmul.mubr.f32.gmra.mxu0 %v2188
        %v2261 = vpop.f32.mrf.mxu0
        %v2262 = vadd.f32 %v2183, %v2261
        %v2263 = vpop.f32.mrf.mxu0
        %2264 = vdwg.mxu0
        %v2265 = vmin.f32 %v2257, 20.0
        %v2266 = vmin.f32 %v2262, 20.0
        %v2267 = vmul.f32 %v2265, 1.442695
        %v2268 = vpow.pop %v2267
        %v2269 = vmul.f32 %v2266, 1.442695
        %v2270 = vpow.pop %v2269
        %vm2271 = vcmp.gt.f32.partialorder %v2257, 20.0
        %vm2272 = vcmp.gt.f32.partialorder %v2262, 20.0
        %v2273 = vadd.f32 %v2268, 1.0
        %v2274 = vadd.f32 %v2270, 1.0
        %v2275 = vlog2.pop %v2273
        %v2276 = vmul.f32 %v2275, 0.6931472
        %v2277 = vlog2.pop %v2274
        %v2278 = vmul.f32 %v2277, 0.6931472
        %v2279 = vsel %vm2271, %v2257, %v2276
        %v2280 = vsel %vm2272, %v2262, %v2278
        %s2281 = scalar_lea.vmem %s8, 64
        %v2282 = vld [vmem:[%s2281] sm:$0xff]
        %v2283 = vld [vmem:[%s2281 + $0x8] sm:$0xff]
        %v2284 = vld [vmem:[%s2281 + $0x10] sm:$0xff]
        %v2285 = vld [vmem:[%s2281 + $0x18] sm:$0xff]
        %v2286 = vld [vmem:[%s2281 + $0x20] sm:$0xff]
        %v2287 = vld [vmem:[%s2281 + $0x28] sm:$0xff]
        %v2288 = vld [vmem:[%s2281 + $0x30] sm:$0xff]
        %v2289 = vld [vmem:[%s2281 + $0x38] sm:$0xff]
        %2290 = vmatprep.subr.mxu0 0.0
        %2291 = vmatpush1.msra.mxu0 0.0
        %2292 = vmatprep.subr.mxu0 0.0
        %2293 = vmatpush1.msra.mxu0 0.0
        %2294 = vmatprep.subr.mxu0 0.0
        %2295 = vmatpush1.msra.mxu0 0.0
        %2296 = vmatprep.subr.mxu0 0.0
        %2297 = vmatpush1.msra.mxu0 0.0
        %2298 = vmatprep.subr.mxu0 0.0
        %2299 = vmatpush1.msra.mxu0 0.0
        %2300 = vmatprep.subr.mxu0 0.0
        %2301 = vmatpush1.msra.mxu0 0.0
        %2302 = vmatprep.subr.mxu0 0.0
        %2303 = vmatpush1.msra.mxu0 0.0
        %2304 = vmatprep.subr.mxu0 0.0
        %2305 = vmatpush1.msra.mxu0 0.0
        %2306 = vmatprep.subr.mxu0 0.0
        %2307 = vmatpush1.msra.mxu0 %v2289
        %2308 = vmatprep.subr.mxu0 0.0
        %2309 = vmatpush1.msra.mxu0 %v2288
        %2310 = vmatprep.subr.mxu0 0.0
        %2311 = vmatpush1.msra.mxu0 %v2287
        %2312 = vmatprep.subr.mxu0 0.0
        %2313 = vmatpush1.msra.mxu0 %v2286
        %2314 = vmatprep.subr.mxu0 0.0
        %2315 = vmatpush1.msra.mxu0 %v2285
        %2316 = vmatprep.subr.mxu0 0.0
        %2317 = vmatpush1.msra.mxu0 %v2284
        %2318 = vmatprep.subr.mxu0 0.0
        %2319 = vmatpush1.msra.mxu0 %v2283
        %2320 = vmatprep.subr.mxu0 0.0
        %2321 = vmatpush1.msra.mxu0 %v2282
        %2322 = vmatprep.subr.mxu0 0.0
        %2323 = vmatpush2.msra.mxu0 0.0
        %2324 = vmatprep.subr.mxu0 0.0
        %2325 = vmatpush2.msra.mxu0 0.0
        %2326 = vmatprep.subr.mxu0 0.0
        %2327 = vmatpush2.msra.mxu0 0.0
        %2328 = vmatprep.subr.mxu0 0.0
        %2329 = vmatpush2.msra.mxu0 0.0
        %2330 = vmatprep.subr.mxu0 0.0
        %2331 = vmatpush2.msra.mxu0 0.0
        %2332 = vmatprep.subr.mxu0 0.0
        %2333 = vmatpush2.msra.mxu0 0.0
        %2334 = vmatprep.subr.mxu0 0.0
        %2335 = vmatpush2.msra.mxu0 0.0
        %2336 = vmatprep.subr.mxu0 0.0
        %2337 = vmatpush2.msra.mxu0 0.0
        %2338 = vmatprep.subr.mxu0 0.0
        %2339 = vmatpush2.msra.mxu0 0.0
        %2340 = vmatprep.subr.mxu0 0.0
        %2341 = vmatpush2.msra.mxu0 0.0
        %2342 = vmatprep.subr.mxu0 0.0
        %2343 = vmatpush2.msra.mxu0 0.0
        %2344 = vmatprep.subr.mxu0 0.0
        %2345 = vmatpush2.msra.mxu0 0.0
        %2346 = vmatprep.subr.mxu0 0.0
        %2347 = vmatpush2.msra.mxu0 0.0
        %2348 = vmatprep.subr.mxu0 0.0
        %2349 = vmatpush2.msra.mxu0 0.0
        %2350 = vmatprep.subr.mxu0 0.0
        %2351 = vmatpush2.msra.mxu0 0.0
        %2352 = vmatprep.subr.mxu0 0.0
        %2353 = vmatpush2.msra.mxu0 0.0
        %2354 = vmatprep.mubr.f32.mxu0 0.0
        %2355 = vmatmul.mubr.f32.gmra.mxu0 %v2185
        %v2356 = vpop.f32.mrf.mxu0
        %v2357 = vadd.f32 0.0, %v2356
        %v2358 = vpop.f32.mrf.mxu0
        %2359 = vmatprep.mubr.f32.mxu0 0.0
        %2360 = vmatmul.mubr.f32.gmra.mxu0 %v2188
        %v2361 = vpop.f32.mrf.mxu0
        %v2362 = vadd.f32 0.0, %v2361
        %v2363 = vpop.f32.mrf.mxu0
        %2364 = vdwg.mxu0
        %s2365 = scalar_lea.vmem %s9, 64
        %v2366 = vld [vmem:[%s2365] sm:$0xff]
        %v2367 = vld [vmem:[%s2365 + $0x8] sm:$0xff]
        %v2368 = vld [vmem:[%s2365 + $0x10] sm:$0xff]
        %v2369 = vld [vmem:[%s2365 + $0x18] sm:$0xff]
        %v2370 = vld [vmem:[%s2365 + $0x20] sm:$0xff]
        %v2371 = vld [vmem:[%s2365 + $0x28] sm:$0xff]
        %v2372 = vld [vmem:[%s2365 + $0x30] sm:$0xff]
        %v2373 = vld [vmem:[%s2365 + $0x38] sm:$0xff]
        %2374 = vmatprep.subr.mxu0 0.0
        %2375 = vmatpush1.msra.mxu0 0.0
        %2376 = vmatprep.subr.mxu0 0.0
        %2377 = vmatpush1.msra.mxu0 0.0
        %2378 = vmatprep.subr.mxu0 0.0
        %2379 = vmatpush1.msra.mxu0 0.0
        %2380 = vmatprep.subr.mxu0 0.0
        %2381 = vmatpush1.msra.mxu0 0.0
        %2382 = vmatprep.subr.mxu0 0.0
        %2383 = vmatpush1.msra.mxu0 0.0
        %2384 = vmatprep.subr.mxu0 0.0
        %2385 = vmatpush1.msra.mxu0 0.0
        %2386 = vmatprep.subr.mxu0 0.0
        %2387 = vmatpush1.msra.mxu0 0.0
        %2388 = vmatprep.subr.mxu0 0.0
        %2389 = vmatpush1.msra.mxu0 0.0
        %2390 = vmatprep.subr.mxu0 0.0
        %2391 = vmatpush1.msra.mxu0 %v2373
        %2392 = vmatprep.subr.mxu0 0.0
        %2393 = vmatpush1.msra.mxu0 %v2372
        %2394 = vmatprep.subr.mxu0 0.0
        %2395 = vmatpush1.msra.mxu0 %v2371
        %2396 = vmatprep.subr.mxu0 0.0
        %2397 = vmatpush1.msra.mxu0 %v2370
        %2398 = vmatprep.subr.mxu0 0.0
        %2399 = vmatpush1.msra.mxu0 %v2369
        %2400 = vmatprep.subr.mxu0 0.0
        %2401 = vmatpush1.msra.mxu0 %v2368
        %2402 = vmatprep.subr.mxu0 0.0
        %2403 = vmatpush1.msra.mxu0 %v2367
        %2404 = vmatprep.subr.mxu0 0.0
        %2405 = vmatpush1.msra.mxu0 %v2366
        %2406 = vmatprep.subr.mxu0 0.0
        %2407 = vmatpush2.msra.mxu0 0.0
        %2408 = vmatprep.subr.mxu0 0.0
        %2409 = vmatpush2.msra.mxu0 0.0
        %2410 = vmatprep.subr.mxu0 0.0
        %2411 = vmatpush2.msra.mxu0 0.0
        %2412 = vmatprep.subr.mxu0 0.0
        %2413 = vmatpush2.msra.mxu0 0.0
        %2414 = vmatprep.subr.mxu0 0.0
        %2415 = vmatpush2.msra.mxu0 0.0
        %2416 = vmatprep.subr.mxu0 0.0
        %2417 = vmatpush2.msra.mxu0 0.0
        %2418 = vmatprep.subr.mxu0 0.0
        %2419 = vmatpush2.msra.mxu0 0.0
        %2420 = vmatprep.subr.mxu0 0.0
        %2421 = vmatpush2.msra.mxu0 0.0
        %2422 = vmatprep.subr.mxu0 0.0
        %2423 = vmatpush2.msra.mxu0 0.0
        %2424 = vmatprep.subr.mxu0 0.0
        %2425 = vmatpush2.msra.mxu0 0.0
        %2426 = vmatprep.subr.mxu0 0.0
        %2427 = vmatpush2.msra.mxu0 0.0
        %2428 = vmatprep.subr.mxu0 0.0
        %2429 = vmatpush2.msra.mxu0 0.0
        %2430 = vmatprep.subr.mxu0 0.0
        %2431 = vmatpush2.msra.mxu0 0.0
        %2432 = vmatprep.subr.mxu0 0.0
        %2433 = vmatpush2.msra.mxu0 0.0
        %2434 = vmatprep.subr.mxu0 0.0
        %2435 = vmatpush2.msra.mxu0 0.0
        %2436 = vmatprep.subr.mxu0 0.0
        %2437 = vmatpush2.msra.mxu0 0.0
        %2438 = vmatprep.mubr.f32.mxu0 0.0
        %2439 = vmatmul.mubr.f32.gmra.mxu0 %v2185
        %v2440 = vpop.f32.mrf.mxu0
        %v2441 = vadd.f32 0.0, %v2440
        %v2442 = vpop.f32.mrf.mxu0
        %2443 = vmatprep.mubr.f32.mxu0 0.0
        %2444 = vmatmul.mubr.f32.gmra.mxu0 %v2188
        %v2445 = vpop.f32.mrf.mxu0
        %v2446 = vadd.f32 0.0, %v2445
        %v2447 = vpop.f32.mrf.mxu0
        %2448 = vdwg.mxu0
        %2449 = vst.msk [vmem:[#allocation3] sm:$0xff] %vm569, %v2279
        %2450 = vst.msk [vmem:[#allocation3 + $0x8] sm:$0xff] %vm569, %v2280
        %v2451 = vmul.f32 %v2279, %v2168
        %v2452 = vmul.f32 %v2280, %v2169
        %2453 = vst.msk [vmem:[#allocation4] sm:$0xff] %vm569, %v2451
        %2454 = vst.msk [vmem:[#allocation4 + $0x8] sm:$0xff] %vm569, %v2452
        %2455 = vst.msk [vmem:[#allocation5] sm:$0xff] %vm1028, %v2357
        %2456 = vst.msk [vmem:[#allocation5 + $0x8] sm:$0xff] %vm1028, %v2362
        %2457 = vst.msk [vmem:[#allocation6] sm:$0xff] %vm1028, %v2441
        %2458 = vst.msk [vmem:[#allocation6 + $0x8] sm:$0xff] %vm1028, %v2446
        %s2459 = scalar_lea.vmem %s10, 32
        %v2460 = vld [vmem:[%s2459] sm:$0xff]
        %v2461 = vld [vmem:[%s2459 + $0x8] sm:$0xff]
        %v2462 = vld [vmem:[%s2459 + $0x10] sm:$0xff]
        %v2463 = vld [vmem:[%s2459 + $0x18] sm:$0xff]
        %v2464 = vmul.f32 %v2460, 1.442695
        %v2465 = vpow.pop %v2464
        %v2466 = vmul.f32 %v2461, 1.442695
        %v2467 = vpow.pop %v2466
        %v2468 = vmul.f32 %v2462, 1.442695
        %v2469 = vpow.pop %v2468
        %v2470 = vmul.f32 %v2463, 1.442695
        %v2471 = vpow.pop %v2470
        %v2472 = vsub.f32 0.0, %v2465
        %v2473 = vsub.f32 0.0, %v2467
        %v2474 = vsub.f32 0.0, %v2469
        %v2475 = vsub.f32 0.0, %v2471
        loop: start=0, step=1, limit=2
        $region88: #{tpu_custom_call.1} parent=79 // loop_pre_header
          _
        $region89: #{tpu_custom_call.1} parent=79 // loop_header
          %s2477 = sphi 0, %s2481
          %p2478 = scmp.ge.s32.totalorder %s2477, 2
          %v2482 = vphi 0.0, %v3178
          %v2483 = vphi 0.0, %v3179
          %v2484 = vphi 0.0, %v3180
          %v2485 = vphi 0.0, %v3181
        $region90: #{tpu_custom_call.1} parent=79 // loop_header_branch
          %2480 = sbr.rel (%p2478) target = $region94
        $region91: #{tpu_custom_call.1} parent=79 // loop_body
          %s2486 = smul.u32 %s2477, 8
          %s2487 = scalar_lea.vmem [#allocation3], %s2486
          %v2488 = vld [vmem:[%s2487] sm:$0xff]
          %s2489 = scalar_lea.vmem [#allocation4], %s2486
          %v2490 = vld [vmem:[%s2489] sm:$0xff]
          %s2491 = scalar_lea.vmem [#allocation5], %s2486
          %v2492 = vld [vmem:[%s2491] sm:$0xff]
          %2493 = vxpose.xlu0.b32.start [1/16] %v2492, 128
          %2494 = vxpose.xlu0.b32.cont [2/16] 0.0, 128
          %2495 = vxpose.xlu0.b32.cont [3/16] 0.0, 128
          %2496 = vxpose.xlu0.b32.cont [4/16] 0.0, 128
          %2497 = vxpose.xlu0.b32.cont [5/16] 0.0, 128
          %2498 = vxpose.xlu0.b32.cont [6/16] 0.0, 128
          %2499 = vxpose.xlu0.b32.cont [7/16] 0.0, 128
          %2500 = vxpose.xlu0.b32.cont [8/16] 0.0, 128
          %2501 = vxpose.xlu0.b32.cont [9/16] 0.0, 128
          %2502 = vxpose.xlu0.b32.cont [10/16] 0.0, 128
          %2503 = vxpose.xlu0.b32.cont [11/16] 0.0, 128
          %2504 = vxpose.xlu0.b32.cont [12/16] 0.0, 128
          %2505 = vxpose.xlu0.b32.cont [13/16] 0.0, 128
          %2506 = vxpose.xlu0.b32.cont [14/16] 0.0, 128
          %2507 = vxpose.xlu0.b32.cont [15/16] 0.0, 128
          %2508 = vxpose.xlu0.b32.end [16/16] 0.0, 128
          %v2509 = vpop.trf.xlu0
          %v2510 = vpop.trf.xlu0
          %v2511 = vpop.trf.xlu0
          %v2512 = vpop.trf.xlu0
          %v2513 = vpop.trf.xlu0
          %v2514 = vpop.trf.xlu0
          %v2515 = vpop.trf.xlu0
          %v2516 = vpop.trf.xlu0
          %v2517 = vpop.trf.xlu0
          %v2518 = vpop.trf.xlu0
          %v2519 = vpop.trf.xlu0
          %v2520 = vpop.trf.xlu0
          %v2521 = vpop.trf.xlu0
          %v2522 = vpop.trf.xlu0
          %v2523 = vpop.trf.xlu0
          %v2524 = vpop.trf.xlu0
          %s2525 = scalar_lea.vmem [#allocation6], %s2486
          %v2526 = vld [vmem:[%s2525] sm:$0xff]
          %2527 = vxpose.xlu0.b32.start [1/16] %v2526, 128
          %2528 = vxpose.xlu0.b32.cont [2/16] 0.0, 128
          %2529 = vxpose.xlu0.b32.cont [3/16] 0.0, 128
          %2530 = vxpose.xlu0.b32.cont [4/16] 0.0, 128
          %2531 = vxpose.xlu0.b32.cont [5/16] 0.0, 128
          %2532 = vxpose.xlu0.b32.cont [6/16] 0.0, 128
          %2533 = vxpose.xlu0.b32.cont [7/16] 0.0, 128
          %2534 = vxpose.xlu0.b32.cont [8/16] 0.0, 128
          %2535 = vxpose.xlu0.b32.cont [9/16] 0.0, 128
          %2536 = vxpose.xlu0.b32.cont [10/16] 0.0, 128
          %2537 = vxpose.xlu0.b32.cont [11/16] 0.0, 128
          %2538 = vxpose.xlu0.b32.cont [12/16] 0.0, 128
          %2539 = vxpose.xlu0.b32.cont [13/16] 0.0, 128
          %2540 = vxpose.xlu0.b32.cont [14/16] 0.0, 128
          %2541 = vxpose.xlu0.b32.cont [15/16] 0.0, 128
          %2542 = vxpose.xlu0.b32.end [16/16] 0.0, 128
          %v2543 = vpop.trf.xlu0
          %v2544 = vpop.trf.xlu0
          %v2545 = vpop.trf.xlu0
          %v2546 = vpop.trf.xlu0
          %v2547 = vpop.trf.xlu0
          %v2548 = vpop.trf.xlu0
          %v2549 = vpop.trf.xlu0
          %v2550 = vpop.trf.xlu0
          %v2551 = vpop.trf.xlu0
          %v2552 = vpop.trf.xlu0
          %v2553 = vpop.trf.xlu0
          %v2554 = vpop.trf.xlu0
          %v2555 = vpop.trf.xlu0
          %v2556 = vpop.trf.xlu0
          %v2557 = vpop.trf.xlu0
          %v2558 = vpop.trf.xlu0
          %v2559 = vlaneseq
          %v2560 = vshrl.u32 %v2559, 7
          %v2561 = vsub.s32 0, %v2560
          %v2562 = vrot.slane %v2488, %v2561
          %v2563 = vmul.f32 %v2562, %v2472
          %v2564 = vmul.f32 %v2562, %v2473
          %v2565 = vmul.f32 %v2562, %v2474
          %v2566 = vmul.f32 %v2562, %v2475
          %v2567 = vmul.f32 %v2563, 1.442695
          %v2568 = vpow.pop %v2567
          %v2569 = vmul.f32 %v2564, 1.442695
          %v2570 = vpow.pop %v2569
          %v2571 = vmul.f32 %v2565, 1.442695
          %v2572 = vpow.pop %v2571
          %v2573 = vmul.f32 %v2566, 1.442695
          %v2574 = vpow.pop %v2573
          %v2575 = vmul.f32 %v2568, %v2482
          %v2576 = vmul.f32 %v2570, %v2483
          %v2577 = vmul.f32 %v2572, %v2484
          %v2578 = vmul.f32 %v2574, %v2485
          %2580 = vset.pattern.permute.xlu0 0
          %2581 = vperm.xlu0 %2580, %v2509
          %v2582 = vpop.permute.xlu0 %2581
          %2585 = vset.pattern.permute.xlu0 0
          %2586 = vperm.xlu0 %2585, %v2510
          %v2587 = vpop.permute.xlu0 %2586
          %2590 = vset.pattern.permute.xlu0 0
          %2591 = vperm.xlu0 %2590, %v2511
          %v2592 = vpop.permute.xlu0 %2591
          %2595 = vset.pattern.permute.xlu0 0
          %2596 = vperm.xlu0 %2595, %v2512
          %v2597 = vpop.permute.xlu0 %2596
          %v2599 = vlaneseq
          %v2600 = vshrl.u32 %v2599, 7
          %v2601 = vsub.s32 0, %v2600
          %v2602 = vrot.slane %v2490, %v2601
          %v2603 = vmul.f32 %v2582, %v2602
          %v2604 = vmul.f32 %v2587, %v2602
          %v2605 = vmul.f32 %v2592, %v2602
          %v2606 = vmul.f32 %v2597, %v2602
          %v2607 = vadd.f32 %v2575, %v2603
          %v2608 = vadd.f32 %v2576, %v2604
          %v2609 = vadd.f32 %v2577, %v2605
          %v2610 = vadd.f32 %v2578, %v2606
          %2612 = vset.pattern.permute.xlu0 0
          %2613 = vperm.xlu0 %2612, %v2543
          %v2614 = vpop.permute.xlu0 %2613
          %2617 = vset.pattern.permute.xlu0 0
          %2618 = vperm.xlu0 %2617, %v2544
          %v2619 = vpop.permute.xlu0 %2618
          %2622 = vset.pattern.permute.xlu0 0
          %2623 = vperm.xlu0 %2622, %v2545
          %v2624 = vpop.permute.xlu0 %2623
          %2627 = vset.pattern.permute.xlu0 0
          %2628 = vperm.xlu0 %2627, %v2546
          %v2629 = vpop.permute.xlu0 %2628
          %v2631 = vmul.f32 %v2607, %v2614
          %v2632 = vmul.f32 %v2608, %v2619
          %v2633 = vmul.f32 %v2609, %v2624
          %v2634 = vmul.f32 %v2610, %v2629
          %v2635 = vsel %vm569, %v2631, 0.0
          %v2636 = vsel %vm569, %v2632, 0.0
          %v2637 = vadd.f32 %v2635, %v2636
          %v2638 = vsel %vm569, %v2633, 0.0
          %v2639 = vadd.f32 %v2637, %v2638
          %v2640 = vsel %vm569, %v2634, 0.0
          %v2641 = vadd.f32 %v2639, %v2640
          %v2642 = vrot.slane %v2641, 4
          %v2643 = vadd.f32 %v2641, %v2642
          %v2644 = vrot.slane %v2643, 2
          %v2645 = vadd.f32 %v2643, %v2644
          %v2646 = vrot.slane %v2645, 1
          %v2647 = vadd.f32 %v2645, %v2646
          %v2648 = vlaneseq
          %v2649 = vshrl.u32 %v2648, 7
          %v2650 = vsub.s32 1, %v2649
          %v2651 = vrot.slane %v2488, %v2650
          %v2652 = vmul.f32 %v2651, %v2472
          %v2653 = vmul.f32 %v2651, %v2473
          %v2654 = vmul.f32 %v2651, %v2474
          %v2655 = vmul.f32 %v2651, %v2475
          %v2656 = vmul.f32 %v2652, 1.442695
          %v2657 = vpow.pop %v2656
          %v2658 = vmul.f32 %v2653, 1.442695
          %v2659 = vpow.pop %v2658
          %v2660 = vmul.f32 %v2654, 1.442695
          %v2661 = vpow.pop %v2660
          %v2662 = vmul.f32 %v2655, 1.442695
          %v2663 = vpow.pop %v2662
          %v2664 = vmul.f32 %v2657, %v2607
          %v2665 = vmul.f32 %v2659, %v2608
          %v2666 = vmul.f32 %v2661, %v2609
          %v2667 = vmul.f32 %v2663, %v2610
          %2668 = vset.pattern.permute.xlu0 1
          %2669 = vperm.xlu0 %2668, %v2509
          %v2670 = vpop.permute.xlu0 %2669
          %2672 = vset.pattern.permute.xlu0 1
          %2673 = vperm.xlu0 %2672, %v2510
          %v2674 = vpop.permute.xlu0 %2673
          %2676 = vset.pattern.permute.xlu0 1
          %2677 = vperm.xlu0 %2676, %v2511
          %v2678 = vpop.permute.xlu0 %2677
          %2680 = vset.pattern.permute.xlu0 1
          %2681 = vperm.xlu0 %2680, %v2512
          %v2682 = vpop.permute.xlu0 %2681
          %v2684 = vlaneseq
          %v2685 = vshrl.u32 %v2684, 7
          %v2686 = vsub.s32 1, %v2685
          %v2687 = vrot.slane %v2490, %v2686
          %v2688 = vmul.f32 %v2670, %v2687
          %v2689 = vmul.f32 %v2674, %v2687
          %v2690 = vmul.f32 %v2678, %v2687
          %v2691 = vmul.f32 %v2682, %v2687
          %v2692 = vadd.f32 %v2664, %v2688
          %v2693 = vadd.f32 %v2665, %v2689
          %v2694 = vadd.f32 %v2666, %v2690
          %v2695 = vadd.f32 %v2667, %v2691
          %2696 = vset.pattern.permute.xlu0 1
          %2697 = vperm.xlu0 %2696, %v2543
          %v2698 = vpop.permute.xlu0 %2697
          %2700 = vset.pattern.permute.xlu0 1
          %2701 = vperm.xlu0 %2700, %v2544
          %v2702 = vpop.permute.xlu0 %2701
          %2704 = vset.pattern.permute.xlu0 1
          %2705 = vperm.xlu0 %2704, %v2545
          %v2706 = vpop.permute.xlu0 %2705
          %2708 = vset.pattern.permute.xlu0 1
          %2709 = vperm.xlu0 %2708, %v2546
          %v2710 = vpop.permute.xlu0 %2709
          %v2712 = vmul.f32 %v2692, %v2698
          %v2713 = vmul.f32 %v2693, %v2702
          %v2714 = vmul.f32 %v2694, %v2706
          %v2715 = vmul.f32 %v2695, %v2710
          %v2716 = vsel %vm569, %v2712, 0.0
          %v2717 = vsel %vm569, %v2713, 0.0
          %v2718 = vadd.f32 %v2716, %v2717
          %v2719 = vsel %vm569, %v2714, 0.0
          %v2720 = vadd.f32 %v2718, %v2719
          %v2721 = vsel %vm569, %v2715, 0.0
          %v2722 = vadd.f32 %v2720, %v2721
          %v2723 = vrot.slane %v2722, 4
          %v2724 = vadd.f32 %v2722, %v2723
          %v2725 = vrot.slane %v2724, 2
          %v2726 = vadd.f32 %v2724, %v2725
          %v2727 = vrot.slane %v2726, 1
          %v2728 = vadd.f32 %v2726, %v2727
          %v2729 = vlaneseq
          %v2730 = vshrl.u32 %v2729, 7
          %v2731 = vsub.s32 2, %v2730
          %v2732 = vrot.slane %v2488, %v2731
          %v2733 = vmul.f32 %v2732, %v2472
          %v2734 = vmul.f32 %v2732, %v2473
          %v2735 = vmul.f32 %v2732, %v2474
          %v2736 = vmul.f32 %v2732, %v2475
          %v2737 = vmul.f32 %v2733, 1.442695
          %v2738 = vpow.pop %v2737
          %v2739 = vmul.f32 %v2734, 1.442695
          %v2740 = vpow.pop %v2739
          %v2741 = vmul.f32 %v2735, 1.442695
          %v2742 = vpow.pop %v2741
          %v2743 = vmul.f32 %v2736, 1.442695
          %v2744 = vpow.pop %v2743
          %v2745 = vmul.f32 %v2738, %v2692
          %v2746 = vmul.f32 %v2740, %v2693
          %v2747 = vmul.f32 %v2742, %v2694
          %v2748 = vmul.f32 %v2744, %v2695
          %2749 = vset.pattern.permute.xlu0 2
          %2750 = vperm.xlu0 %2749, %v2509
          %v2751 = vpop.permute.xlu0 %2750
          %2753 = vset.pattern.permute.xlu0 2
          %2754 = vperm.xlu0 %2753, %v2510
          %v2755 = vpop.permute.xlu0 %2754
          %2757 = vset.pattern.permute.xlu0 2
          %2758 = vperm.xlu0 %2757, %v2511
          %v2759 = vpop.permute.xlu0 %2758
          %2761 = vset.pattern.permute.xlu0 2
          %2762 = vperm.xlu0 %2761, %v2512
          %v2763 = vpop.permute.xlu0 %2762
          %v2765 = vlaneseq
          %v2766 = vshrl.u32 %v2765, 7
          %v2767 = vsub.s32 2, %v2766
          %v2768 = vrot.slane %v2490, %v2767
          %v2769 = vmul.f32 %v2751, %v2768
          %v2770 = vmul.f32 %v2755, %v2768
          %v2771 = vmul.f32 %v2759, %v2768
          %v2772 = vmul.f32 %v2763, %v2768
          %v2773 = vadd.f32 %v2745, %v2769
          %v2774 = vadd.f32 %v2746, %v2770
          %v2775 = vadd.f32 %v2747, %v2771
          %v2776 = vadd.f32 %v2748, %v2772
          %2777 = vset.pattern.permute.xlu0 2
          %2778 = vperm.xlu0 %2777, %v2543
          %v2779 = vpop.permute.xlu0 %2778
          %2781 = vset.pattern.permute.xlu0 2
          %2782 = vperm.xlu0 %2781, %v2544
          %v2783 = vpop.permute.xlu0 %2782
          %2785 = vset.pattern.permute.xlu0 2
          %2786 = vperm.xlu0 %2785, %v2545
          %v2787 = vpop.permute.xlu0 %2786
          %2789 = vset.pattern.permute.xlu0 2
          %2790 = vperm.xlu0 %2789, %v2546
          %v2791 = vpop.permute.xlu0 %2790
          %v2793 = vmul.f32 %v2773, %v2779
          %v2794 = vmul.f32 %v2774, %v2783
          %v2795 = vmul.f32 %v2775, %v2787
          %v2796 = vmul.f32 %v2776, %v2791
          %v2797 = vsel %vm569, %v2793, 0.0
          %v2798 = vsel %vm569, %v2794, 0.0
          %v2799 = vadd.f32 %v2797, %v2798
          %v2800 = vsel %vm569, %v2795, 0.0
          %v2801 = vadd.f32 %v2799, %v2800
          %v2802 = vsel %vm569, %v2796, 0.0
          %v2803 = vadd.f32 %v2801, %v2802
          %v2804 = vrot.slane %v2803, 4
          %v2805 = vadd.f32 %v2803, %v2804
          %v2806 = vrot.slane %v2805, 2
          %v2807 = vadd.f32 %v2805, %v2806
          %v2808 = vrot.slane %v2807, 1
          %v2809 = vadd.f32 %v2807, %v2808
          %v2810 = vlaneseq
          %v2811 = vshrl.u32 %v2810, 7
          %v2812 = vsub.s32 3, %v2811
          %v2813 = vrot.slane %v2488, %v2812
          %v2814 = vmul.f32 %v2813, %v2472
          %v2815 = vmul.f32 %v2813, %v2473
          %v2816 = vmul.f32 %v2813, %v2474
          %v2817 = vmul.f32 %v2813, %v2475
          %v2818 = vmul.f32 %v2814, 1.442695
          %v2819 = vpow.pop %v2818
          %v2820 = vmul.f32 %v2815, 1.442695
          %v2821 = vpow.pop %v2820
          %v2822 = vmul.f32 %v2816, 1.442695
          %v2823 = vpow.pop %v2822
          %v2824 = vmul.f32 %v2817, 1.442695
          %v2825 = vpow.pop %v2824
          %v2826 = vmul.f32 %v2819, %v2773
          %v2827 = vmul.f32 %v2821, %v2774
          %v2828 = vmul.f32 %v2823, %v2775
          %v2829 = vmul.f32 %v2825, %v2776
          %2830 = vset.pattern.permute.xlu0 3
          %2831 = vperm.xlu0 %2830, %v2509
          %v2832 = vpop.permute.xlu0 %2831
          %2834 = vset.pattern.permute.xlu0 3
          %2835 = vperm.xlu0 %2834, %v2510
          %v2836 = vpop.permute.xlu0 %2835
          %2838 = vset.pattern.permute.xlu0 3
          %2839 = vperm.xlu0 %2838, %v2511
          %v2840 = vpop.permute.xlu0 %2839
          %2842 = vset.pattern.permute.xlu0 3
          %2843 = vperm.xlu0 %2842, %v2512
          %v2844 = vpop.permute.xlu0 %2843
          %v2846 = vlaneseq
          %v2847 = vshrl.u32 %v2846, 7
          %v2848 = vsub.s32 3, %v2847
          %v2849 = vrot.slane %v2490, %v2848
          %v2850 = vmul.f32 %v2832, %v2849
          %v2851 = vmul.f32 %v2836, %v2849
          %v2852 = vmul.f32 %v2840, %v2849
          %v2853 = vmul.f32 %v2844, %v2849
          %v2854 = vadd.f32 %v2826, %v2850
          %v2855 = vadd.f32 %v2827, %v2851
          %v2856 = vadd.f32 %v2828, %v2852
          %v2857 = vadd.f32 %v2829, %v2853
          %2858 = vset.pattern.permute.xlu0 3
          %2859 = vperm.xlu0 %2858, %v2543
          %v2860 = vpop.permute.xlu0 %2859
          %2862 = vset.pattern.permute.xlu0 3
          %2863 = vperm.xlu0 %2862, %v2544
          %v2864 = vpop.permute.xlu0 %2863
          %2866 = vset.pattern.permute.xlu0 3
          %2867 = vperm.xlu0 %2866, %v2545
          %v2868 = vpop.permute.xlu0 %2867
          %2870 = vset.pattern.permute.xlu0 3
          %2871 = vperm.xlu0 %2870, %v2546
          %v2872 = vpop.permute.xlu0 %2871
          %v2874 = vmul.f32 %v2854, %v2860
          %v2875 = vmul.f32 %v2855, %v2864
          %v2876 = vmul.f32 %v2856, %v2868
          %v2877 = vmul.f32 %v2857, %v2872
          %v2878 = vsel %vm569, %v2874, 0.0
          %v2879 = vsel %vm569, %v2875, 0.0
          %v2880 = vadd.f32 %v2878, %v2879
          %v2881 = vsel %vm569, %v2876, 0.0
          %v2882 = vadd.f32 %v2880, %v2881
          %v2883 = vsel %vm569, %v2877, 0.0
          %v2884 = vadd.f32 %v2882, %v2883
          %v2885 = vrot.slane %v2884, 4
          %v2886 = vadd.f32 %v2884, %v2885
          %v2887 = vrot.slane %v2886, 2
          %v2888 = vadd.f32 %v2886, %v2887
          %v2889 = vrot.slane %v2888, 1
          %v2890 = vadd.f32 %v2888, %v2889
          %v2891 = vlaneseq
          %v2892 = vshrl.u32 %v2891, 7
          %v2893 = vsub.s32 4, %v2892
          %v2894 = vrot.slane %v2488, %v2893
          %v2895 = vmul.f32 %v2894, %v2472
          %v2896 = vmul.f32 %v2894, %v2473
          %v2897 = vmul.f32 %v2894, %v2474
          %v2898 = vmul.f32 %v2894, %v2475
          %v2899 = vmul.f32 %v2895, 1.442695
          %v2900 = vpow.pop %v2899
          %v2901 = vmul.f32 %v2896, 1.442695
          %v2902 = vpow.pop %v2901
          %v2903 = vmul.f32 %v2897, 1.442695
          %v2904 = vpow.pop %v2903
          %v2905 = vmul.f32 %v2898, 1.442695
          %v2906 = vpow.pop %v2905
          %v2907 = vmul.f32 %v2900, %v2854
          %v2908 = vmul.f32 %v2902, %v2855
          %v2909 = vmul.f32 %v2904, %v2856
          %v2910 = vmul.f32 %v2906, %v2857
          %2911 = vset.pattern.permute.xlu0 4
          %2912 = vperm.xlu0 %2911, %v2509
          %v2913 = vpop.permute.xlu0 %2912
          %2915 = vset.pattern.permute.xlu0 4
          %2916 = vperm.xlu0 %2915, %v2510
          %v2917 = vpop.permute.xlu0 %2916
          %2919 = vset.pattern.permute.xlu0 4
          %2920 = vperm.xlu0 %2919, %v2511
          %v2921 = vpop.permute.xlu0 %2920
          %2923 = vset.pattern.permute.xlu0 4
          %2924 = vperm.xlu0 %2923, %v2512
          %v2925 = vpop.permute.xlu0 %2924
          %v2927 = vlaneseq
          %v2928 = vshrl.u32 %v2927, 7
          %v2929 = vsub.s32 4, %v2928
          %v2930 = vrot.slane %v2490, %v2929
          %v2931 = vmul.f32 %v2913, %v2930
          %v2932 = vmul.f32 %v2917, %v2930
          %v2933 = vmul.f32 %v2921, %v2930
          %v2934 = vmul.f32 %v2925, %v2930
          %v2935 = vadd.f32 %v2907, %v2931
          %v2936 = vadd.f32 %v2908, %v2932
          %v2937 = vadd.f32 %v2909, %v2933
          %v2938 = vadd.f32 %v2910, %v2934
          %2939 = vset.pattern.permute.xlu0 4
          %2940 = vperm.xlu0 %2939, %v2543
          %v2941 = vpop.permute.xlu0 %2940
          %2943 = vset.pattern.permute.xlu0 4
          %2944 = vperm.xlu0 %2943, %v2544
          %v2945 = vpop.permute.xlu0 %2944
          %2947 = vset.pattern.permute.xlu0 4
          %2948 = vperm.xlu0 %2947, %v2545
          %v2949 = vpop.permute.xlu0 %2948
          %2951 = vset.pattern.permute.xlu0 4
          %2952 = vperm.xlu0 %2951, %v2546
          %v2953 = vpop.permute.xlu0 %2952
          %v2955 = vmul.f32 %v2935, %v2941
          %v2956 = vmul.f32 %v2936, %v2945
          %v2957 = vmul.f32 %v2937, %v2949
          %v2958 = vmul.f32 %v2938, %v2953
          %v2959 = vsel %vm569, %v2955, 0.0
          %v2960 = vsel %vm569, %v2956, 0.0
          %v2961 = vadd.f32 %v2959, %v2960
          %v2962 = vsel %vm569, %v2957, 0.0
          %v2963 = vadd.f32 %v2961, %v2962
          %v2964 = vsel %vm569, %v2958, 0.0
          %v2965 = vadd.f32 %v2963, %v2964
          %v2966 = vrot.slane %v2965, 4
          %v2967 = vadd.f32 %v2965, %v2966
          %v2968 = vrot.slane %v2967, 2
          %v2969 = vadd.f32 %v2967, %v2968
          %v2970 = vrot.slane %v2969, 1
          %v2971 = vadd.f32 %v2969, %v2970
          %v2972 = vlaneseq
          %v2973 = vshrl.u32 %v2972, 7
          %v2974 = vsub.s32 5, %v2973
          %v2975 = vrot.slane %v2488, %v2974
          %v2976 = vmul.f32 %v2975, %v2472
          %v2977 = vmul.f32 %v2975, %v2473
          %v2978 = vmul.f32 %v2975, %v2474
          %v2979 = vmul.f32 %v2975, %v2475
          %v2980 = vmul.f32 %v2976, 1.442695
          %v2981 = vpow.pop %v2980
          %v2982 = vmul.f32 %v2977, 1.442695
          %v2983 = vpow.pop %v2982
          %v2984 = vmul.f32 %v2978, 1.442695
          %v2985 = vpow.pop %v2984
          %v2986 = vmul.f32 %v2979, 1.442695
          %v2987 = vpow.pop %v2986
          %v2988 = vmul.f32 %v2981, %v2935
          %v2989 = vmul.f32 %v2983, %v2936
          %v2990 = vmul.f32 %v2985, %v2937
          %v2991 = vmul.f32 %v2987, %v2938
          %2992 = vset.pattern.permute.xlu0 5
          %2993 = vperm.xlu0 %2992, %v2509
          %v2994 = vpop.permute.xlu0 %2993
          %2996 = vset.pattern.permute.xlu0 5
          %2997 = vperm.xlu0 %2996, %v2510
          %v2998 = vpop.permute.xlu0 %2997
          %3000 = vset.pattern.permute.xlu0 5
          %3001 = vperm.xlu0 %3000, %v2511
          %v3002 = vpop.permute.xlu0 %3001
          %3004 = vset.pattern.permute.xlu0 5
          %3005 = vperm.xlu0 %3004, %v2512
          %v3006 = vpop.permute.xlu0 %3005
          %v3008 = vlaneseq
          %v3009 = vshrl.u32 %v3008, 7
          %v3010 = vsub.s32 5, %v3009
          %v3011 = vrot.slane %v2490, %v3010
          %v3012 = vmul.f32 %v2994, %v3011
          %v3013 = vmul.f32 %v2998, %v3011
          %v3014 = vmul.f32 %v3002, %v3011
          %v3015 = vmul.f32 %v3006, %v3011
          %v3016 = vadd.f32 %v2988, %v3012
          %v3017 = vadd.f32 %v2989, %v3013
          %v3018 = vadd.f32 %v2990, %v3014
          %v3019 = vadd.f32 %v2991, %v3015
          %3020 = vset.pattern.permute.xlu0 5
          %3021 = vperm.xlu0 %3020, %v2543
          %v3022 = vpop.permute.xlu0 %3021
          %3024 = vset.pattern.permute.xlu0 5
          %3025 = vperm.xlu0 %3024, %v2544
          %v3026 = vpop.permute.xlu0 %3025
          %3028 = vset.pattern.permute.xlu0 5
          %3029 = vperm.xlu0 %3028, %v2545
          %v3030 = vpop.permute.xlu0 %3029
          %3032 = vset.pattern.permute.xlu0 5
          %3033 = vperm.xlu0 %3032, %v2546
          %v3034 = vpop.permute.xlu0 %3033
          %v3036 = vmul.f32 %v3016, %v3022
          %v3037 = vmul.f32 %v3017, %v3026
          %v3038 = vmul.f32 %v3018, %v3030
          %v3039 = vmul.f32 %v3019, %v3034
          %v3040 = vsel %vm569, %v3036, 0.0
          %v3041 = vsel %vm569, %v3037, 0.0
          %v3042 = vadd.f32 %v3040, %v3041
          %v3043 = vsel %vm569, %v3038, 0.0
          %v3044 = vadd.f32 %v3042, %v3043
          %v3045 = vsel %vm569, %v3039, 0.0
          %v3046 = vadd.f32 %v3044, %v3045
          %v3047 = vrot.slane %v3046, 4
          %v3048 = vadd.f32 %v3046, %v3047
          %v3049 = vrot.slane %v3048, 2
          %v3050 = vadd.f32 %v3048, %v3049
          %v3051 = vrot.slane %v3050, 1
          %v3052 = vadd.f32 %v3050, %v3051
          %v3053 = vlaneseq
          %v3054 = vshrl.u32 %v3053, 7
          %v3055 = vsub.s32 6, %v3054
          %v3056 = vrot.slane %v2488, %v3055
          %v3057 = vmul.f32 %v3056, %v2472
          %v3058 = vmul.f32 %v3056, %v2473
          %v3059 = vmul.f32 %v3056, %v2474
          %v3060 = vmul.f32 %v3056, %v2475
          %v3061 = vmul.f32 %v3057, 1.442695
          %v3062 = vpow.pop %v3061
          %v3063 = vmul.f32 %v3058, 1.442695
          %v3064 = vpow.pop %v3063
          %v3065 = vmul.f32 %v3059, 1.442695
          %v3066 = vpow.pop %v3065
          %v3067 = vmul.f32 %v3060, 1.442695
          %v3068 = vpow.pop %v3067
          %v3069 = vmul.f32 %v3062, %v3016
          %v3070 = vmul.f32 %v3064, %v3017
          %v3071 = vmul.f32 %v3066, %v3018
          %v3072 = vmul.f32 %v3068, %v3019
          %3073 = vset.pattern.permute.xlu0 6
          %3074 = vperm.xlu0 %3073, %v2509
          %v3075 = vpop.permute.xlu0 %3074
          %3077 = vset.pattern.permute.xlu0 6
          %3078 = vperm.xlu0 %3077, %v2510
          %v3079 = vpop.permute.xlu0 %3078
          %3081 = vset.pattern.permute.xlu0 6
          %3082 = vperm.xlu0 %3081, %v2511
          %v3083 = vpop.permute.xlu0 %3082
          %3085 = vset.pattern.permute.xlu0 6
          %3086 = vperm.xlu0 %3085, %v2512
          %v3087 = vpop.permute.xlu0 %3086
          %v3089 = vlaneseq
          %v3090 = vshrl.u32 %v3089, 7
          %v3091 = vsub.s32 6, %v3090
          %v3092 = vrot.slane %v2490, %v3091
          %v3093 = vmul.f32 %v3075, %v3092
          %v3094 = vmul.f32 %v3079, %v3092
          %v3095 = vmul.f32 %v3083, %v3092
          %v3096 = vmul.f32 %v3087, %v3092
          %v3097 = vadd.f32 %v3069, %v3093
          %v3098 = vadd.f32 %v3070, %v3094
          %v3099 = vadd.f32 %v3071, %v3095
          %v3100 = vadd.f32 %v3072, %v3096
          %3101 = vset.pattern.permute.xlu0 6
          %3102 = vperm.xlu0 %3101, %v2543
          %v3103 = vpop.permute.xlu0 %3102
          %3105 = vset.pattern.permute.xlu0 6
          %3106 = vperm.xlu0 %3105, %v2544
          %v3107 = vpop.permute.xlu0 %3106
          %3109 = vset.pattern.permute.xlu0 6
          %3110 = vperm.xlu0 %3109, %v2545
          %v3111 = vpop.permute.xlu0 %3110
          %3113 = vset.pattern.permute.xlu0 6
          %3114 = vperm.xlu0 %3113, %v2546
          %v3115 = vpop.permute.xlu0 %3114
          %v3117 = vmul.f32 %v3097, %v3103
          %v3118 = vmul.f32 %v3098, %v3107
          %v3119 = vmul.f32 %v3099, %v3111
          %v3120 = vmul.f32 %v3100, %v3115
          %v3121 = vsel %vm569, %v3117, 0.0
          %v3122 = vsel %vm569, %v3118, 0.0
          %v3123 = vadd.f32 %v3121, %v3122
          %v3124 = vsel %vm569, %v3119, 0.0
          %v3125 = vadd.f32 %v3123, %v3124
          %v3126 = vsel %vm569, %v3120, 0.0
          %v3127 = vadd.f32 %v3125, %v3126
          %v3128 = vrot.slane %v3127, 4
          %v3129 = vadd.f32 %v3127, %v3128
          %v3130 = vrot.slane %v3129, 2
          %v3131 = vadd.f32 %v3129, %v3130
          %v3132 = vrot.slane %v3131, 1
          %v3133 = vadd.f32 %v3131, %v3132
          %v3134 = vlaneseq
          %v3135 = vshrl.u32 %v3134, 7
          %v3136 = vsub.s32 7, %v3135
          %v3137 = vrot.slane %v2488, %v3136
          %v3138 = vmul.f32 %v3137, %v2472
          %v3139 = vmul.f32 %v3137, %v2473
          %v3140 = vmul.f32 %v3137, %v2474
          %v3141 = vmul.f32 %v3137, %v2475
          %v3142 = vmul.f32 %v3138, 1.442695
          %v3143 = vpow.pop %v3142
          %v3144 = vmul.f32 %v3139, 1.442695
          %v3145 = vpow.pop %v3144
          %v3146 = vmul.f32 %v3140, 1.442695
          %v3147 = vpow.pop %v3146
          %v3148 = vmul.f32 %v3141, 1.442695
          %v3149 = vpow.pop %v3148
          %v3150 = vmul.f32 %v3143, %v3097
          %v3151 = vmul.f32 %v3145, %v3098
          %v3152 = vmul.f32 %v3147, %v3099
          %v3153 = vmul.f32 %v3149, %v3100
          %3154 = vset.pattern.permute.xlu0 7
          %3155 = vperm.xlu0 %3154, %v2509
          %v3156 = vpop.permute.xlu0 %3155
          %3158 = vset.pattern.permute.xlu0 7
          %3159 = vperm.xlu0 %3158, %v2510
          %v3160 = vpop.permute.xlu0 %3159
          %3162 = vset.pattern.permute.xlu0 7
          %3163 = vperm.xlu0 %3162, %v2511
          %v3164 = vpop.permute.xlu0 %3163
          %3166 = vset.pattern.permute.xlu0 7
          %3167 = vperm.xlu0 %3166, %v2512
          %v3168 = vpop.permute.xlu0 %3167
          %v3170 = vlaneseq
          %v3171 = vshrl.u32 %v3170, 7
          %v3172 = vsub.s32 7, %v3171
          %v3173 = vrot.slane %v2490, %v3172
          %v3174 = vmul.f32 %v3156, %v3173
          %v3175 = vmul.f32 %v3160, %v3173
          %v3176 = vmul.f32 %v3164, %v3173
          %v3177 = vmul.f32 %v3168, %v3173
          %v3178 = vadd.f32 %v3150, %v3174
          %v3179 = vadd.f32 %v3151, %v3175
          %v3180 = vadd.f32 %v3152, %v3176
          %v3181 = vadd.f32 %v3153, %v3177
          %3182 = vset.pattern.permute.xlu0 7
          %3183 = vperm.xlu0 %3182, %v2543
          %v3184 = vpop.permute.xlu0 %3183
          %3186 = vset.pattern.permute.xlu0 7
          %3187 = vperm.xlu0 %3186, %v2544
          %v3188 = vpop.permute.xlu0 %3187
          %3190 = vset.pattern.permute.xlu0 7
          %3191 = vperm.xlu0 %3190, %v2545
          %v3192 = vpop.permute.xlu0 %3191
          %3194 = vset.pattern.permute.xlu0 7
          %3195 = vperm.xlu0 %3194, %v2546
          %v3196 = vpop.permute.xlu0 %3195
          %v3198 = vmul.f32 %v3178, %v3184
          %v3199 = vmul.f32 %v3179, %v3188
          %v3200 = vmul.f32 %v3180, %v3192
          %v3201 = vmul.f32 %v3181, %v3196
          %v3202 = vsel %vm569, %v3198, 0.0
          %v3203 = vsel %vm569, %v3199, 0.0
          %v3204 = vadd.f32 %v3202, %v3203
          %v3205 = vsel %vm569, %v3200, 0.0
          %v3206 = vadd.f32 %v3204, %v3205
          %v3207 = vsel %vm569, %v3201, 0.0
          %v3208 = vadd.f32 %v3206, %v3207
          %v3209 = vrot.slane %v3208, 4
          %v3210 = vadd.f32 %v3208, %v3209
          %v3211 = vrot.slane %v3210, 2
          %v3212 = vadd.f32 %v3210, %v3211
          %v3213 = vrot.slane %v3212, 1
          %v3214 = vadd.f32 %v3212, %v3213
          %vm3215 = vcmask 1040384
          %v3216 = vsel %vm3215, %v2647, %v2728
          %vm3217 = vcmask 1041408
          %v3218 = vsel %vm3217, %v3216, %v2809
          %vm3219 = vcmask 1042432
          %v3220 = vsel %vm3219, %v3218, %v2890
          %vm3221 = vcmask 1043456
          %v3222 = vsel %vm3221, %v3220, %v2971
          %vm3223 = vcmask 1044480
          %v3224 = vsel %vm3223, %v3222, %v3052
          %vm3225 = vcmask 1045504
          %v3226 = vsel %vm3225, %v3224, %v3133
          %vm3227 = vcmask 1046528
          %v3228 = vsel %vm3227, %v3226, %v3214
          %s3229 = scalar_lea.vmem [#allocation7], %s2486
          %3230 = vst.msk [vmem:[%s3229] sm:$0xff] %vm569, %v3228
        $region92: #{tpu_custom_call.1} parent=79 // loop_footer
          %s2481 = sadd.s32 1, %s2477
        $region93: #{tpu_custom_call.1} parent=79 // loop_footer_branch
          %2476 = sbr.rel target = $region89
        $region94: #{tpu_custom_call.1} parent=79 // loop_exit
          _
        %v3231 = vld [vmem:[#allocation7 + $0x8] sm:$0xff]
        %v3232 = vld [vmem:[%s11 + $0x1] sm:$0x1]
        %v3233 = vlaneseq
        %v3234 = vshrl.u32 %v3233, 7
        %v3235 = vsub.s32 0, %v3234
        %v3236 = vrot.slane %v3232, %v3235
        %v3237 = vmul.f32 %v3236, %v2169
        %v3238 = vadd.f32 %v3231, %v3237
        %v3239 = vmax.f32 %v1991, -30.0
        %v3240 = vsub.f32 0.0, %v3239
        %v3241 = vmul.f32 %v3240, 1.442695
        %v3242 = vpow.pop %v3241
        %v3243 = vadd.f32 %v3242, 1.0
        %v3244 = vrcp.pop %v3243
        %v3245 = vmul.f32 %v1991, %v3244
        %v3246 = vmul.f32 %v3238, %v3245
        %v3247 = vld [vmem:[%s13] sm:$0xff]
        %v3248 = vld [vmem:[%s13 + $0x8] sm:$0xff]
        %v3249 = vld [vmem:[%s13 + $0x10] sm:$0xff]
        %v3250 = vld [vmem:[%s13 + $0x18] sm:$0xff]
        %v3251 = vld [vmem:[%s13 + $0x20] sm:$0xff]
        %v3252 = vld [vmem:[%s13 + $0x28] sm:$0xff]
        %v3253 = vld [vmem:[%s13 + $0x30] sm:$0xff]
        %v3254 = vld [vmem:[%s13 + $0x38] sm:$0xff]
        %v3255 = vld [vmem:[%s14] sm:$0x1]
        %v3257 = vrot.slane %v3246, 3
        %v3258 = vsel %vm569, %v3257, 0
        %3260 = vmatprep.subr.mxu0 0.0
        %3261 = vmatpush1.msra.mxu0 0.0
        %3262 = vmatprep.subr.mxu0 0.0
        %3263 = vmatpush1.msra.mxu0 0.0
        %3264 = vmatprep.subr.mxu0 0.0
        %3265 = vmatpush1.msra.mxu0 0.0
        %3266 = vmatprep.subr.mxu0 0.0
        %3267 = vmatpush1.msra.mxu0 0.0
        %3268 = vmatprep.subr.mxu0 0.0
        %3269 = vmatpush1.msra.mxu0 0.0
        %3270 = vmatprep.subr.mxu0 0.0
        %3271 = vmatpush1.msra.mxu0 0.0
        %3272 = vmatprep.subr.mxu0 0.0
        %3273 = vmatpush1.msra.mxu0 0.0
        %3274 = vmatprep.subr.mxu0 0.0
        %3275 = vmatpush1.msra.mxu0 0.0
        %3276 = vmatprep.subr.mxu0 0.0
        %3277 = vmatpush1.msra.mxu0 %v3254
        %3278 = vmatprep.subr.mxu0 0.0
        %3279 = vmatpush1.msra.mxu0 %v3253
        %3280 = vmatprep.subr.mxu0 0.0
        %3281 = vmatpush1.msra.mxu0 %v3252
        %3282 = vmatprep.subr.mxu0 0.0
        %3283 = vmatpush1.msra.mxu0 %v3251
        %3284 = vmatprep.subr.mxu0 0.0
        %3285 = vmatpush1.msra.mxu0 %v3250
        %3286 = vmatprep.subr.mxu0 0.0
        %3287 = vmatpush1.msra.mxu0 %v3249
        %3288 = vmatprep.subr.mxu0 0.0
        %3289 = vmatpush1.msra.mxu0 %v3248
        %3290 = vmatprep.subr.mxu0 0.0
        %3291 = vmatpush1.msra.mxu0 %v3247
        %3292 = vmatprep.subr.mxu0 0.0
        %3293 = vmatpush2.msra.mxu0 0.0
        %3294 = vmatprep.subr.mxu0 0.0
        %3295 = vmatpush2.msra.mxu0 0.0
        %3296 = vmatprep.subr.mxu0 0.0
        %3297 = vmatpush2.msra.mxu0 0.0
        %3298 = vmatprep.subr.mxu0 0.0
        %3299 = vmatpush2.msra.mxu0 0.0
        %3300 = vmatprep.subr.mxu0 0.0
        %3301 = vmatpush2.msra.mxu0 0.0
        %3302 = vmatprep.subr.mxu0 0.0
        %3303 = vmatpush2.msra.mxu0 0.0
        %3304 = vmatprep.subr.mxu0 0.0
        %3305 = vmatpush2.msra.mxu0 0.0
        %3306 = vmatprep.subr.mxu0 0.0
        %3307 = vmatpush2.msra.mxu0 0.0
        %3308 = vmatprep.subr.mxu0 0.0
        %3309 = vmatpush2.msra.mxu0 0.0
        %3310 = vmatprep.subr.mxu0 0.0
        %3311 = vmatpush2.msra.mxu0 0.0
        %3312 = vmatprep.subr.mxu0 0.0
        %3313 = vmatpush2.msra.mxu0 0.0
        %3314 = vmatprep.subr.mxu0 0.0
        %3315 = vmatpush2.msra.mxu0 0.0
        %3316 = vmatprep.subr.mxu0 0.0
        %3317 = vmatpush2.msra.mxu0 0.0
        %3318 = vmatprep.subr.mxu0 0.0
        %3319 = vmatpush2.msra.mxu0 0.0
        %3320 = vmatprep.subr.mxu0 0.0
        %3321 = vmatpush2.msra.mxu0 0.0
        %3322 = vmatprep.subr.mxu0 0.0
        %3323 = vmatpush2.msra.mxu0 0.0
        %3324 = vmatprep.mubr.f32.mxu0 0.0
        %3325 = vmatmul.mubr.f32.gmra.mxu0 %v3258
        %v3326 = vpop.f32.mrf.mxu0
        %v3327 = vadd.f32 %v3255, %v3326
        %v3328 = vpop.f32.mrf.mxu0
        %3329 = vdwg.mxu0
        %vm3330 = vcmask 32768
        %3331 = vst.msk [vmem:[%s486] sm:$0x1] %vm3330, %v3327
        %s3332 = sand.u32 %s357, 1
        %s3333 = scalar_lea.sflag [#allocation9], %s3332
        %s3334 = sand.u32 %s357, 1
        %s3335 = scalar_lea.vmem [#allocation8], %s3334
        // Predicated region
        $region95: #{tpu_custom_call.1} parent=79 // pred_check
          %p3336 = pneg %p367
        $region96: #{tpu_custom_call.1} parent=79 // pred_check_branch
          %3338 = sbr.rel (%p3336) target = $region98
        $region97: #{tpu_custom_call.1} parent=79 // pred_region
          %s3340 = ssub.s32 16, 16
          %3341 = vsyncadd %s3333, %s3340
          %s3342 = smul.addr %s29, 16
          %s3343 = scalar_lea.hbm %s15, %s3342
          %s3345 = sshll.u32 %s3335, 4
          %s3346 = int_to_ptr.vmem [resolvable:$true] %s3345
          %3348 = dma.vmem_to_hbm [thread:$0]  %s3346, 16, %s3343, %s3333
        $region98: #{tpu_custom_call.1} parent=79 // pred_fallthru
          _
      $region80: #{tpu_custom_call.1} parent=5 // pred_fallthru
        _
      %p3349 = scmp.le.s32.totalorder 2, %s24
      // Predicated region
      $region99: #{tpu_custom_call.1} parent=5 // pred_check
        %p3350 = pneg %p3349
      $region100: #{tpu_custom_call.1} parent=5 // pred_check_branch
        %3352 = sbr.rel (%p3350) target = $region102
      $region101: #{tpu_custom_call.1} parent=5 // pred_region
        %s3353 = ssub.s32 %s24, 2
        // Predicated region
        $region103: #{tpu_custom_call.1} parent=101 // pred_check
          %p3354 = pneg %p373
        $region104: #{tpu_custom_call.1} parent=101 // pred_check_branch
          %3356 = sbr.rel (%p3354) target = $region106
        $region105: #{tpu_custom_call.1} parent=101 // pred_region
          %s3357 = sand.u32 %s358, 1
          %s3358 = scalar_lea.sflag [#allocation9], %s3357
          %s3359 = sand.u32 %s358, 1
          %s3360 = scalar_lea.vmem [#allocation8], %s3359
          %3361 = dma.done %s3358, 16
        $region106: #{tpu_custom_call.1} parent=101 // pred_fallthru
          _
      $region102: #{tpu_custom_call.1} parent=5 // pred_fallthru
        _
    $region6: #{tpu_custom_call.1} parent=1 // loop_footer
      %s28 = sadd.s32 1, %s24
    $region7: #{tpu_custom_call.1} parent=1 // loop_footer_branch
      %23 = sbr.rel target = $region3
    $region8: #{tpu_custom_call.1} parent=1 // loop_exit
      _
    %3362 = vsyncpa [#allocation9], 1
    %s3363 = scalar_lea.sflag [#allocation9], 1
    %3364 = vsyncpa %s3363, 1

</llo_original>
